<compile_context>
chip_gen: v7x
topology: tpu7x:2x2x1
jax: 0.10.0
libtpu: 0.0.40
codegen_flags: <defaults>
</compile_context>

<pallas_src>
import functools

import jax
import jax.numpy as jnp
from jax import lax
from jax.experimental import pallas as pl
from jax.experimental.pallas import tpu as pltpu


def _bottleneck_kernel(xb_ref, r_ref, w1_ref, b1_ref, w2_ref, b2_ref,
                       w3_ref, b3_ref, o_ref, slab_ref, *, H, W, C, P, TH):
    """Grid = (batch, H // TH); every grid step is fully independent.

    xb_ref : (1, H, W, C)   bf16 image (conv1 input), constant per image.
    r_ref  : (1, TH, W, C)  f32 residual rows for this tile (pipelined).
    slab_ref: (TH+2, W, 3P) bf16 scratch with the kw-concatenated, row-padded
              conv1 activation for this tile:
                slab[r, w, kw*P:(kw+1)*P] = out1[row0 - 1 + r, w + kw - 1]
              (zero outside the image), so conv2 is 3 matmuls with K = 3P.
    """
    t = pl.program_id(1)
    row0 = t * TH

    # ---- conv1 (1x1, BN scale folded into w1) + bias + relu -----------------
    # Compute the TH + 2 halo rows this tile needs; the two redundant halo
    # rows keep per-step work uniform (no front-loaded conv1 at t == 0).
    top = jnp.maximum(row0 - 1, 0)
    bot = jnp.minimum(row0 + TH, H - 1)
    xh = jnp.concatenate([xb_ref[0, pl.ds(top, 1), :, :],
                          xb_ref[0, pl.ds(row0, TH), :, :],
                          xb_ref[0, pl.ds(bot, 1), :, :]], axis=0)
    o1 = jnp.dot(xh.reshape((TH + 2) * W, C), w1_ref[...],
                 preferred_element_type=jnp.float32)
    o1 = jnp.maximum(o1 + b1_ref[0], 0.0).reshape(TH + 2, W, P)
    # Zero the conv2 padding rows (halo rows that fall outside the image).
    rid = lax.broadcasted_iota(jnp.int32, (TH + 2, W, P), 0) + (row0 - 1)
    o1 = jnp.where((rid >= 0) & (rid < H), o1, 0.0)

    # ---- build the kw-concatenated slab (bf16) ------------------------------
    # Column shifts via XLU roll + lane mask; stores are lane-aligned (kw*P).
    col = lax.broadcasted_iota(jnp.int32, (1, W, P), 1)
    left = jnp.where(col > 0, pltpu.roll(o1, 1, axis=1), 0.0)          # o1[:, w-1]
    right = jnp.where(col < W - 1, pltpu.roll(o1, W - 1, axis=1), 0.0)  # o1[:, w+1]
    slab_ref[:, :, 0:P] = left.astype(jnp.bfloat16)
    slab_ref[:, :, P:2 * P] = o1.astype(jnp.bfloat16)
    slab_ref[:, :, 2 * P:3 * P] = right.astype(jnp.bfloat16)

    # ---- conv2 (3x3, stride 1, pad 1) + bias + relu: 3 matmuls, K = 3P ------
    acc = jnp.dot(slab_ref[0:TH].reshape(TH * W, 3 * P), w2_ref[0],
                  preferred_element_type=jnp.float32)
    acc = acc + jnp.dot(slab_ref[1:TH + 1].reshape(TH * W, 3 * P), w2_ref[1],
                        preferred_element_type=jnp.float32)
    acc = acc + jnp.dot(slab_ref[2:TH + 2].reshape(TH * W, 3 * P), w2_ref[2],
                        preferred_element_type=jnp.float32)
    out2 = jnp.maximum(acc + b2_ref[0], 0.0).astype(jnp.bfloat16)

    # ---- conv3 (1x1) + bias + residual add + relu ---------------------------
    o3 = jnp.dot(out2, w3_ref[...], preferred_element_type=jnp.float32)
    y = jnp.maximum(o3 + b3_ref[0] + r_ref[0].reshape(TH * W, C), 0.0)
    o_ref[0] = y.reshape(TH, W, C).astype(o_ref.dtype)


def _default_tile_h(H, W, C, P):
    """Largest row tile dividing H whose per-step working set fits VMEM after
    subtracting the TH-independent residents (bf16 image block, weights)."""
    try:
        vmem_bytes = pltpu.get_tpu_info().vmem_capacity_bytes
    except Exception:   # conservative fallback if the query is unavailable
        vmem_bytes = 64 * 1024 * 1024
    budget = (vmem_bytes * 3) // 4                 # headroom for compiler scratch
    fixed = (2 * H * W * C * 2                     # bf16 image block, 2 buffers
             + 4 * (C * P + 9 * P * P + P * C)     # bf16 weights, 2 buffers
             + 8 * 4 * (2 * P + C))                # f32 biases (tiny)
    per_row = W * (16 * C                          # residual-in + out blocks (f32, 2 bufs)
                   + 6 * P                         # slab scratch (bf16, 3P)
                   + 2 * C + 4 * P                 # xh (bf16) + o1 (f32) temporaries
                   + 6 * P                         # conv2 acc (f32) + out2 (bf16)
                   + 8 * C)                        # o3 + residual f32 temporaries
    avail = budget - fixed
    if avail <= 3 * per_row:
        return 1
    for th in range(H, 0, -1):
        if H % th == 0 and (th + 2) * per_row <= avail:
            return th
    return 1


def bottleneck_pallas(x_nhwc, params, *, tile_h=None):
    """Fused Bottleneck forward.  x_nhwc: (N, H, W, Cin) f32, Cin == 4*planes."""
    N, H, W, Cin = x_nhwc.shape
    w1, s1, b1, w2, s2, b2, w3, s3, b3 = params
    P = w1.shape[1]
    Cout = w3.shape[1]
    assert Cin == Cout, "downsample=None requires inplanes == planes * 4"

    if tile_h is None:
        tile_h = _default_tile_h(H, W, Cout, P)
    assert H % tile_h == 0, (H, tile_h)
    num_tiles = H // tile_h

    # Fold BN scales into bf16 weights (only bias + relu stay in the kernel);
    # fold kw into the conv2 contraction: w2 -> (3, 3P, P), K = 3P.
    w1f = (w1 * s1[0]).astype(jnp.bfloat16)                      # (Cin, P)
    w2f = (w2 * s2[0]).reshape(3, 3 * P, P).astype(jnp.bfloat16)  # (3, 3P, P)
    w3f = (w3 * s3[0]).astype(jnp.bfloat16)                      # (P, Cout)
    x_bf16 = x_nhwc.astype(jnp.bfloat16)

    kernel = functools.partial(_bottleneck_kernel,
                               H=H, W=W, C=Cout, P=P, TH=tile_h)

    def _full(shape):
        rank = len(shape)
        return pl.BlockSpec(shape, lambda n, t, _r=rank: (0,) * _r)

    # Explicit scoped-VMEM budget from the real footprint + margin, capped
    # below this generation's physical VMEM (v7x: 64 MiB -> cap 48 MiB).
    try:
        vmem_cap = pltpu.get_tpu_info().vmem_capacity_bytes
    except Exception:
        vmem_cap = 64 * 1024 * 1024
    est = (2 * H * W * Cin * 2                            # bf16 image block, 2 buffers
           + 2 * tile_h * W * Cin * 4                     # residual block, 2 buffers
           + 2 * tile_h * W * Cout * 4                    # output block, 2 buffers
           + 4 * (Cin * P + 9 * P * P + P * Cout)         # bf16 weights, 2 buffers
           + (tile_h + 2) * W * (6 * P + 2 * Cin + 12 * P)  # slab + xh + o1/left/right
           + tile_h * W * (6 * P + 8 * Cout))             # acc/out2 + o3/resid temps
    vmem_limit = int(min(max(est + (8 << 20), 32 << 20),
                         max(vmem_cap - (16 << 20), 32 << 20)))

    return pl.pallas_call(
        kernel,
        out_shape=jax.ShapeDtypeStruct((N, H, W, Cout), x_nhwc.dtype),
        grid_spec=pltpu.PrefetchScalarGridSpec(
            num_scalar_prefetch=0,
            grid=(N, num_tiles),
            in_specs=[
                pl.BlockSpec((1, H, W, Cin), lambda n, t: (n, 0, 0, 0)),       # bf16 image
                pl.BlockSpec((1, tile_h, W, Cin), lambda n, t: (n, t, 0, 0)),  # f32 residual
                _full(w1f.shape), _full(b1.shape),
                _full(w2f.shape), _full(b2.shape),
                _full(w3f.shape), _full(b3.shape),
            ],
            out_specs=pl.BlockSpec((1, tile_h, W, Cout),
                                   lambda n, t: (n, t, 0, 0)),
            scratch_shapes=[pltpu.VMEM((tile_h + 2, W, 3 * P), jnp.bfloat16)],
        ),
        compiler_params=pltpu.CompilerParams(
            dimension_semantics=("parallel", "parallel"),
            vmem_limit_bytes=vmem_limit),
    )(x_bf16, x_nhwc, w1f, b1, w2f, b2, w3f, b3)


def _fold_bn(gamma, beta, mean, var, eps=1e-5):
    scale = gamma / jnp.sqrt(var + eps)
    bias = beta - mean * scale
    return scale[None, :], bias[None, :]


def _make_params(key, inplanes, planes):
    expansion = 4
    cout = planes * expansion
    ks = jax.random.split(key, 15)

    # conv weights stored in kernel-friendly layouts:
    #   w1: (Cin, P)   w2: (kh, kw, Pin, Pout)   w3: (P, Cout)
    w1 = jax.random.normal(ks[0], (inplanes, planes), jnp.float32) * 0.1
    w2 = jax.random.normal(ks[1], (3, 3, planes, planes), jnp.float32) * 0.1
    w3 = jax.random.normal(ks[2], (planes, cout), jnp.float32) * 0.1

    def bn(kg, kb, km, kv, c):
        gamma = 0.5 + jax.random.uniform(kg, (c,), jnp.float32)
        beta = jax.random.normal(kb, (c,), jnp.float32) * 0.1
        mean = jax.random.normal(km, (c,), jnp.float32) * 0.1
        var = 0.5 + jax.random.uniform(kv, (c,), jnp.float32)
        return _fold_bn(gamma, beta, mean, var)

    s1, b1 = bn(ks[3], ks[4], ks[5], ks[6], planes)
    s2, b2 = bn(ks[7], ks[8], ks[9], ks[10], planes)
    s3, b3 = bn(ks[11], ks[12], ks[13], ks[14], cout)
    return (w1, s1, b1, w2, s2, b2, w3, s3, b3)


def bottleneck_reference(x_nhwc, params):
    """Pure-JAX NHWC reference mirroring the kernel's precision strategy
    (BN scale folded into bf16 weights, bf16 conv inputs, f32 residual)."""
    w1, s1, b1, w2, s2, b2, w3, s3, b3 = params
    dn = ('NHWC', 'HWIO', 'NHWC')
    w1f = (w1 * s1[0]).astype(jnp.bfloat16)[None, None]
    w2f = (w2 * s2[0]).astype(jnp.bfloat16)
    w3f = (w3 * s3[0]).astype(jnp.bfloat16)[None, None]

    def conv(x, w, pad):
        return lax.conv_general_dilated(
            x.astype(jnp.bfloat16), w, window_strides=(1, 1), padding=pad,
            dimension_numbers=dn, preferred_element_type=jnp.float32)

    o = jnp.maximum(conv(x_nhwc, w1f, 'VALID') + b1[0], 0.0)
    o = jnp.maximum(conv(o, w2f, 'SAME') + b2[0], 0.0)
    o = conv(o, w3f, 'VALID') + b3[0]
    return jnp.maximum(o + x_nhwc, 0.0)


if __name__ == "__main__":
    # Smallest lane-dense Bottleneck configuration:
    # planes=128 -> inplanes = 4*planes = 512 (required when downsample=None).
    N, H, W = 2, 16, 16
    planes = 128
    inplanes = planes * 4

    key = jax.random.PRNGKey(0)
    kx, kp = jax.random.split(key)

    # PyTorch-style NCHW input, transposed to the kernel's NHWC layout.
    x_nchw = jax.random.normal(kx, (N, inplanes, H, W), jnp.float32)
    x_nhwc = jnp.transpose(x_nchw, (0, 2, 3, 1))

    params = _make_params(kp, inplanes, planes)
    y_ref = bottleneck_reference(x_nhwc, params)

    for th in (None, 8):          # auto-sized tile and an explicit 2-tile split
        y_nhwc = bottleneck_pallas(x_nhwc, params, tile_h=th)
        y_nhwc = jax.block_until_ready(y_nhwc)
        assert y_nhwc.shape == (N, H, W, inplanes)
        max_err = float(jnp.max(jnp.abs(y_nhwc - y_ref)))
        # bf16 MXU matmuls (f32 accumulation) -> relaxed tolerance.
        assert jnp.allclose(y_nhwc, y_ref, atol=5e-2, rtol=5e-2), max_err

    y_nchw = jnp.transpose(y_nhwc, (0, 3, 1, 2))   # back to PyTorch layout
    assert y_nchw.shape == (N, inplanes, H, W)
    print("KERNEL_OK")
</pallas_src>

<mosaic_0001>
module attributes {stable_mosaic.version = 11 : i64} {
  func.func @_bottleneck_kernel(%arg0: i32, %arg1: i32, %arg2: memref<1x16x16x512xbf16, #tpu.memory_space<vmem>>, %arg3: memref<1x16x16x512xf32, #tpu.memory_space<vmem>>, %arg4: memref<512x128xbf16, #tpu.memory_space<vmem>>, %arg5: memref<1x128xf32, #tpu.memory_space<vmem>>, %arg6: memref<3x384x128xbf16, #tpu.memory_space<vmem>>, %arg7: memref<1x128xf32, #tpu.memory_space<vmem>>, %arg8: memref<128x512xbf16, #tpu.memory_space<vmem>>, %arg9: memref<1x512xf32, #tpu.memory_space<vmem>>, %arg10: memref<1x16x16x512xf32, #tpu.memory_space<vmem>>, %arg11: memref<18x16x384xbf16, #tpu.memory_space<vmem>>) attributes {dimension_semantics = [#tpu.dimension_semantics<parallel>, #tpu.dimension_semantics<parallel>], iteration_bounds = array<i64: 2, 1>, scalar_prefetch = 0 : i64, scratch_operands = 1 : i64, tpu.core_type = #tpu.core_type<tc>, window_params = [{transform_indices = @transform_0, window_bounds = array<i64: 1, 16, 16, 512>}, {transform_indices = @transform_1, window_bounds = array<i64: 1, 16, 16, 512>}, {pipeline_mode = #tpu.pipeline_mode<synchronous>, transform_indices = @transform_2, window_bounds = array<i64: 512, 128>}, {pipeline_mode = #tpu.pipeline_mode<synchronous>, transform_indices = @transform_3, window_bounds = array<i64: 1, 128>}, {pipeline_mode = #tpu.pipeline_mode<synchronous>, transform_indices = @transform_4, window_bounds = array<i64: 3, 384, 128>}, {pipeline_mode = #tpu.pipeline_mode<synchronous>, transform_indices = @transform_5, window_bounds = array<i64: 1, 128>}, {pipeline_mode = #tpu.pipeline_mode<synchronous>, transform_indices = @transform_6, window_bounds = array<i64: 128, 512>}, {pipeline_mode = #tpu.pipeline_mode<synchronous>, transform_indices = @transform_7, window_bounds = array<i64: 1, 512>}, {transform_indices = @transform_8, window_bounds = array<i64: 1, 16, 16, 512>}]} {
    %c16_i32 = arith.constant 16 : i32
    %0 = arith.muli %arg1, %c16_i32 : i32
    %c1_i32 = arith.constant 1 : i32
    %1 = arith.subi %0, %c1_i32 : i32
    %c0_i32 = arith.constant 0 : i32
    %2 = arith.maxsi %1, %c0_i32 : i32
    %c16_i32_0 = arith.constant 16 : i32
    %3 = arith.addi %0, %c16_i32_0 : i32
    %c15_i32 = arith.constant 15 : i32
    %4 = arith.minsi %3, %c15_i32 : i32
    %c0 = arith.constant 0 : index
    %5 = arith.index_cast %2 : i32 to index
    %c0_1 = arith.constant 0 : index
    %c0_2 = arith.constant 0 : index
    %6 = vector.load %arg2[%c0, %5, %c0_1, %c0_2] : memref<1x16x16x512xbf16, #tpu.memory_space<vmem>>, vector<1x1x16x512xbf16>
    %7 = vector.shape_cast %6 : vector<1x1x16x512xbf16> to vector<1x16x512xbf16>
    %c0_3 = arith.constant 0 : index
    %8 = arith.index_cast %0 : i32 to index
    %c0_4 = arith.constant 0 : index
    %c0_5 = arith.constant 0 : index
    %9 = vector.load %arg2[%c0_3, %8, %c0_4, %c0_5] : memref<1x16x16x512xbf16, #tpu.memory_space<vmem>>, vector<1x16x16x512xbf16>
    %10 = vector.shape_cast %9 : vector<1x16x16x512xbf16> to vector<16x16x512xbf16>
    %c0_6 = arith.constant 0 : index
    %11 = arith.index_cast %4 : i32 to index
    %c0_7 = arith.constant 0 : index
    %c0_8 = arith.constant 0 : index
    %12 = vector.load %arg2[%c0_6, %11, %c0_7, %c0_8] : memref<1x16x16x512xbf16, #tpu.memory_space<vmem>>, vector<1x1x16x512xbf16>
    %13 = vector.shape_cast %12 : vector<1x1x16x512xbf16> to vector<1x16x512xbf16>
    %14 = tpu.concatenate %7, %10, %13 in 0 : vector<1x16x512xbf16>, vector<16x16x512xbf16>, vector<1x16x512xbf16> -> vector<18x16x512xbf16>
    %15 = vector.shape_cast %14 : vector<18x16x512xbf16> to vector<288x512xbf16>
    %c0_9 = arith.constant 0 : index
    %c0_10 = arith.constant 0 : index
    %16 = vector.load %arg4[%c0_9, %c0_10] : memref<512x128xbf16, #tpu.memory_space<vmem>>, vector<512x128xbf16>
    %cst = arith.constant dense<0.000000e+00> : vector<288x128xf32>
    %17 = tpu.matmul %15, %16, %cst {dimension_numbers = #tpu.dot_dimension_numbers<[1], [0], [0], [1], [0, 0, 1, 1], [], []>} : vector<288x512xbf16>, vector<512x128xbf16>, vector<288x128xf32> -> vector<288x128xf32>
    %c0_11 = arith.constant 0 : index
    %c0_12 = arith.constant 0 : index
    %18 = vector.load %arg5[%c0_11, %c0_12] : memref<1x128xf32, #tpu.memory_space<vmem>>, vector<1x128xf32>
    %19 = vector.shape_cast %18 : vector<1x128xf32> to vector<128xf32>
    %20 = vector.shape_cast %19 : vector<128xf32> to vector<1x128xf32>
    %21 = vector.broadcast %20 : vector<1x128xf32> to vector<288x128xf32>
    %22 = arith.addf %17, %21 : vector<288x128xf32>
    %cst_13 = arith.constant 0.000000e+00 : f32
    %23 = vector.broadcast %cst_13 : f32 to vector<288x128xf32>
    %24 = arith.maximumf %22, %23 : vector<288x128xf32>
    %25 = vector.shape_cast %24 : vector<288x128xf32> to vector<18x16x128xf32>
    %26 = tpu.iota {dimensions = array<i32: 0>} : vector<18x16x128xi32>
    %c1_i32_14 = arith.constant 1 : i32
    %27 = arith.subi %0, %c1_i32_14 : i32
    %28 = vector.broadcast %27 : i32 to vector<18x16x128xi32>
    %29 = arith.addi %26, %28 : vector<18x16x128xi32>
    %c0_i32_15 = arith.constant 0 : i32
    %30 = vector.broadcast %c0_i32_15 : i32 to vector<18x16x128xi32>
    %31 = arith.cmpi sge, %29, %30 : vector<18x16x128xi32>
    %c16_i32_16 = arith.constant 16 : i32
    %32 = vector.broadcast %c16_i32_16 : i32 to vector<18x16x128xi32>
    %33 = arith.cmpi slt, %29, %32 : vector<18x16x128xi32>
    %34 = arith.andi %31, %33 : vector<18x16x128xi1>
    %cst_17 = arith.constant 0.000000e+00 : f32
    %35 = vector.broadcast %cst_17 : f32 to vector<18x16x128xf32>
    %36 = arith.select %34, %25, %35 : vector<18x16x128xi1>, vector<18x16x128xf32>
    %37 = tpu.iota {dimensions = array<i32: 1>} : vector<1x16x128xi32>
    %c0_i32_18 = arith.constant 0 : i32
    %38 = vector.broadcast %c0_i32_18 : i32 to vector<1x16x128xi32>
    %39 = arith.cmpi sgt, %37, %38 : vector<1x16x128xi32>
    %c1_i32_19 = arith.constant 1 : i32
    %40 = tpu.dynamic_rotate %36 by %c1_i32_19 dim 1 : vector<18x16x128xf32>, i32 -> vector<18x16x128xf32>
    %cst_20 = arith.constant 0.000000e+00 : f32
    %41 = vector.shape_cast %39 : vector<1x16x128xi1> to vector<1x16x128xi1>
    %42 = vector.broadcast %41 : vector<1x16x128xi1> to vector<18x16x128xi1>
    %43 = vector.broadcast %cst_20 : f32 to vector<18x16x128xf32>
    %44 = arith.select %42, %40, %43 : vector<18x16x128xi1>, vector<18x16x128xf32>
    %c15_i32_21 = arith.constant 15 : i32
    %45 = vector.broadcast %c15_i32_21 : i32 to vector<1x16x128xi32>
    %46 = arith.cmpi slt, %37, %45 : vector<1x16x128xi32>
    %c15_i32_22 = arith.constant 15 : i32
    %47 = tpu.dynamic_rotate %36 by %c15_i32_22 dim 1 : vector<18x16x128xf32>, i32 -> vector<18x16x128xf32>
    %cst_23 = arith.constant 0.000000e+00 : f32
    %48 = vector.shape_cast %46 : vector<1x16x128xi1> to vector<1x16x128xi1>
    %49 = vector.broadcast %48 : vector<1x16x128xi1> to vector<18x16x128xi1>
    %50 = vector.broadcast %cst_23 : f32 to vector<18x16x128xf32>
    %51 = arith.select %49, %47, %50 : vector<18x16x128xi1>, vector<18x16x128xf32>
    %52 = arith.truncf %44 : vector<18x16x128xf32> to vector<18x16x128xbf16>
    %c0_24 = arith.constant 0 : index
    %c0_25 = arith.constant 0 : index
    %c0_26 = arith.constant 0 : index
    %53 = vector.load %arg11[%c0_24, %c0_25, %c0_26] : memref<18x16x384xbf16, #tpu.memory_space<vmem>>, vector<18x16x128xbf16>
    tpu.vector_store %arg11[%c0_24, %c0_25, %c0_26], %52 {strides = array<i32>} : memref<18x16x384xbf16, #tpu.memory_space<vmem>>, vector<18x16x128xbf16>,
    %54 = arith.truncf %36 : vector<18x16x128xf32> to vector<18x16x128xbf16>
    %c0_27 = arith.constant 0 : index
    %c0_28 = arith.constant 0 : index
    %c128 = arith.constant 128 : index
    %55 = vector.load %arg11[%c0_27, %c0_28, %c128] : memref<18x16x384xbf16, #tpu.memory_space<vmem>>, vector<18x16x128xbf16>
    tpu.vector_store %arg11[%c0_27, %c0_28, %c128], %54 {strides = array<i32>} : memref<18x16x384xbf16, #tpu.memory_space<vmem>>, vector<18x16x128xbf16>,
    %56 = arith.truncf %51 : vector<18x16x128xf32> to vector<18x16x128xbf16>
    %c0_29 = arith.constant 0 : index
    %c0_30 = arith.constant 0 : index
    %c256 = arith.constant 256 : index
    %57 = vector.load %arg11[%c0_29, %c0_30, %c256] : memref<18x16x384xbf16, #tpu.memory_space<vmem>>, vector<18x16x128xbf16>
    tpu.vector_store %arg11[%c0_29, %c0_30, %c256], %56 {strides = array<i32>} : memref<18x16x384xbf16, #tpu.memory_space<vmem>>, vector<18x16x128xbf16>,
    %c0_31 = arith.constant 0 : index
    %c0_32 = arith.constant 0 : index
    %c0_33 = arith.constant 0 : index
    %58 = vector.load %arg11[%c0_31, %c0_32, %c0_33] : memref<18x16x384xbf16, #tpu.memory_space<vmem>>, vector<16x16x384xbf16>
    %59 = vector.shape_cast %58 : vector<16x16x384xbf16> to vector<256x384xbf16>
    %c0_34 = arith.constant 0 : index
    %c0_35 = arith.constant 0 : index
    %c0_36 = arith.constant 0 : index
    %60 = vector.load %arg6[%c0_34, %c0_35, %c0_36] : memref<3x384x128xbf16, #tpu.memory_space<vmem>>, vector<1x384x128xbf16>
    %61 = vector.shape_cast %60 : vector<1x384x128xbf16> to vector<384x128xbf16>
    %cst_37 = arith.constant dense<0.000000e+00> : vector<256x128xf32>
    %62 = tpu.matmul %59, %61, %cst_37 {dimension_numbers = #tpu.dot_dimension_numbers<[1], [0], [0], [1], [0, 0, 1, 1], [], []>} : vector<256x384xbf16>, vector<384x128xbf16>, vector<256x128xf32> -> vector<256x128xf32>
    %c1 = arith.constant 1 : index
    %c0_38 = arith.constant 0 : index
    %c0_39 = arith.constant 0 : index
    %63 = vector.load %arg11[%c1, %c0_38, %c0_39] : memref<18x16x384xbf16, #tpu.memory_space<vmem>>, vector<16x16x384xbf16>
    %64 = vector.shape_cast %63 : vector<16x16x384xbf16> to vector<256x384xbf16>
    %c1_40 = arith.constant 1 : index
    %c0_41 = arith.constant 0 : index
    %c0_42 = arith.constant 0 : index
    %65 = vector.load %arg6[%c1_40, %c0_41, %c0_42] : memref<3x384x128xbf16, #tpu.memory_space<vmem>>, vector<1x384x128xbf16>
    %66 = vector.shape_cast %65 : vector<1x384x128xbf16> to vector<384x128xbf16>
    %cst_43 = arith.constant dense<0.000000e+00> : vector<256x128xf32>
    %67 = tpu.matmul %64, %66, %cst_43 {dimension_numbers = #tpu.dot_dimension_numbers<[1], [0], [0], [1], [0, 0, 1, 1], [], []>} : vector<256x384xbf16>, vector<384x128xbf16>, vector<256x128xf32> -> vector<256x128xf32>
    %68 = arith.addf %62, %67 : vector<256x128xf32>
    %c2 = arith.constant 2 : index
    %c0_44 = arith.constant 0 : index
    %c0_45 = arith.constant 0 : index
    %69 = vector.load %arg11[%c2, %c0_44, %c0_45] : memref<18x16x384xbf16, #tpu.memory_space<vmem>>, vector<16x16x384xbf16>
    %70 = vector.shape_cast %69 : vector<16x16x384xbf16> to vector<256x384xbf16>
    %c2_46 = arith.constant 2 : index
    %c0_47 = arith.constant 0 : index
    %c0_48 = arith.constant 0 : index
    %71 = vector.load %arg6[%c2_46, %c0_47, %c0_48] : memref<3x384x128xbf16, #tpu.memory_space<vmem>>, vector<1x384x128xbf16>
    %72 = vector.shape_cast %71 : vector<1x384x128xbf16> to vector<384x128xbf16>
    %cst_49 = arith.constant dense<0.000000e+00> : vector<256x128xf32>
    %73 = tpu.matmul %70, %72, %cst_49 {dimension_numbers = #tpu.dot_dimension_numbers<[1], [0], [0], [1], [0, 0, 1, 1], [], []>} : vector<256x384xbf16>, vector<384x128xbf16>, vector<256x128xf32> -> vector<256x128xf32>
    %74 = arith.addf %68, %73 : vector<256x128xf32>
    %c0_50 = arith.constant 0 : index
    %c0_51 = arith.constant 0 : index
    %75 = vector.load %arg7[%c0_50, %c0_51] : memref<1x128xf32, #tpu.memory_space<vmem>>, vector<1x128xf32>
    %76 = vector.shape_cast %75 : vector<1x128xf32> to vector<128xf32>
    %77 = vector.shape_cast %76 : vector<128xf32> to vector<1x128xf32>
    %78 = vector.broadcast %77 : vector<1x128xf32> to vector<256x128xf32>
    %79 = arith.addf %74, %78 : vector<256x128xf32>
    %cst_52 = arith.constant 0.000000e+00 : f32
    %80 = vector.broadcast %cst_52 : f32 to vector<256x128xf32>
    %81 = arith.maximumf %79, %80 : vector<256x128xf32>
    %82 = arith.truncf %81 : vector<256x128xf32> to vector<256x128xbf16>
    %c0_53 = arith.constant 0 : index
    %c0_54 = arith.constant 0 : index
    %83 = vector.load %arg8[%c0_53, %c0_54] : memref<128x512xbf16, #tpu.memory_space<vmem>>, vector<128x512xbf16>
    %cst_55 = arith.constant dense<0.000000e+00> : vector<256x512xf32>
    %84 = tpu.matmul %82, %83, %cst_55 {dimension_numbers = #tpu.dot_dimension_numbers<[1], [0], [0], [1], [0, 0, 1, 1], [], []>} : vector<256x128xbf16>, vector<128x512xbf16>, vector<256x512xf32> -> vector<256x512xf32>
    %c0_56 = arith.constant 0 : index
    %c0_57 = arith.constant 0 : index
    %85 = vector.load %arg9[%c0_56, %c0_57] : memref<1x512xf32, #tpu.memory_space<vmem>>, vector<1x512xf32>
    %86 = vector.shape_cast %85 : vector<1x512xf32> to vector<512xf32>
    %87 = vector.shape_cast %86 : vector<512xf32> to vector<1x512xf32>
    %88 = vector.broadcast %87 : vector<1x512xf32> to vector<256x512xf32>
    %89 = arith.addf %84, %88 : vector<256x512xf32>
    %c0_58 = arith.constant 0 : index
    %c0_59 = arith.constant 0 : index
    %c0_60 = arith.constant 0 : index
    %c0_61 = arith.constant 0 : index
    %90 = vector.load %arg3[%c0_58, %c0_59, %c0_60, %c0_61] : memref<1x16x16x512xf32, #tpu.memory_space<vmem>>, vector<1x16x16x512xf32>
    %91 = vector.shape_cast %90 : vector<1x16x16x512xf32> to vector<16x16x512xf32>
    %92 = vector.shape_cast %91 : vector<16x16x512xf32> to vector<256x512xf32>
    %93 = arith.addf %89, %92 : vector<256x512xf32>
    %cst_62 = arith.constant 0.000000e+00 : f32
    %94 = vector.broadcast %cst_62 : f32 to vector<256x512xf32>
    %95 = arith.maximumf %93, %94 : vector<256x512xf32>
    %96 = vector.shape_cast %95 : vector<256x512xf32> to vector<16x16x512xf32>
    %c0_63 = arith.constant 0 : index
    %c0_64 = arith.constant 0 : index
    %c0_65 = arith.constant 0 : index
    %c0_66 = arith.constant 0 : index
    %97 = vector.load %arg10[%c0_63, %c0_64, %c0_65, %c0_66] : memref<1x16x16x512xf32, #tpu.memory_space<vmem>>, vector<1x16x16x512xf32>
    %98 = vector.shape_cast %97 : vector<1x16x16x512xf32> to vector<16x16x512xf32>
    %99 = vector.shape_cast %96 : vector<16x16x512xf32> to vector<1x16x16x512xf32>
    tpu.vector_store %arg10[%c0_63, %c0_64, %c0_65, %c0_66], %99 {strides = array<i32>} : memref<1x16x16x512xf32, #tpu.memory_space<vmem>>, vector<1x16x16x512xf32>,
    return
  }
  func.func @transform_0(%arg0: i32, %arg1: i32) -> (i32, i32, i32, i32) {
    %c0_i32 = arith.constant 0 : i32
    %c0_i32_0 = arith.constant 0 : i32
    %c0_i32_1 = arith.constant 0 : i32
    %c0_i32_2 = arith.constant 0 : i32
    return %arg0, %c0_i32, %c0_i32_0, %c0_i32_1 : i32, i32, i32, i32
  }
  func.func @transform_1(%arg0: i32, %arg1: i32) -> (i32, i32, i32, i32) {
    %c0_i32 = arith.constant 0 : i32
    %c0_i32_0 = arith.constant 0 : i32
    %c0_i32_1 = arith.constant 0 : i32
    return %arg0, %arg1, %c0_i32, %c0_i32_0 : i32, i32, i32, i32
  }
  func.func @transform_2(%arg0: i32, %arg1: i32) -> (i32, i32) {
    %c0_i32 = arith.constant 0 : i32
    %c0_i32_0 = arith.constant 0 : i32
    %c0_i32_1 = arith.constant 0 : i32
    return %c0_i32, %c0_i32_0 : i32, i32
  }
  func.func @transform_3(%arg0: i32, %arg1: i32) -> (i32, i32) {
    %c0_i32 = arith.constant 0 : i32
    %c0_i32_0 = arith.constant 0 : i32
    %c0_i32_1 = arith.constant 0 : i32
    return %c0_i32, %c0_i32_0 : i32, i32
  }
  func.func @transform_4(%arg0: i32, %arg1: i32) -> (i32, i32, i32) {
    %c0_i32 = arith.constant 0 : i32
    %c0_i32_0 = arith.constant 0 : i32
    %c0_i32_1 = arith.constant 0 : i32
    %c0_i32_2 = arith.constant 0 : i32
    return %c0_i32, %c0_i32_0, %c0_i32_1 : i32, i32, i32
  }
  func.func @transform_5(%arg0: i32, %arg1: i32) -> (i32, i32) {
    %c0_i32 = arith.constant 0 : i32
    %c0_i32_0 = arith.constant 0 : i32
    %c0_i32_1 = arith.constant 0 : i32
    return %c0_i32, %c0_i32_0 : i32, i32
  }
  func.func @transform_6(%arg0: i32, %arg1: i32) -> (i32, i32) {
    %c0_i32 = arith.constant 0 : i32
    %c0_i32_0 = arith.constant 0 : i32
    %c0_i32_1 = arith.constant 0 : i32
    return %c0_i32, %c0_i32_0 : i32, i32
  }
  func.func @transform_7(%arg0: i32, %arg1: i32) -> (i32, i32) {
    %c0_i32 = arith.constant 0 : i32
    %c0_i32_0 = arith.constant 0 : i32
    %c0_i32_1 = arith.constant 0 : i32
    return %c0_i32, %c0_i32_0 : i32, i32
  }
  func.func @transform_8(%arg0: i32, %arg1: i32) -> (i32, i32, i32, i32) {
    %c0_i32 = arith.constant 0 : i32
    %c0_i32_0 = arith.constant 0 : i32
    %c0_i32_1 = arith.constant 0 : i32
    return %arg0, %arg1, %c0_i32, %c0_i32_0 : i32, i32, i32, i32
  }
}

</mosaic_0001>

<llo_original>
// kernel: tpu_custom_call.1
$region0: #{tpu_custom_call.1}
  #allocation0 [shape = 'u32[]', space=smem, size = 0x4, offset = 0x4, fixed_abs, tag = 'smem constant byte address 0x4 - core index']
  #allocation1 [shape = 'u32[144,128]{1,0:T(1,128)}', space=vmem, size = 0x12000, scoped, tag = 'internal scratch']
  #allocation2 [shape = 'bf16[18,16,384]{2,1,0:T(16,128)(2,1)}', space=vmem, size = 0x36000, scoped, tag = 'scratch operand']
  %s0 = inlined_call_operand.hbm [shape: bf16[2,16,16,512], index: 0, kind: input, shape index: {}]
  %s1 = inlined_call_operand.hbm [shape: f32[2,16,16,512], index: 1, kind: input, shape index: {}]
  %s2 = inlined_call_operand.hbm [shape: bf16[512,128], index: 2, kind: input, shape index: {}]
  %s3 = inlined_call_operand.vmem [shape: f32[1,128], index: 3, kind: input, shape index: {}]
  %s4 = inlined_call_operand.hbm [shape: bf16[3,384,128], index: 4, kind: input, shape index: {}]
  %s5 = inlined_call_operand.vmem [shape: f32[1,128], index: 5, kind: input, shape index: {}]
  %s6 = inlined_call_operand.hbm [shape: bf16[128,512], index: 6, kind: input, shape index: {}]
  %s7 = inlined_call_operand.vmem [shape: f32[1,512], index: 7, kind: input, shape index: {}]
  %s8 = inlined_call_operand.hbm [shape: f32[2,16,16,512], index: 8, kind: output, shape index: {}]
  %s9 = sld [smem:[#allocation0]]
  $region85: #{tpu_custom_call.1} parent=0
    _
  %s11 = ssub.s32 1, %s9
  %s12 = scalar_select 0, %s11, %s9
  $region1: #{tpu_custom_call.1} parent=0
    #allocation3 [shape = 'u8[524288]{0}', space=vmem, size = 0x80000, scoped, tag = 'input window, operand 0']
    #allocation4 [shape = 's32[2]{0}', space=sflag, size = 0x8, scoped, tag = 'scoped memory for tpu_custom_call.1']
    #allocation5 [shape = 's32[2]{0}', space=sflag, size = 0x8, scoped, tag = 'scoped memory for tpu_custom_call.1']
    #allocation6 [shape = 'u8[1048576]{0}', space=vmem, size = 0x100000, scoped, tag = 'input window, operand 1']
    #allocation7 [shape = 's32[2]{0}', space=sflag, size = 0x8, scoped, tag = 'scoped memory for tpu_custom_call.1']
    #allocation8 [shape = 'u8[131072]{0}', space=vmem, size = 0x20000, scoped, tag = 'input window, operand 2, single buffered']
    #allocation9 [shape = 'u8[294912]{0}', space=vmem, size = 0x48000, scoped, tag = 'input window, operand 4, single buffered']
    #allocation10 [shape = 's32[1]{0}', space=sflag, size = 0x4, scoped, tag = 'scoped memory for tpu_custom_call.1']
    #allocation11 [shape = 'u8[131072]{0}', space=vmem, size = 0x20000, scoped, tag = 'input window, operand 6, single buffered']
    #allocation12 [shape = 'u8[1048576]{0}', space=vmem, size = 0x100000, scoped, tag = 'output window, operand 0']
    %13 = vsyncpa [#allocation4], 0
    %s14 = scalar_lea.sflag [#allocation4], 1
    %15 = vsyncpa %s14, 0
    %16 = vsyncpa [#allocation7], 0
    %s17 = scalar_lea.sflag [#allocation7], 1
    %18 = vsyncpa %s17, 0
    %19 = vsyncpa [#allocation10], 0
    %20 = vsyncpa [#allocation5], 0
    %s21 = scalar_lea.sflag [#allocation5], 1
    %22 = vsyncpa %s21, 0
    loop: start=0, step=1, limit=4
    $region2: #{tpu_custom_call.1} parent=1 // loop_pre_header
      _
    $region3: #{tpu_custom_call.1} parent=1 // loop_header
      %s24 = sphi 0, %s28
      %p25 = scmp.ge.s32.totalorder %s24, 4
      %s31 = sphi 0, %s43
      %s32 = sphi 0, %s39
      %s33 = sphi 0, %s31
      %s34 = sphi 0, %s32
      %s35 = sphi 0, %s33
      %s36 = sphi 0, %s34
      %s46 = sphi 0, %s48
      %s49 = sphi 0, %s46
      %s50 = sphi 0, %s49
      %s66 = sphi 0, %s50
      %s74 = sphi 0, %s76
      %s77 = sphi 0, %s74
      %s78 = sphi 0, %s77
      %s94 = sphi 0, %s78
      %s98 = sphi 0, %s98
      %s100 = sphi 0, %s98
      %s101 = sphi 0, %s100
      %s115 = sphi 0, %s101
      %s119 = sphi 0, %s119
      %s121 = sphi 0, %s119
      %s122 = sphi 0, %s121
      %s136 = sphi 0, %s122
      %s140 = sphi 0, %s140
      %s142 = sphi 0, %s140
      %s143 = sphi 0, %s142
      %s157 = sphi 0, %s143
      %s161 = sphi 0, %s161
      %s163 = sphi 0, %s161
      %s164 = sphi 0, %s163
      %s178 = sphi 0, %s164
      %s182 = sphi 0, %s182
      %s184 = sphi 0, %s182
      %s185 = sphi 0, %s184
      %s199 = sphi 0, %s185
      %s203 = sphi 0, %s203
      %s205 = sphi 0, %s203
      %s206 = sphi 0, %s205
      %s220 = sphi 0, %s206
      %s228 = sphi 0, %s230
      %s231 = sphi 0, %s228
      %s232 = sphi 0, %s231
      %s248 = sphi 0, %s232
    $region4: #{tpu_custom_call.1} parent=1 // loop_header_branch
      %27 = sbr.rel (%p25) target = $region8
    $region5: #{tpu_custom_call.1} parent=1 // loop_body
      %s29 = ssub.s32 %s24, 1
      %s30 = ssub.s32 %s24, 2
      %s37 = sadd.s32 1, %s32
      %p38 = scmp.ge.s32.totalorder %s37, 1
      %s39 = scalar_select %p38, 0, %s37
      %s40 = sadd.s32 1, %s31
      %s41 = scalar_select %p38, %s40, %s31
      %p42 = scmp.ge.s32.totalorder %s41, 2
      %s43 = scalar_select %p42, 0, %s41
      %s44 = ssub.s32 %s31, %s43
      %p45 = scmp.eq.s32.totalorder %s44, 0
      %s47 = sadd.s32 %s46, 1
      %s48 = scalar_select %p45, %s46, %s47
      %p51 = pneg %p45
      %p52 = scmp.eq.s32.totalorder %s24, 1
      %p53 = por %p51, %p52
      %p54 = scmp.ne.s32.totalorder %s46, %s49
      %p55 = scmp.eq.s32.totalorder %s24, 0
      %p56 = por %p54, %p55
      %p57 = scmp.ne.s32.totalorder %s46, %s49
      %p58 = scmp.eq.s32.totalorder %s29, 1
      %p59 = por %p57, %p58
      %p60 = scmp.ne.s32.totalorder %s49, %s50
      %p61 = scmp.eq.s32.totalorder %s29, 0
      %p62 = por %p60, %p61
      %p63 = scmp.ne.s32.totalorder %s49, %s50
      %p64 = scmp.eq.s32.totalorder %s30, 1
      %p65 = por %p63, %p64
      %p67 = scmp.ne.s32.totalorder %s50, %s66
      %p68 = scmp.eq.s32.totalorder %s30, 0
      %p69 = por %p67, %p68
      %s70 = ssub.s32 %s31, %s43
      %s71 = ssub.s32 %s32, %s39
      %s72 = sor.u32 %s70, %s71
      %p73 = scmp.eq.s32.totalorder %s72, 0
      %s75 = sadd.s32 %s74, 1
      %s76 = scalar_select %p73, %s74, %s75
      %p79 = pneg %p73
      %p80 = scmp.eq.s32.totalorder %s24, 1
      %p81 = por %p79, %p80
      %p82 = scmp.ne.s32.totalorder %s74, %s77
      %p83 = scmp.eq.s32.totalorder %s24, 0
      %p84 = por %p82, %p83
      %p85 = scmp.ne.s32.totalorder %s74, %s77
      %p86 = scmp.eq.s32.totalorder %s29, 1
      %p87 = por %p85, %p86
      %p88 = scmp.ne.s32.totalorder %s77, %s78
      %p89 = scmp.eq.s32.totalorder %s29, 0
      %p90 = por %p88, %p89
      %p91 = scmp.ne.s32.totalorder %s77, %s78
      %p92 = scmp.eq.s32.totalorder %s30, 1
      %p93 = por %p91, %p92
      %p95 = scmp.ne.s32.totalorder %s78, %s94
      %p96 = scmp.eq.s32.totalorder %s30, 0
      %p97 = por %p95, %p96
      %s99 = sadd.s32 %s98, 1
      %p102 = scmp.eq.s32.totalorder %s24, 1
      %p103 = scmp.ne.s32.totalorder %s98, %s100
      %p104 = scmp.eq.s32.totalorder %s24, 0
      %p105 = por %p103, %p104
      %p106 = scmp.ne.s32.totalorder %s98, %s100
      %p107 = scmp.eq.s32.totalorder %s29, 1
      %p108 = por %p106, %p107
      %p109 = scmp.ne.s32.totalorder %s100, %s101
      %p110 = scmp.eq.s32.totalorder %s29, 0
      %p111 = por %p109, %p110
      %p112 = scmp.ne.s32.totalorder %s100, %s101
      %p113 = scmp.eq.s32.totalorder %s30, 1
      %p114 = por %p112, %p113
      %p116 = scmp.ne.s32.totalorder %s101, %s115
      %p117 = scmp.eq.s32.totalorder %s30, 0
      %p118 = por %p116, %p117
      %s120 = sadd.s32 %s119, 1
      %p123 = scmp.eq.s32.totalorder %s24, 1
      %p124 = scmp.ne.s32.totalorder %s119, %s121
      %p125 = scmp.eq.s32.totalorder %s24, 0
      %p126 = por %p124, %p125
      %p127 = scmp.ne.s32.totalorder %s119, %s121
      %p128 = scmp.eq.s32.totalorder %s29, 1
      %p129 = por %p127, %p128
      %p130 = scmp.ne.s32.totalorder %s121, %s122
      %p131 = scmp.eq.s32.totalorder %s29, 0
      %p132 = por %p130, %p131
      %p133 = scmp.ne.s32.totalorder %s121, %s122
      %p134 = scmp.eq.s32.totalorder %s30, 1
      %p135 = por %p133, %p134
      %p137 = scmp.ne.s32.totalorder %s122, %s136
      %p138 = scmp.eq.s32.totalorder %s30, 0
      %p139 = por %p137, %p138
      %s141 = sadd.s32 %s140, 1
      %p144 = scmp.eq.s32.totalorder %s24, 1
      %p145 = scmp.ne.s32.totalorder %s140, %s142
      %p146 = scmp.eq.s32.totalorder %s24, 0
      %p147 = por %p145, %p146
      %p148 = scmp.ne.s32.totalorder %s140, %s142
      %p149 = scmp.eq.s32.totalorder %s29, 1
      %p150 = por %p148, %p149
      %p151 = scmp.ne.s32.totalorder %s142, %s143
      %p152 = scmp.eq.s32.totalorder %s29, 0
      %p153 = por %p151, %p152
      %p154 = scmp.ne.s32.totalorder %s142, %s143
      %p155 = scmp.eq.s32.totalorder %s30, 1
      %p156 = por %p154, %p155
      %p158 = scmp.ne.s32.totalorder %s143, %s157
      %p159 = scmp.eq.s32.totalorder %s30, 0
      %p160 = por %p158, %p159
      %s162 = sadd.s32 %s161, 1
      %p165 = scmp.eq.s32.totalorder %s24, 1
      %p166 = scmp.ne.s32.totalorder %s161, %s163
      %p167 = scmp.eq.s32.totalorder %s24, 0
      %p168 = por %p166, %p167
      %p169 = scmp.ne.s32.totalorder %s161, %s163
      %p170 = scmp.eq.s32.totalorder %s29, 1
      %p171 = por %p169, %p170
      %p172 = scmp.ne.s32.totalorder %s163, %s164
      %p173 = scmp.eq.s32.totalorder %s29, 0
      %p174 = por %p172, %p173
      %p175 = scmp.ne.s32.totalorder %s163, %s164
      %p176 = scmp.eq.s32.totalorder %s30, 1
      %p177 = por %p175, %p176
      %p179 = scmp.ne.s32.totalorder %s164, %s178
      %p180 = scmp.eq.s32.totalorder %s30, 0
      %p181 = por %p179, %p180
      %s183 = sadd.s32 %s182, 1
      %p186 = scmp.eq.s32.totalorder %s24, 1
      %p187 = scmp.ne.s32.totalorder %s182, %s184
      %p188 = scmp.eq.s32.totalorder %s24, 0
      %p189 = por %p187, %p188
      %p190 = scmp.ne.s32.totalorder %s182, %s184
      %p191 = scmp.eq.s32.totalorder %s29, 1
      %p192 = por %p190, %p191
      %p193 = scmp.ne.s32.totalorder %s184, %s185
      %p194 = scmp.eq.s32.totalorder %s29, 0
      %p195 = por %p193, %p194
      %p196 = scmp.ne.s32.totalorder %s184, %s185
      %p197 = scmp.eq.s32.totalorder %s30, 1
      %p198 = por %p196, %p197
      %p200 = scmp.ne.s32.totalorder %s185, %s199
      %p201 = scmp.eq.s32.totalorder %s30, 0
      %p202 = por %p200, %p201
      %s204 = sadd.s32 %s203, 1
      %p207 = scmp.eq.s32.totalorder %s24, 1
      %p208 = scmp.ne.s32.totalorder %s203, %s205
      %p209 = scmp.eq.s32.totalorder %s24, 0
      %p210 = por %p208, %p209
      %p211 = scmp.ne.s32.totalorder %s203, %s205
      %p212 = scmp.eq.s32.totalorder %s29, 1
      %p213 = por %p211, %p212
      %p214 = scmp.ne.s32.totalorder %s205, %s206
      %p215 = scmp.eq.s32.totalorder %s29, 0
      %p216 = por %p214, %p215
      %p217 = scmp.ne.s32.totalorder %s205, %s206
      %p218 = scmp.eq.s32.totalorder %s30, 1
      %p219 = por %p217, %p218
      %p221 = scmp.ne.s32.totalorder %s206, %s220
      %p222 = scmp.eq.s32.totalorder %s30, 0
      %p223 = por %p221, %p222
      %s224 = ssub.s32 %s31, %s43
      %s225 = ssub.s32 %s32, %s39
      %s226 = sor.u32 %s224, %s225
      %p227 = scmp.eq.s32.totalorder %s226, 0
      %s229 = sadd.s32 %s228, 1
      %s230 = scalar_select %p227, %s228, %s229
      %p233 = pneg %p227
      %p234 = scmp.eq.s32.totalorder %s24, 1
      %p235 = por %p233, %p234
      %p236 = scmp.ne.s32.totalorder %s228, %s231
      %p237 = scmp.eq.s32.totalorder %s24, 0
      %p238 = por %p236, %p237
      %p239 = scmp.ne.s32.totalorder %s228, %s231
      %p240 = scmp.eq.s32.totalorder %s29, 1
      %p241 = por %p239, %p240
      %p242 = scmp.ne.s32.totalorder %s231, %s232
      %p243 = scmp.eq.s32.totalorder %s29, 0
      %p244 = por %p242, %p243
      %p245 = scmp.ne.s32.totalorder %s231, %s232
      %p246 = scmp.eq.s32.totalorder %s30, 1
      %p247 = por %p245, %p246
      %p249 = scmp.ne.s32.totalorder %s232, %s248
      %p250 = scmp.eq.s32.totalorder %s30, 0
      %p251 = por %p249, %p250
      %p252 = scmp.le.s32.totalorder 1, %s24
      %p253 = scmp.lt.s32.totalorder %s24, 3
      %p254 = pnand %p252, %p253
      %p255 = pneg %p254
      // Predicated region
      $region9: #{tpu_custom_call.1} parent=5 // pred_check
        _
      $region10: #{tpu_custom_call.1} parent=5 // pred_check_branch
        %257 = sbr.rel (%p254) target = $region12
      $region11: #{tpu_custom_call.1} parent=5 // pred_region
        %s258 = ssub.s32 %s24, 1
        // Predicated region
        $region13: #{tpu_custom_call.1} parent=11 // pred_check
          %p259 = pneg %p111
        $region14: #{tpu_custom_call.1} parent=11 // pred_check_branch
          %261 = sbr.rel (%p259) target = $region16
        $region15: #{tpu_custom_call.1} parent=11 // pred_region
          %s263 = ssub.s32 4096, 4096
          %264 = vsyncadd [#allocation7], %s263
          %s265 = sshll.u32 [#allocation8], 4
          %s266 = int_to_ptr.vmem [resolvable:$true] %s265
          %271 = dma.hbm_to_vmem [thread:$0]  %s2, 4096, %s266, [#allocation7], 64, 64, 4
        $region16: #{tpu_custom_call.1} parent=11 // pred_fallthru
          _
        // Predicated region
        $region17: #{tpu_custom_call.1} parent=11 // pred_check
          %p272 = pneg %p132
        $region18: #{tpu_custom_call.1} parent=11 // pred_check_branch
          %274 = sbr.rel (%p272) target = $region20
        $region19: #{tpu_custom_call.1} parent=11 // pred_region
          _
        $region20: #{tpu_custom_call.1} parent=11 // pred_fallthru
          _
        // Predicated region
        $region21: #{tpu_custom_call.1} parent=11 // pred_check
          %p275 = pneg %p153
        $region22: #{tpu_custom_call.1} parent=11 // pred_check_branch
          %277 = sbr.rel (%p275) target = $region24
        $region23: #{tpu_custom_call.1} parent=11 // pred_region
          %s279 = ssub.s32 9216, 9216
          %280 = vsyncadd [#allocation10], %s279
          %s281 = sshll.u32 [#allocation9], 4
          %s282 = int_to_ptr.vmem [resolvable:$true] %s281
          %287 = dma.hbm_to_vmem [thread:$0]  %s4, 9216, %s282, [#allocation10], 64, 64, 4
        $region24: #{tpu_custom_call.1} parent=11 // pred_fallthru
          _
        // Predicated region
        $region25: #{tpu_custom_call.1} parent=11 // pred_check
          %p288 = pneg %p174
        $region26: #{tpu_custom_call.1} parent=11 // pred_check_branch
          %290 = sbr.rel (%p288) target = $region28
        $region27: #{tpu_custom_call.1} parent=11 // pred_region
          _
        $region28: #{tpu_custom_call.1} parent=11 // pred_fallthru
          _
        // Predicated region
        $region29: #{tpu_custom_call.1} parent=11 // pred_check
          %p291 = pneg %p195
        $region30: #{tpu_custom_call.1} parent=11 // pred_check_branch
          %293 = sbr.rel (%p291) target = $region32
        $region31: #{tpu_custom_call.1} parent=11 // pred_region
          %s295 = ssub.s32 4096, 4096
          %296 = vsyncadd [#allocation10], %s295
          %s297 = sshll.u32 [#allocation11], 4
          %s298 = int_to_ptr.vmem [resolvable:$true] %s297
          %303 = dma.hbm_to_vmem [thread:$0]  %s6, 4096, %s298, [#allocation10], 256, 256, 16
        $region32: #{tpu_custom_call.1} parent=11 // pred_fallthru
          _
        // Predicated region
        $region33: #{tpu_custom_call.1} parent=11 // pred_check
          %p304 = pneg %p216
        $region34: #{tpu_custom_call.1} parent=11 // pred_check_branch
          %306 = sbr.rel (%p304) target = $region36
        $region35: #{tpu_custom_call.1} parent=11 // pred_region
          _
        $region36: #{tpu_custom_call.1} parent=11 // pred_fallthru
          _
      $region12: #{tpu_custom_call.1} parent=5 // pred_fallthru
        _
      %p307 = scmp.lt.s32.totalorder %s24, 2
      // Predicated region
      $region37: #{tpu_custom_call.1} parent=5 // pred_check
        %p308 = pneg %p307
      $region38: #{tpu_custom_call.1} parent=5 // pred_check_branch
        %310 = sbr.rel (%p308) target = $region40
      $region39: #{tpu_custom_call.1} parent=5 // pred_region
        // Predicated region
        $region41: #{tpu_custom_call.1} parent=39 // pred_check
          %p311 = pneg %p56
        $region42: #{tpu_custom_call.1} parent=39 // pred_check_branch
          %313 = sbr.rel (%p311) target = $region44
        $region43: #{tpu_custom_call.1} parent=39 // pred_region
          %s314 = sand.u32 %s46, 1
          %s315 = scalar_lea.sflag [#allocation4], %s314
          %s316 = sand.u32 %s46, 1
          %s317 = smul.addr %s316, 512
          %s318 = scalar_lea.vmem [#allocation3], %s317
          %s320 = ssub.s32 8192, 8192
          %321 = vsyncadd %s315, %s320
          %s322 = smul.addr %s31, 128
          %s323 = smul.addr %s322, 64
          %s324 = scalar_lea.hbm %s0, %s323
          %s325 = sshll.u32 %s318, 4
          %s326 = int_to_ptr.vmem [resolvable:$true] %s325
          %331 = dma.hbm_to_vmem [thread:$0]  %s324, 8192, %s326, %s315, 256, 256, 16
        $region44: #{tpu_custom_call.1} parent=39 // pred_fallthru
          _
        // Predicated region
        $region45: #{tpu_custom_call.1} parent=39 // pred_check
          %p332 = pneg %p84
        $region46: #{tpu_custom_call.1} parent=39 // pred_check_branch
          %334 = sbr.rel (%p332) target = $region48
        $region47: #{tpu_custom_call.1} parent=39 // pred_region
          %s335 = sand.u32 %s24, 1
          %s336 = scalar_lea.sflag [#allocation7], %s335
          %s337 = sand.u32 %s74, 1
          %s338 = smul.addr %s337, 1024
          %s339 = scalar_lea.vmem [#allocation6], %s338
          %s340 = smul.u32 16, %s32
          %s342 = ssub.s32 16384, 16384
          %343 = vsyncadd %s336, %s342
          %s344 = smul.addr %s340, 8
          %s345 = smul.addr %s31, 128
          %s346 = sadd.s32 %s344, %s345
          %s347 = smul.addr %s346, 128
          %s348 = scalar_lea.hbm %s1, %s347
          %s349 = sshll.u32 %s339, 4
          %s350 = int_to_ptr.vmem [resolvable:$true] %s349
          %355 = dma.hbm_to_vmem [thread:$0]  %s348, 16384, %s350, %s336, 512, 512, 32
        $region48: #{tpu_custom_call.1} parent=39 // pred_fallthru
          _
      $region40: #{tpu_custom_call.1} parent=5 // pred_fallthru
        _
      %p356 = scmp.le.s32.totalorder 1, %s24
      %p357 = scmp.lt.s32.totalorder %s24, 3
      %p358 = pnand %p356, %p357
      %p359 = pneg %p358
      // Predicated region
      $region49: #{tpu_custom_call.1} parent=5 // pred_check
        _
      $region50: #{tpu_custom_call.1} parent=5 // pred_check_branch
        %361 = sbr.rel (%p358) target = $region52
      $region51: #{tpu_custom_call.1} parent=5 // pred_region
        %s362 = ssub.s32 %s24, 1
        %s363 = sand.u32 %s49, 1
        %s364 = scalar_lea.sflag [#allocation4], %s363
        %s365 = sand.u32 %s49, 1
        %s366 = smul.addr %s365, 512
        %s367 = scalar_lea.vmem [#allocation3], %s366
        // Predicated region
        $region53: #{tpu_custom_call.1} parent=51 // pred_check
          %p368 = pneg %p62
        $region54: #{tpu_custom_call.1} parent=51 // pred_check_branch
          %370 = sbr.rel (%p368) target = $region56
        $region55: #{tpu_custom_call.1} parent=51 // pred_region
          %371 = dma.done %s364, 8192
        $region56: #{tpu_custom_call.1} parent=51 // pred_fallthru
          _
        %s372 = sand.u32 %s29, 1
        %s373 = scalar_lea.sflag [#allocation7], %s372
        %s374 = sand.u32 %s77, 1
        %s375 = smul.addr %s374, 1024
        %s376 = scalar_lea.vmem [#allocation6], %s375
        // Predicated region
        $region57: #{tpu_custom_call.1} parent=51 // pred_check
          %p377 = pneg %p90
        $region58: #{tpu_custom_call.1} parent=51 // pred_check_branch
          %379 = sbr.rel (%p377) target = $region60
        $region59: #{tpu_custom_call.1} parent=51 // pred_region
          %380 = dma.done %s373, 16384
        $region60: #{tpu_custom_call.1} parent=51 // pred_fallthru
          _
        // Predicated region
        $region61: #{tpu_custom_call.1} parent=51 // pred_check
          %p381 = pneg %p111
        $region62: #{tpu_custom_call.1} parent=51 // pred_check_branch
          %383 = sbr.rel (%p381) target = $region64
        $region63: #{tpu_custom_call.1} parent=51 // pred_region
          %384 = dma.done [#allocation7], 4096
        $region64: #{tpu_custom_call.1} parent=51 // pred_fallthru
          _
        // Predicated region
        $region65: #{tpu_custom_call.1} parent=51 // pred_check
          %p385 = pneg %p153
        $region66: #{tpu_custom_call.1} parent=51 // pred_check_branch
          %387 = sbr.rel (%p385) target = $region68
        $region67: #{tpu_custom_call.1} parent=51 // pred_region
          %388 = dma.done [#allocation10], 9216
        $region68: #{tpu_custom_call.1} parent=51 // pred_fallthru
          _
        // Predicated region
        $region69: #{tpu_custom_call.1} parent=51 // pred_check
          %p389 = pneg %p195
        $region70: #{tpu_custom_call.1} parent=51 // pred_check_branch
          %391 = sbr.rel (%p389) target = $region72
        $region71: #{tpu_custom_call.1} parent=51 // pred_region
          %392 = dma.done [#allocation10], 4096
        $region72: #{tpu_custom_call.1} parent=51 // pred_fallthru
          _
        %s393 = sand.u32 %s49, 1
        %s394 = scalar_lea.sflag [#allocation4], %s393
        %s395 = sand.u32 %s49, 1
        %s396 = smul.addr %s395, 512
        %s397 = scalar_lea.vmem [#allocation3], %s396
        %p398 = pneg %p62
        %p399 = pneg %p59
        %s400 = sand.u32 %s29, 1
        %s401 = scalar_lea.sflag [#allocation7], %s400
        %s402 = sand.u32 %s77, 1
        %s403 = smul.addr %s402, 1024
        %s404 = scalar_lea.vmem [#allocation6], %s403
        %p405 = pneg %p90
        %p406 = pneg %p87
        %p407 = pneg %p111
        %p408 = pneg %p108
        %p409 = pneg %p132
        %p410 = pneg %p129
        %p411 = pneg %p153
        %p412 = pneg %p150
        %p413 = pneg %p174
        %p414 = pneg %p171
        %p415 = pneg %p195
        %p416 = pneg %p192
        %p417 = pneg %p216
        %p418 = pneg %p213
        %p419 = pneg %p244
        %p420 = pneg %p241
        %s421 = sand.u32 %s231, 1
        %s422 = scalar_lea.sflag [#allocation5], %s421
        %s423 = sand.u32 %s231, 1
        %s424 = smul.addr %s423, 1024
        %s425 = scalar_lea.vmem [#allocation12], %s424
        %s426 = smul.u32 16, %s34
        %s427 = smul.u32 16, %s34
        %s429 = smul.u32 %s34, 16
        %s430 = ssub.s32 %s429, 1
        %p431 = scmp.gt.s32.totalorder %s430, 0
        %s432 = scalar_select %p431, %s430, 0
        %s433 = sadd.s32 %s429, 16
        %p434 = scmp.lt.s32.totalorder %s433, 15
        %s435 = scalar_select %p434, %s433, 15
        %s436 = smul.u32 %s432, 8
        %s437 = smul.addr %s436, 4
        %s438 = scalar_lea.vmem %s367, %s437 [#allocation3]
        %v439 = vld [vmem:[%s438] sm:$0xff]
        %v440 = vld [vmem:[%s438 + $0x8] sm:$0xff]
        %v441 = vld [vmem:[%s438 + $0x10] sm:$0xff]
        %v442 = vld [vmem:[%s438 + $0x18] sm:$0xff]
        %s443 = smul.u32 %s429, 8
        %s444 = smul.addr %s443, 4
        %s445 = scalar_lea.vmem %s367, %s444 [#allocation3]
        %v446 = vld [vmem:[%s445] sm:$0xff]
        %v447 = vld [vmem:[%s445 + $0x8] sm:$0xff]
        %v448 = vld [vmem:[%s445 + $0x10] sm:$0xff]
        %v449 = vld [vmem:[%s445 + $0x18] sm:$0xff]
        %v450 = vld [vmem:[%s445 + $0x20] sm:$0xff]
        %v451 = vld [vmem:[%s445 + $0x28] sm:$0xff]
        %v452 = vld [vmem:[%s445 + $0x30] sm:$0xff]
        %v453 = vld [vmem:[%s445 + $0x38] sm:$0xff]
        %v454 = vld [vmem:[%s445 + $0x40] sm:$0xff]
        %v455 = vld [vmem:[%s445 + $0x48] sm:$0xff]
        %v456 = vld [vmem:[%s445 + $0x50] sm:$0xff]
        %v457 = vld [vmem:[%s445 + $0x58] sm:$0xff]
        %v458 = vld [vmem:[%s445 + $0x60] sm:$0xff]
        %v459 = vld [vmem:[%s445 + $0x68] sm:$0xff]
        %v460 = vld [vmem:[%s445 + $0x70] sm:$0xff]
        %v461 = vld [vmem:[%s445 + $0x78] sm:$0xff]
        %v462 = vld [vmem:[%s445 + $0x80] sm:$0xff]
        %v463 = vld [vmem:[%s445 + $0x88] sm:$0xff]
        %v464 = vld [vmem:[%s445 + $0x90] sm:$0xff]
        %v465 = vld [vmem:[%s445 + $0x98] sm:$0xff]
        %v466 = vld [vmem:[%s445 + $0xa0] sm:$0xff]
        %v467 = vld [vmem:[%s445 + $0xa8] sm:$0xff]
        %v468 = vld [vmem:[%s445 + $0xb0] sm:$0xff]
        %v469 = vld [vmem:[%s445 + $0xb8] sm:$0xff]
        %v470 = vld [vmem:[%s445 + $0xc0] sm:$0xff]
        %v471 = vld [vmem:[%s445 + $0xc8] sm:$0xff]
        %v472 = vld [vmem:[%s445 + $0xd0] sm:$0xff]
        %v473 = vld [vmem:[%s445 + $0xd8] sm:$0xff]
        %v474 = vld [vmem:[%s445 + $0xe0] sm:$0xff]
        %v475 = vld [vmem:[%s445 + $0xe8] sm:$0xff]
        %v476 = vld [vmem:[%s445 + $0xf0] sm:$0xff]
        %v477 = vld [vmem:[%s445 + $0xf8] sm:$0xff]
        %v478 = vld [vmem:[%s445 + $0x100] sm:$0xff]
        %v479 = vld [vmem:[%s445 + $0x108] sm:$0xff]
        %v480 = vld [vmem:[%s445 + $0x110] sm:$0xff]
        %v481 = vld [vmem:[%s445 + $0x118] sm:$0xff]
        %v482 = vld [vmem:[%s445 + $0x120] sm:$0xff]
        %v483 = vld [vmem:[%s445 + $0x128] sm:$0xff]
        %v484 = vld [vmem:[%s445 + $0x130] sm:$0xff]
        %v485 = vld [vmem:[%s445 + $0x138] sm:$0xff]
        %v486 = vld [vmem:[%s445 + $0x140] sm:$0xff]
        %v487 = vld [vmem:[%s445 + $0x148] sm:$0xff]
        %v488 = vld [vmem:[%s445 + $0x150] sm:$0xff]
        %v489 = vld [vmem:[%s445 + $0x158] sm:$0xff]
        %v490 = vld [vmem:[%s445 + $0x160] sm:$0xff]
        %v491 = vld [vmem:[%s445 + $0x168] sm:$0xff]
        %v492 = vld [vmem:[%s445 + $0x170] sm:$0xff]
        %v493 = vld [vmem:[%s445 + $0x178] sm:$0xff]
        %v494 = vld [vmem:[%s445 + $0x180] sm:$0xff]
        %v495 = vld [vmem:[%s445 + $0x188] sm:$0xff]
        %v496 = vld [vmem:[%s445 + $0x190] sm:$0xff]
        %v497 = vld [vmem:[%s445 + $0x198] sm:$0xff]
        %v498 = vld [vmem:[%s445 + $0x1a0] sm:$0xff]
        %v499 = vld [vmem:[%s445 + $0x1a8] sm:$0xff]
        %v500 = vld [vmem:[%s445 + $0x1b0] sm:$0xff]
        %v501 = vld [vmem:[%s445 + $0x1b8] sm:$0xff]
        %v502 = vld [vmem:[%s445 + $0x1c0] sm:$0xff]
        %v503 = vld [vmem:[%s445 + $0x1c8] sm:$0xff]
        %v504 = vld [vmem:[%s445 + $0x1d0] sm:$0xff]
        %v505 = vld [vmem:[%s445 + $0x1d8] sm:$0xff]
        %v506 = vld [vmem:[%s445 + $0x1e0] sm:$0xff]
        %v507 = vld [vmem:[%s445 + $0x1e8] sm:$0xff]
        %v508 = vld [vmem:[%s445 + $0x1f0] sm:$0xff]
        %v509 = vld [vmem:[%s445 + $0x1f8] sm:$0xff]
        %s510 = smul.u32 %s435, 8
        %s511 = smul.addr %s510, 4
        %s512 = scalar_lea.vmem %s367, %s511 [#allocation3]
        %v513 = vld [vmem:[%s512] sm:$0xff]
        %v514 = vld [vmem:[%s512 + $0x8] sm:$0xff]
        %v515 = vld [vmem:[%s512 + $0x10] sm:$0xff]
        %v516 = vld [vmem:[%s512 + $0x18] sm:$0xff]
        %v517 = vld [vmem:[#allocation8] sm:$0xf]
        %v518 = vld [vmem:[#allocation8 + $0x4] sm:$0xf]
        %v519 = vld [vmem:[#allocation8 + $0x8] sm:$0xf]
        %v520 = vld [vmem:[#allocation8 + $0xc] sm:$0xf]
        %v521 = vld [vmem:[#allocation8 + $0x10] sm:$0xf]
        %v522 = vld [vmem:[#allocation8 + $0x14] sm:$0xf]
        %v523 = vld [vmem:[#allocation8 + $0x18] sm:$0xf]
        %v524 = vld [vmem:[#allocation8 + $0x1c] sm:$0xf]
        %v525 = vld [vmem:[#allocation8 + $0x20] sm:$0xf]
        %v526 = vld [vmem:[#allocation8 + $0x24] sm:$0xf]
        %v527 = vld [vmem:[#allocation8 + $0x28] sm:$0xf]
        %v528 = vld [vmem:[#allocation8 + $0x2c] sm:$0xf]
        %v529 = vld [vmem:[#allocation8 + $0x30] sm:$0xf]
        %v530 = vld [vmem:[#allocation8 + $0x34] sm:$0xf]
        %v531 = vld [vmem:[#allocation8 + $0x38] sm:$0xf]
        %v532 = vld [vmem:[#allocation8 + $0x3c] sm:$0xf]
        %v533 = vld [vmem:[#allocation8 + $0x40] sm:$0xf]
        %v534 = vld [vmem:[#allocation8 + $0x44] sm:$0xf]
        %v535 = vld [vmem:[#allocation8 + $0x48] sm:$0xf]
        %v536 = vld [vmem:[#allocation8 + $0x4c] sm:$0xf]
        %v537 = vld [vmem:[#allocation8 + $0x50] sm:$0xf]
        %v538 = vld [vmem:[#allocation8 + $0x54] sm:$0xf]
        %v539 = vld [vmem:[#allocation8 + $0x58] sm:$0xf]
        %v540 = vld [vmem:[#allocation8 + $0x5c] sm:$0xf]
        %v541 = vld [vmem:[#allocation8 + $0x60] sm:$0xf]
        %v542 = vld [vmem:[#allocation8 + $0x64] sm:$0xf]
        %v543 = vld [vmem:[#allocation8 + $0x68] sm:$0xf]
        %v544 = vld [vmem:[#allocation8 + $0x6c] sm:$0xf]
        %v545 = vld [vmem:[#allocation8 + $0x70] sm:$0xf]
        %v546 = vld [vmem:[#allocation8 + $0x74] sm:$0xf]
        %v547 = vld [vmem:[#allocation8 + $0x78] sm:$0xf]
        %v548 = vld [vmem:[#allocation8 + $0x7c] sm:$0xf]
        %v549 = vld [vmem:[#allocation8 + $0x80] sm:$0xf]
        %v550 = vld [vmem:[#allocation8 + $0x84] sm:$0xf]
        %v551 = vld [vmem:[#allocation8 + $0x88] sm:$0xf]
        %v552 = vld [vmem:[#allocation8 + $0x8c] sm:$0xf]
        %v553 = vld [vmem:[#allocation8 + $0x90] sm:$0xf]
        %v554 = vld [vmem:[#allocation8 + $0x94] sm:$0xf]
        %v555 = vld [vmem:[#allocation8 + $0x98] sm:$0xf]
        %v556 = vld [vmem:[#allocation8 + $0x9c] sm:$0xf]
        %v557 = vld [vmem:[#allocation8 + $0xa0] sm:$0xf]
        %v558 = vld [vmem:[#allocation8 + $0xa4] sm:$0xf]
        %v559 = vld [vmem:[#allocation8 + $0xa8] sm:$0xf]
        %v560 = vld [vmem:[#allocation8 + $0xac] sm:$0xf]
        %v561 = vld [vmem:[#allocation8 + $0xb0] sm:$0xf]
        %v562 = vld [vmem:[#allocation8 + $0xb4] sm:$0xf]
        %v563 = vld [vmem:[#allocation8 + $0xb8] sm:$0xf]
        %v564 = vld [vmem:[#allocation8 + $0xbc] sm:$0xf]
        %v565 = vld [vmem:[#allocation8 + $0xc0] sm:$0xf]
        %v566 = vld [vmem:[#allocation8 + $0xc4] sm:$0xf]
        %v567 = vld [vmem:[#allocation8 + $0xc8] sm:$0xf]
        %v568 = vld [vmem:[#allocation8 + $0xcc] sm:$0xf]
        %v569 = vld [vmem:[#allocation8 + $0xd0] sm:$0xf]
        %v570 = vld [vmem:[#allocation8 + $0xd4] sm:$0xf]
        %v571 = vld [vmem:[#allocation8 + $0xd8] sm:$0xf]
        %v572 = vld [vmem:[#allocation8 + $0xdc] sm:$0xf]
        %v573 = vld [vmem:[#allocation8 + $0xe0] sm:$0xf]
        %v574 = vld [vmem:[#allocation8 + $0xe4] sm:$0xf]
        %v575 = vld [vmem:[#allocation8 + $0xe8] sm:$0xf]
        %v576 = vld [vmem:[#allocation8 + $0xec] sm:$0xf]
        %v577 = vld [vmem:[#allocation8 + $0xf0] sm:$0xf]
        %v578 = vld [vmem:[#allocation8 + $0xf4] sm:$0xf]
        %v579 = vld [vmem:[#allocation8 + $0xf8] sm:$0xf]
        %v580 = vld [vmem:[#allocation8 + $0xfc] sm:$0xf]
        %v581 = vld [vmem:[%s3] sm:$0x1]
        %v583 = vlaneseq
        %v584 = vshrl.u32 %v583, 7
        %v585 = vsub.s32 0, %v584
        %v586 = vrot.slane %v581, %v585
        %v660 = vunpack.c.l.b16 %v439
        %v661 = vunpack.c.h.b16 %v439
        %v662 = vunpack.c.l.b16 %v440
        %v663 = vunpack.c.h.b16 %v440
        %v664 = vunpack.c.l.b16 %v441
        %v665 = vunpack.c.h.b16 %v441
        %v666 = vunpack.c.l.b16 %v442
        %v667 = vunpack.c.h.b16 %v442
        %v668 = vunpack.c.l.b16 %v446
        %v669 = vunpack.c.h.b16 %v446
        %v670 = vunpack.c.l.b16 %v447
        %v671 = vunpack.c.h.b16 %v447
        %v672 = vunpack.c.l.b16 %v448
        %v673 = vunpack.c.h.b16 %v448
        %v674 = vunpack.c.l.b16 %v449
        %v675 = vunpack.c.h.b16 %v449
        %v676 = vunpack.c.l.b16 %v450
        %v677 = vunpack.c.h.b16 %v450
        %v678 = vunpack.c.l.b16 %v451
        %v679 = vunpack.c.h.b16 %v451
        %v680 = vunpack.c.l.b16 %v452
        %v681 = vunpack.c.h.b16 %v452
        %v682 = vunpack.c.l.b16 %v453
        %v683 = vunpack.c.h.b16 %v453
        %v684 = vunpack.c.l.b16 %v454
        %v685 = vunpack.c.h.b16 %v454
        %v686 = vunpack.c.l.b16 %v455
        %v687 = vunpack.c.h.b16 %v455
        %v688 = vunpack.c.l.b16 %v456
        %v689 = vunpack.c.h.b16 %v456
        %v690 = vunpack.c.l.b16 %v457
        %v691 = vunpack.c.h.b16 %v457
        %v692 = vunpack.c.l.b16 %v458
        %v693 = vunpack.c.h.b16 %v458
        %v694 = vunpack.c.l.b16 %v459
        %v695 = vunpack.c.h.b16 %v459
        %v696 = vunpack.c.l.b16 %v460
        %v697 = vunpack.c.h.b16 %v460
        %v698 = vunpack.c.l.b16 %v461
        %v699 = vunpack.c.h.b16 %v461
        %v700 = vunpack.c.l.b16 %v462
        %v701 = vunpack.c.h.b16 %v462
        %v702 = vunpack.c.l.b16 %v463
        %v703 = vunpack.c.h.b16 %v463
        %v704 = vunpack.c.l.b16 %v464
        %v705 = vunpack.c.h.b16 %v464
        %v706 = vunpack.c.l.b16 %v465
        %v707 = vunpack.c.h.b16 %v465
        %v708 = vunpack.c.l.b16 %v466
        %v709 = vunpack.c.h.b16 %v466
        %v710 = vunpack.c.l.b16 %v467
        %v711 = vunpack.c.h.b16 %v467
        %v712 = vunpack.c.l.b16 %v468
        %v713 = vunpack.c.h.b16 %v468
        %v714 = vunpack.c.l.b16 %v469
        %v715 = vunpack.c.h.b16 %v469
        %v716 = vunpack.c.l.b16 %v470
        %v717 = vunpack.c.h.b16 %v470
        %v718 = vunpack.c.l.b16 %v471
        %v719 = vunpack.c.h.b16 %v471
        %v720 = vunpack.c.l.b16 %v472
        %v721 = vunpack.c.h.b16 %v472
        %v722 = vunpack.c.l.b16 %v473
        %v723 = vunpack.c.h.b16 %v473
        %v724 = vunpack.c.l.b16 %v474
        %v725 = vunpack.c.h.b16 %v474
        %v726 = vunpack.c.l.b16 %v475
        %v727 = vunpack.c.h.b16 %v475
        %v728 = vunpack.c.l.b16 %v476
        %v729 = vunpack.c.h.b16 %v476
        %v730 = vunpack.c.l.b16 %v477
        %v731 = vunpack.c.h.b16 %v477
        %v732 = vunpack.c.l.b16 %v478
        %v733 = vunpack.c.h.b16 %v478
        %v734 = vunpack.c.l.b16 %v479
        %v735 = vunpack.c.h.b16 %v479
        %v736 = vunpack.c.l.b16 %v480
        %v737 = vunpack.c.h.b16 %v480
        %v738 = vunpack.c.l.b16 %v481
        %v739 = vunpack.c.h.b16 %v481
        %v740 = vunpack.c.l.b16 %v482
        %v741 = vunpack.c.h.b16 %v482
        %v742 = vunpack.c.l.b16 %v483
        %v743 = vunpack.c.h.b16 %v483
        %v744 = vunpack.c.l.b16 %v484
        %v745 = vunpack.c.h.b16 %v484
        %v746 = vunpack.c.l.b16 %v485
        %v747 = vunpack.c.h.b16 %v485
        %v748 = vunpack.c.l.b16 %v486
        %v749 = vunpack.c.h.b16 %v486
        %v750 = vunpack.c.l.b16 %v487
        %v751 = vunpack.c.h.b16 %v487
        %v752 = vunpack.c.l.b16 %v488
        %v753 = vunpack.c.h.b16 %v488
        %v754 = vunpack.c.l.b16 %v489
        %v755 = vunpack.c.h.b16 %v489
        %v756 = vunpack.c.l.b16 %v490
        %v757 = vunpack.c.h.b16 %v490
        %v758 = vunpack.c.l.b16 %v491
        %v759 = vunpack.c.h.b16 %v491
        %v760 = vunpack.c.l.b16 %v492
        %v761 = vunpack.c.h.b16 %v492
        %v762 = vunpack.c.l.b16 %v493
        %v763 = vunpack.c.h.b16 %v493
        %v764 = vunpack.c.l.b16 %v494
        %v765 = vunpack.c.h.b16 %v494
        %v766 = vunpack.c.l.b16 %v495
        %v767 = vunpack.c.h.b16 %v495
        %v768 = vunpack.c.l.b16 %v496
        %v769 = vunpack.c.h.b16 %v496
        %v770 = vunpack.c.l.b16 %v497
        %v771 = vunpack.c.h.b16 %v497
        %v772 = vunpack.c.l.b16 %v498
        %v773 = vunpack.c.h.b16 %v498
        %v774 = vunpack.c.l.b16 %v499
        %v775 = vunpack.c.h.b16 %v499
        %v776 = vunpack.c.l.b16 %v500
        %v777 = vunpack.c.h.b16 %v500
        %v778 = vunpack.c.l.b16 %v501
        %v779 = vunpack.c.h.b16 %v501
        %v780 = vunpack.c.l.b16 %v502
        %v781 = vunpack.c.h.b16 %v502
        %v782 = vunpack.c.l.b16 %v503
        %v783 = vunpack.c.h.b16 %v503
        %v784 = vunpack.c.l.b16 %v504
        %v785 = vunpack.c.h.b16 %v504
        %v786 = vunpack.c.l.b16 %v505
        %v787 = vunpack.c.h.b16 %v505
        %v788 = vunpack.c.l.b16 %v506
        %v789 = vunpack.c.h.b16 %v506
        %v790 = vunpack.c.l.b16 %v507
        %v791 = vunpack.c.h.b16 %v507
        %v792 = vunpack.c.l.b16 %v508
        %v793 = vunpack.c.h.b16 %v508
        %v794 = vunpack.c.l.b16 %v509
        %v795 = vunpack.c.h.b16 %v509
        %v796 = vunpack.c.l.b16 %v513
        %v797 = vunpack.c.h.b16 %v513
        %v798 = vunpack.c.l.b16 %v514
        %v799 = vunpack.c.h.b16 %v514
        %v800 = vunpack.c.l.b16 %v515
        %v801 = vunpack.c.h.b16 %v515
        %v802 = vunpack.c.l.b16 %v516
        %v803 = vunpack.c.h.b16 %v516
        %v804 = vpack.c.b16 %v664, %v660
        %v805 = vpack.c.b16 %v665, %v661
        %v806 = vpack.c.b16 %v666, %v662
        %v807 = vpack.c.b16 %v667, %v663
        %v808 = vpack.c.b16 %v672, %v668
        %v809 = vpack.c.b16 %v673, %v669
        %v810 = vpack.c.b16 %v674, %v670
        %v811 = vpack.c.b16 %v675, %v671
        %v812 = vpack.c.b16 %v680, %v676
        %v813 = vpack.c.b16 %v681, %v677
        %v814 = vpack.c.b16 %v682, %v678
        %v815 = vpack.c.b16 %v683, %v679
        %v816 = vpack.c.b16 %v688, %v684
        %v817 = vpack.c.b16 %v689, %v685
        %v818 = vpack.c.b16 %v690, %v686
        %v819 = vpack.c.b16 %v691, %v687
        %v820 = vpack.c.b16 %v696, %v692
        %v821 = vpack.c.b16 %v697, %v693
        %v822 = vpack.c.b16 %v698, %v694
        %v823 = vpack.c.b16 %v699, %v695
        %v824 = vpack.c.b16 %v704, %v700
        %v825 = vpack.c.b16 %v705, %v701
        %v826 = vpack.c.b16 %v706, %v702
        %v827 = vpack.c.b16 %v707, %v703
        %v828 = vpack.c.b16 %v712, %v708
        %v829 = vpack.c.b16 %v713, %v709
        %v830 = vpack.c.b16 %v714, %v710
        %v831 = vpack.c.b16 %v715, %v711
        %v832 = vpack.c.b16 %v720, %v716
        %v833 = vpack.c.b16 %v721, %v717
        %v834 = vpack.c.b16 %v722, %v718
        %v835 = vpack.c.b16 %v723, %v719
        %v836 = vpack.c.b16 %v728, %v724
        %v837 = vpack.c.b16 %v729, %v725
        %v838 = vpack.c.b16 %v730, %v726
        %v839 = vpack.c.b16 %v731, %v727
        %v840 = vpack.c.b16 %v736, %v732
        %v841 = vpack.c.b16 %v737, %v733
        %v842 = vpack.c.b16 %v738, %v734
        %v843 = vpack.c.b16 %v739, %v735
        %v844 = vpack.c.b16 %v744, %v740
        %v845 = vpack.c.b16 %v745, %v741
        %v846 = vpack.c.b16 %v746, %v742
        %v847 = vpack.c.b16 %v747, %v743
        %v848 = vpack.c.b16 %v752, %v748
        %v849 = vpack.c.b16 %v753, %v749
        %v850 = vpack.c.b16 %v754, %v750
        %v851 = vpack.c.b16 %v755, %v751
        %v852 = vpack.c.b16 %v760, %v756
        %v853 = vpack.c.b16 %v761, %v757
        %v854 = vpack.c.b16 %v762, %v758
        %v855 = vpack.c.b16 %v763, %v759
        %v856 = vpack.c.b16 %v768, %v764
        %v857 = vpack.c.b16 %v769, %v765
        %v858 = vpack.c.b16 %v770, %v766
        %v859 = vpack.c.b16 %v771, %v767
        %v860 = vpack.c.b16 %v776, %v772
        %v861 = vpack.c.b16 %v777, %v773
        %v862 = vpack.c.b16 %v778, %v774
        %v863 = vpack.c.b16 %v779, %v775
        %v864 = vpack.c.b16 %v784, %v780
        %v865 = vpack.c.b16 %v785, %v781
        %v866 = vpack.c.b16 %v786, %v782
        %v867 = vpack.c.b16 %v787, %v783
        %v868 = vpack.c.b16 %v792, %v788
        %v869 = vpack.c.b16 %v793, %v789
        %v870 = vpack.c.b16 %v794, %v790
        %v871 = vpack.c.b16 %v795, %v791
        %v872 = vpack.c.b16 %v800, %v796
        %v873 = vpack.c.b16 %v801, %v797
        %v874 = vpack.c.b16 %v802, %v798
        %v875 = vpack.c.b16 %v803, %v799
        %v1012 = vunpack.c.l.b16 %v517
        %v1013 = vunpack.c.l.b16 %v518
        %v1014 = vunpack.c.l.b16 %v519
        %v1015 = vunpack.c.l.b16 %v520
        %v1016 = vunpack.c.l.b16 %v521
        %v1017 = vunpack.c.l.b16 %v522
        %v1018 = vunpack.c.l.b16 %v523
        %v1019 = vunpack.c.l.b16 %v524
        %v1020 = vunpack.c.l.b16 %v525
        %v1021 = vunpack.c.l.b16 %v526
        %v1022 = vunpack.c.l.b16 %v527
        %v1023 = vunpack.c.l.b16 %v528
        %v1024 = vunpack.c.l.b16 %v529
        %v1025 = vunpack.c.l.b16 %v530
        %v1026 = vunpack.c.l.b16 %v531
        %v1027 = vunpack.c.l.b16 %v532
        %v1028 = vunpack.c.l.b16 %v533
        %v1029 = vunpack.c.l.b16 %v534
        %v1030 = vunpack.c.l.b16 %v535
        %v1031 = vunpack.c.l.b16 %v536
        %v1032 = vunpack.c.l.b16 %v537
        %v1033 = vunpack.c.l.b16 %v538
        %v1034 = vunpack.c.l.b16 %v539
        %v1035 = vunpack.c.l.b16 %v540
        %v1036 = vunpack.c.l.b16 %v541
        %v1037 = vunpack.c.l.b16 %v542
        %v1038 = vunpack.c.l.b16 %v543
        %v1039 = vunpack.c.l.b16 %v544
        %v1040 = vunpack.c.l.b16 %v545
        %v1041 = vunpack.c.l.b16 %v546
        %v1042 = vunpack.c.l.b16 %v547
        %v1043 = vunpack.c.l.b16 %v548
        %v1044 = vunpack.c.l.b16 %v549
        %v1045 = vunpack.c.l.b16 %v550
        %v1046 = vunpack.c.l.b16 %v551
        %v1047 = vunpack.c.l.b16 %v552
        %v1048 = vunpack.c.l.b16 %v553
        %v1049 = vunpack.c.l.b16 %v554
        %v1050 = vunpack.c.l.b16 %v555
        %v1051 = vunpack.c.l.b16 %v556
        %v1052 = vunpack.c.l.b16 %v557
        %v1053 = vunpack.c.l.b16 %v558
        %v1054 = vunpack.c.l.b16 %v559
        %v1055 = vunpack.c.l.b16 %v560
        %v1056 = vunpack.c.l.b16 %v561
        %v1057 = vunpack.c.l.b16 %v562
        %v1058 = vunpack.c.l.b16 %v563
        %v1059 = vunpack.c.l.b16 %v564
        %v1060 = vunpack.c.l.b16 %v565
        %v1061 = vunpack.c.l.b16 %v566
        %v1062 = vunpack.c.l.b16 %v567
        %v1063 = vunpack.c.l.b16 %v568
        %v1064 = vunpack.c.l.b16 %v569
        %v1065 = vunpack.c.l.b16 %v570
        %v1066 = vunpack.c.l.b16 %v571
        %v1067 = vunpack.c.l.b16 %v572
        %v1068 = vunpack.c.l.b16 %v573
        %v1069 = vunpack.c.l.b16 %v574
        %v1070 = vunpack.c.l.b16 %v575
        %v1071 = vunpack.c.l.b16 %v576
        %v1072 = vunpack.c.l.b16 %v577
        %v1073 = vunpack.c.l.b16 %v578
        %v1074 = vunpack.c.l.b16 %v579
        %v1075 = vunpack.c.l.b16 %v580
        %v1076 = vpack.c.b16 %v1013, %v1012
        %v1077 = vpack.c.b16 %v1015, %v1014
        %v1078 = vpack.c.b16 %v1017, %v1016
        %v1079 = vpack.c.b16 %v1019, %v1018
        %v1080 = vpack.c.b16 %v1021, %v1020
        %v1081 = vpack.c.b16 %v1023, %v1022
        %v1082 = vpack.c.b16 %v1025, %v1024
        %v1083 = vpack.c.b16 %v1027, %v1026
        %v1084 = vpack.c.b16 %v1029, %v1028
        %v1085 = vpack.c.b16 %v1031, %v1030
        %v1086 = vpack.c.b16 %v1033, %v1032
        %v1087 = vpack.c.b16 %v1035, %v1034
        %v1088 = vpack.c.b16 %v1037, %v1036
        %v1089 = vpack.c.b16 %v1039, %v1038
        %v1090 = vpack.c.b16 %v1041, %v1040
        %v1091 = vpack.c.b16 %v1043, %v1042
        %v1092 = vpack.c.b16 %v1045, %v1044
        %v1093 = vpack.c.b16 %v1047, %v1046
        %v1094 = vpack.c.b16 %v1049, %v1048
        %v1095 = vpack.c.b16 %v1051, %v1050
        %v1096 = vpack.c.b16 %v1053, %v1052
        %v1097 = vpack.c.b16 %v1055, %v1054
        %v1098 = vpack.c.b16 %v1057, %v1056
        %v1099 = vpack.c.b16 %v1059, %v1058
        %v1100 = vpack.c.b16 %v1061, %v1060
        %v1101 = vpack.c.b16 %v1063, %v1062
        %v1102 = vpack.c.b16 %v1065, %v1064
        %v1103 = vpack.c.b16 %v1067, %v1066
        %v1104 = vpack.c.b16 %v1069, %v1068
        %v1105 = vpack.c.b16 %v1071, %v1070
        %v1106 = vpack.c.b16 %v1073, %v1072
        %v1107 = vpack.c.b16 %v1075, %v1074
        %1140 = vmatprep.subr.bf16.mxu0 0
        %1141 = vmatpush1.bf16.msra.mxu0 %v1076
        %1142 = vmatprep.subr.bf16.mxu0 0
        %1143 = vmatpush1.bf16.msra.mxu0 %v1077
        %1144 = vmatprep.subr.bf16.mxu0 0
        %1145 = vmatpush1.bf16.msra.mxu0 %v1078
        %1146 = vmatprep.subr.bf16.mxu0 0
        %1147 = vmatpush1.bf16.msra.mxu0 %v1079
        %1148 = vmatprep.subr.bf16.mxu0 0
        %1149 = vmatpush1.bf16.msra.mxu0 %v1080
        %1150 = vmatprep.subr.bf16.mxu0 0
        %1151 = vmatpush1.bf16.msra.mxu0 %v1081
        %1152 = vmatprep.subr.bf16.mxu0 0
        %1153 = vmatpush1.bf16.msra.mxu0 %v1082
        %1154 = vmatprep.subr.bf16.mxu0 0
        %1155 = vmatpush1.bf16.msra.mxu0 %v1083
        %1156 = vmatprep.subr.bf16.mxu0 0
        %1157 = vmatpush1.bf16.msra.mxu0 %v1084
        %1158 = vmatprep.subr.bf16.mxu0 0
        %1159 = vmatpush1.bf16.msra.mxu0 %v1085
        %1160 = vmatprep.subr.bf16.mxu0 0
        %1161 = vmatpush1.bf16.msra.mxu0 %v1086
        %1162 = vmatprep.subr.bf16.mxu0 0
        %1163 = vmatpush1.bf16.msra.mxu0 %v1087
        %1164 = vmatprep.subr.bf16.mxu0 0
        %1165 = vmatpush1.bf16.msra.mxu0 %v1088
        %1166 = vmatprep.subr.bf16.mxu0 0
        %1167 = vmatpush1.bf16.msra.mxu0 %v1089
        %1168 = vmatprep.subr.bf16.mxu0 0
        %1169 = vmatpush1.bf16.msra.mxu0 %v1090
        %1170 = vmatprep.subr.bf16.mxu0 0
        %1171 = vmatpush1.bf16.msra.mxu0 %v1091
        %1172 = vmatprep.mubr.bf16.mxu0 %v805
        %1173 = vmatmul.mubr.bf16.gmra.mrb[0].mxu0 %v804
        %v1174 = vpop.f32.mrb[0].mxu0
        %v1175 = vadd.f32 %v586, %v1174
        %v1176 = vpop.f32.mrb[0].mxu0
        %v1177 = vpop.f32.mrb[0].mxu0
        %v1178 = vadd.f32 %v586, %v1177
        %v1179 = vpop.f32.mrb[0].mxu0
        %1180 = vmatprep.mubr.bf16.mxu0 %v809
        %1181 = vmatmul.mubr.bf16.gmra.mrb[0].mxu0 %v808
        %v1182 = vpop.f32.mrb[0].mxu0
        %v1183 = vadd.f32 %v586, %v1182
        %v1184 = vpop.f32.mrb[0].mxu0
        %v1185 = vpop.f32.mrb[0].mxu0
        %v1186 = vadd.f32 %v586, %v1185
        %v1187 = vpop.f32.mrb[0].mxu0
        %1188 = vmatprep.mubr.bf16.mxu0 %v813
        %1189 = vmatmul.mubr.bf16.gmra.mrb[0].mxu0 %v812
        %v1190 = vpop.f32.mrb[0].mxu0
        %v1191 = vadd.f32 %v586, %v1190
        %v1192 = vpop.f32.mrb[0].mxu0
        %v1193 = vpop.f32.mrb[0].mxu0
        %v1194 = vadd.f32 %v586, %v1193
        %v1195 = vpop.f32.mrb[0].mxu0
        %1196 = vmatprep.mubr.bf16.mxu0 %v817
        %1197 = vmatmul.mubr.bf16.gmra.mrb[0].mxu0 %v816
        %v1198 = vpop.f32.mrb[0].mxu0
        %v1199 = vadd.f32 %v586, %v1198
        %v1200 = vpop.f32.mrb[0].mxu0
        %v1201 = vpop.f32.mrb[0].mxu0
        %v1202 = vadd.f32 %v586, %v1201
        %v1203 = vpop.f32.mrb[0].mxu0
        %1204 = vmatprep.mubr.bf16.mxu0 %v821
        %1205 = vmatmul.mubr.bf16.gmra.mrb[0].mxu0 %v820
        %v1206 = vpop.f32.mrb[0].mxu0
        %v1207 = vadd.f32 %v586, %v1206
        %v1208 = vpop.f32.mrb[0].mxu0
        %v1209 = vpop.f32.mrb[0].mxu0
        %v1210 = vadd.f32 %v586, %v1209
        %v1211 = vpop.f32.mrb[0].mxu0
        %1212 = vmatprep.mubr.bf16.mxu0 %v825
        %1213 = vmatmul.mubr.bf16.gmra.mrb[0].mxu0 %v824
        %v1214 = vpop.f32.mrb[0].mxu0
        %v1215 = vadd.f32 %v586, %v1214
        %v1216 = vpop.f32.mrb[0].mxu0
        %v1217 = vpop.f32.mrb[0].mxu0
        %v1218 = vadd.f32 %v586, %v1217
        %v1219 = vpop.f32.mrb[0].mxu0
        %1220 = vmatprep.mubr.bf16.mxu0 %v829
        %1221 = vmatmul.mubr.bf16.gmra.mrb[0].mxu0 %v828
        %v1222 = vpop.f32.mrb[0].mxu0
        %v1223 = vadd.f32 %v586, %v1222
        %v1224 = vpop.f32.mrb[0].mxu0
        %v1225 = vpop.f32.mrb[0].mxu0
        %v1226 = vadd.f32 %v586, %v1225
        %v1227 = vpop.f32.mrb[0].mxu0
        %1228 = vmatprep.mubr.bf16.mxu0 %v833
        %1229 = vmatmul.mubr.bf16.gmra.mrb[0].mxu0 %v832
        %v1230 = vpop.f32.mrb[0].mxu0
        %v1231 = vadd.f32 %v586, %v1230
        %v1232 = vpop.f32.mrb[0].mxu0
        %v1233 = vpop.f32.mrb[0].mxu0
        %v1234 = vadd.f32 %v586, %v1233
        %v1235 = vpop.f32.mrb[0].mxu0
        %1236 = vmatprep.mubr.bf16.mxu0 %v837
        %1237 = vmatmul.mubr.bf16.gmra.mrb[0].mxu0 %v836
        %v1238 = vpop.f32.mrb[0].mxu0
        %v1239 = vadd.f32 %v586, %v1238
        %v1240 = vpop.f32.mrb[0].mxu0
        %v1241 = vpop.f32.mrb[0].mxu0
        %v1242 = vadd.f32 %v586, %v1241
        %v1243 = vpop.f32.mrb[0].mxu0
        %1244 = vmatprep.mubr.bf16.mxu0 %v841
        %1245 = vmatmul.mubr.bf16.gmra.mrb[0].mxu0 %v840
        %v1246 = vpop.f32.mrb[0].mxu0
        %v1247 = vadd.f32 %v586, %v1246
        %v1248 = vpop.f32.mrb[0].mxu0
        %v1249 = vpop.f32.mrb[0].mxu0
        %v1250 = vadd.f32 %v586, %v1249
        %v1251 = vpop.f32.mrb[0].mxu0
        %1252 = vmatprep.mubr.bf16.mxu0 %v845
        %1253 = vmatmul.mubr.bf16.gmra.mrb[0].mxu0 %v844
        %v1254 = vpop.f32.mrb[0].mxu0
        %v1255 = vadd.f32 %v586, %v1254
        %v1256 = vpop.f32.mrb[0].mxu0
        %v1257 = vpop.f32.mrb[0].mxu0
        %v1258 = vadd.f32 %v586, %v1257
        %v1259 = vpop.f32.mrb[0].mxu0
        %1260 = vmatprep.mubr.bf16.mxu0 %v849
        %1261 = vmatmul.mubr.bf16.gmra.mrb[0].mxu0 %v848
        %v1262 = vpop.f32.mrb[0].mxu0
        %v1263 = vadd.f32 %v586, %v1262
        %v1264 = vpop.f32.mrb[0].mxu0
        %v1265 = vpop.f32.mrb[0].mxu0
        %v1266 = vadd.f32 %v586, %v1265
        %v1267 = vpop.f32.mrb[0].mxu0
        %1268 = vmatprep.mubr.bf16.mxu0 %v853
        %1269 = vmatmul.mubr.bf16.gmra.mrb[0].mxu0 %v852
        %v1270 = vpop.f32.mrb[0].mxu0
        %v1271 = vadd.f32 %v586, %v1270
        %v1272 = vpop.f32.mrb[0].mxu0
        %v1273 = vpop.f32.mrb[0].mxu0
        %v1274 = vadd.f32 %v586, %v1273
        %v1275 = vpop.f32.mrb[0].mxu0
        %1276 = vmatprep.mubr.bf16.mxu0 %v857
        %1277 = vmatmul.mubr.bf16.gmra.mrb[0].mxu0 %v856
        %v1278 = vpop.f32.mrb[0].mxu0
        %v1279 = vadd.f32 %v586, %v1278
        %v1280 = vpop.f32.mrb[0].mxu0
        %v1281 = vpop.f32.mrb[0].mxu0
        %v1282 = vadd.f32 %v586, %v1281
        %v1283 = vpop.f32.mrb[0].mxu0
        %1284 = vmatprep.mubr.bf16.mxu0 %v861
        %1285 = vmatmul.mubr.bf16.gmra.mrb[0].mxu0 %v860
        %v1286 = vpop.f32.mrb[0].mxu0
        %v1287 = vadd.f32 %v586, %v1286
        %v1288 = vpop.f32.mrb[0].mxu0
        %v1289 = vpop.f32.mrb[0].mxu0
        %v1290 = vadd.f32 %v586, %v1289
        %v1291 = vpop.f32.mrb[0].mxu0
        %1292 = vmatprep.mubr.bf16.mxu0 %v865
        %1293 = vmatmul.mubr.bf16.gmra.mrb[0].mxu0 %v864
        %v1294 = vpop.f32.mrb[0].mxu0
        %v1295 = vadd.f32 %v586, %v1294
        %v1296 = vpop.f32.mrb[0].mxu0
        %v1297 = vpop.f32.mrb[0].mxu0
        %v1298 = vadd.f32 %v586, %v1297
        %v1299 = vpop.f32.mrb[0].mxu0
        %1300 = vmatprep.mubr.bf16.mxu0 %v869
        %1301 = vmatmul.mubr.bf16.gmra.mrb[0].mxu0 %v868
        %v1302 = vpop.f32.mrb[0].mxu0
        %v1303 = vadd.f32 %v586, %v1302
        %v1304 = vpop.f32.mrb[0].mxu0
        %v1305 = vpop.f32.mrb[0].mxu0
        %v1306 = vadd.f32 %v586, %v1305
        %v1307 = vpop.f32.mrb[0].mxu0
        %1308 = vmatprep.mubr.bf16.mxu0 %v873
        %1309 = vmatmul.mubr.bf16.gmra.mrb[0].mxu0 %v872
        %v1310 = vpop.f32.mrb[0].mxu0
        %v1311 = vadd.f32 %v586, %v1310
        %v1312 = vpop.f32.mrb[0].mxu0
        %v1313 = vpop.f32.mrb[0].mxu0
        %v1314 = vadd.f32 %v586, %v1313
        %v1315 = vpop.f32.mrb[0].mxu0
        %1316 = vdwg.mxu0
        %1317 = vmatprep.subr.bf16.mxu0 0
        %1318 = vmatpush1.bf16.msra.mxu0 %v1092
        %1319 = vmatprep.subr.bf16.mxu0 0
        %1320 = vmatpush1.bf16.msra.mxu0 %v1093
        %1321 = vmatprep.subr.bf16.mxu0 0
        %1322 = vmatpush1.bf16.msra.mxu0 %v1094
        %1323 = vmatprep.subr.bf16.mxu0 0
        %1324 = vmatpush1.bf16.msra.mxu0 %v1095
        %1325 = vmatprep.subr.bf16.mxu0 0
        %1326 = vmatpush1.bf16.msra.mxu0 %v1096
        %1327 = vmatprep.subr.bf16.mxu0 0
        %1328 = vmatpush1.bf16.msra.mxu0 %v1097
        %1329 = vmatprep.subr.bf16.mxu0 0
        %1330 = vmatpush1.bf16.msra.mxu0 %v1098
        %1331 = vmatprep.subr.bf16.mxu0 0
        %1332 = vmatpush1.bf16.msra.mxu0 %v1099
        %1333 = vmatprep.subr.bf16.mxu0 0
        %1334 = vmatpush1.bf16.msra.mxu0 %v1100
        %1335 = vmatprep.subr.bf16.mxu0 0
        %1336 = vmatpush1.bf16.msra.mxu0 %v1101
        %1337 = vmatprep.subr.bf16.mxu0 0
        %1338 = vmatpush1.bf16.msra.mxu0 %v1102
        %1339 = vmatprep.subr.bf16.mxu0 0
        %1340 = vmatpush1.bf16.msra.mxu0 %v1103
        %1341 = vmatprep.subr.bf16.mxu0 0
        %1342 = vmatpush1.bf16.msra.mxu0 %v1104
        %1343 = vmatprep.subr.bf16.mxu0 0
        %1344 = vmatpush1.bf16.msra.mxu0 %v1105
        %1345 = vmatprep.subr.bf16.mxu0 0
        %1346 = vmatpush1.bf16.msra.mxu0 %v1106
        %1347 = vmatprep.subr.bf16.mxu0 0
        %1348 = vmatpush1.bf16.msra.mxu0 %v1107
        %1349 = vmatprep.mubr.bf16.mxu0 %v807
        %1350 = vmatmul.mubr.bf16.gmra.mrb[0].mxu0 %v806
        %v1351 = vpop.f32.mrb[0].mxu0
        %v1352 = vadd.f32 %v1175, %v1351
        %v1353 = vpop.f32.mrb[0].mxu0
        %v1354 = vpop.f32.mrb[0].mxu0
        %v1355 = vadd.f32 %v1178, %v1354
        %v1356 = vpop.f32.mrb[0].mxu0
        %1357 = vmatprep.mubr.bf16.mxu0 %v811
        %1358 = vmatmul.mubr.bf16.gmra.mrb[0].mxu0 %v810
        %v1359 = vpop.f32.mrb[0].mxu0
        %v1360 = vadd.f32 %v1183, %v1359
        %v1361 = vpop.f32.mrb[0].mxu0
        %v1362 = vpop.f32.mrb[0].mxu0
        %v1363 = vadd.f32 %v1186, %v1362
        %v1364 = vpop.f32.mrb[0].mxu0
        %1365 = vmatprep.mubr.bf16.mxu0 %v815
        %1366 = vmatmul.mubr.bf16.gmra.mrb[0].mxu0 %v814
        %v1367 = vpop.f32.mrb[0].mxu0
        %v1368 = vadd.f32 %v1191, %v1367
        %v1369 = vpop.f32.mrb[0].mxu0
        %v1370 = vpop.f32.mrb[0].mxu0
        %v1371 = vadd.f32 %v1194, %v1370
        %v1372 = vpop.f32.mrb[0].mxu0
        %1373 = vmatprep.mubr.bf16.mxu0 %v819
        %1374 = vmatmul.mubr.bf16.gmra.mrb[0].mxu0 %v818
        %v1375 = vpop.f32.mrb[0].mxu0
        %v1376 = vadd.f32 %v1199, %v1375
        %v1377 = vpop.f32.mrb[0].mxu0
        %v1378 = vpop.f32.mrb[0].mxu0
        %v1379 = vadd.f32 %v1202, %v1378
        %v1380 = vpop.f32.mrb[0].mxu0
        %1381 = vmatprep.mubr.bf16.mxu0 %v823
        %1382 = vmatmul.mubr.bf16.gmra.mrb[0].mxu0 %v822
        %v1383 = vpop.f32.mrb[0].mxu0
        %v1384 = vadd.f32 %v1207, %v1383
        %v1385 = vpop.f32.mrb[0].mxu0
        %v1386 = vpop.f32.mrb[0].mxu0
        %v1387 = vadd.f32 %v1210, %v1386
        %v1388 = vpop.f32.mrb[0].mxu0
        %1389 = vmatprep.mubr.bf16.mxu0 %v827
        %1390 = vmatmul.mubr.bf16.gmra.mrb[0].mxu0 %v826
        %v1391 = vpop.f32.mrb[0].mxu0
        %v1392 = vadd.f32 %v1215, %v1391
        %v1393 = vpop.f32.mrb[0].mxu0
        %v1394 = vpop.f32.mrb[0].mxu0
        %v1395 = vadd.f32 %v1218, %v1394
        %v1396 = vpop.f32.mrb[0].mxu0
        %1397 = vmatprep.mubr.bf16.mxu0 %v831
        %1398 = vmatmul.mubr.bf16.gmra.mrb[0].mxu0 %v830
        %v1399 = vpop.f32.mrb[0].mxu0
        %v1400 = vadd.f32 %v1223, %v1399
        %v1401 = vpop.f32.mrb[0].mxu0
        %v1402 = vpop.f32.mrb[0].mxu0
        %v1403 = vadd.f32 %v1226, %v1402
        %v1404 = vpop.f32.mrb[0].mxu0
        %1405 = vmatprep.mubr.bf16.mxu0 %v835
        %1406 = vmatmul.mubr.bf16.gmra.mrb[0].mxu0 %v834
        %v1407 = vpop.f32.mrb[0].mxu0
        %v1408 = vadd.f32 %v1231, %v1407
        %v1409 = vpop.f32.mrb[0].mxu0
        %v1410 = vpop.f32.mrb[0].mxu0
        %v1411 = vadd.f32 %v1234, %v1410
        %v1412 = vpop.f32.mrb[0].mxu0
        %1413 = vmatprep.mubr.bf16.mxu0 %v839
        %1414 = vmatmul.mubr.bf16.gmra.mrb[0].mxu0 %v838
        %v1415 = vpop.f32.mrb[0].mxu0
        %v1416 = vadd.f32 %v1239, %v1415
        %v1417 = vpop.f32.mrb[0].mxu0
        %v1418 = vpop.f32.mrb[0].mxu0
        %v1419 = vadd.f32 %v1242, %v1418
        %v1420 = vpop.f32.mrb[0].mxu0
        %1421 = vmatprep.mubr.bf16.mxu0 %v843
        %1422 = vmatmul.mubr.bf16.gmra.mrb[0].mxu0 %v842
        %v1423 = vpop.f32.mrb[0].mxu0
        %v1424 = vadd.f32 %v1247, %v1423
        %v1425 = vpop.f32.mrb[0].mxu0
        %v1426 = vpop.f32.mrb[0].mxu0
        %v1427 = vadd.f32 %v1250, %v1426
        %v1428 = vpop.f32.mrb[0].mxu0
        %1429 = vmatprep.mubr.bf16.mxu0 %v847
        %1430 = vmatmul.mubr.bf16.gmra.mrb[0].mxu0 %v846
        %v1431 = vpop.f32.mrb[0].mxu0
        %v1432 = vadd.f32 %v1255, %v1431
        %v1433 = vpop.f32.mrb[0].mxu0
        %v1434 = vpop.f32.mrb[0].mxu0
        %v1435 = vadd.f32 %v1258, %v1434
        %v1436 = vpop.f32.mrb[0].mxu0
        %1437 = vmatprep.mubr.bf16.mxu0 %v851
        %1438 = vmatmul.mubr.bf16.gmra.mrb[0].mxu0 %v850
        %v1439 = vpop.f32.mrb[0].mxu0
        %v1440 = vadd.f32 %v1263, %v1439
        %v1441 = vpop.f32.mrb[0].mxu0
        %v1442 = vpop.f32.mrb[0].mxu0
        %v1443 = vadd.f32 %v1266, %v1442
        %v1444 = vpop.f32.mrb[0].mxu0
        %1445 = vmatprep.mubr.bf16.mxu0 %v855
        %1446 = vmatmul.mubr.bf16.gmra.mrb[0].mxu0 %v854
        %v1447 = vpop.f32.mrb[0].mxu0
        %v1448 = vadd.f32 %v1271, %v1447
        %v1449 = vpop.f32.mrb[0].mxu0
        %v1450 = vpop.f32.mrb[0].mxu0
        %v1451 = vadd.f32 %v1274, %v1450
        %v1452 = vpop.f32.mrb[0].mxu0
        %1453 = vmatprep.mubr.bf16.mxu0 %v859
        %1454 = vmatmul.mubr.bf16.gmra.mrb[0].mxu0 %v858
        %v1455 = vpop.f32.mrb[0].mxu0
        %v1456 = vadd.f32 %v1279, %v1455
        %v1457 = vpop.f32.mrb[0].mxu0
        %v1458 = vpop.f32.mrb[0].mxu0
        %v1459 = vadd.f32 %v1282, %v1458
        %v1460 = vpop.f32.mrb[0].mxu0
        %1461 = vmatprep.mubr.bf16.mxu0 %v863
        %1462 = vmatmul.mubr.bf16.gmra.mrb[0].mxu0 %v862
        %v1463 = vpop.f32.mrb[0].mxu0
        %v1464 = vadd.f32 %v1287, %v1463
        %v1465 = vpop.f32.mrb[0].mxu0
        %v1466 = vpop.f32.mrb[0].mxu0
        %v1467 = vadd.f32 %v1290, %v1466
        %v1468 = vpop.f32.mrb[0].mxu0
        %1469 = vmatprep.mubr.bf16.mxu0 %v867
        %1470 = vmatmul.mubr.bf16.gmra.mrb[0].mxu0 %v866
        %v1471 = vpop.f32.mrb[0].mxu0
        %v1472 = vadd.f32 %v1295, %v1471
        %v1473 = vpop.f32.mrb[0].mxu0
        %v1474 = vpop.f32.mrb[0].mxu0
        %v1475 = vadd.f32 %v1298, %v1474
        %v1476 = vpop.f32.mrb[0].mxu0
        %1477 = vmatprep.mubr.bf16.mxu0 %v871
        %1478 = vmatmul.mubr.bf16.gmra.mrb[0].mxu0 %v870
        %v1479 = vpop.f32.mrb[0].mxu0
        %v1480 = vadd.f32 %v1303, %v1479
        %v1481 = vpop.f32.mrb[0].mxu0
        %v1482 = vpop.f32.mrb[0].mxu0
        %v1483 = vadd.f32 %v1306, %v1482
        %v1484 = vpop.f32.mrb[0].mxu0
        %1485 = vmatprep.mubr.bf16.mxu0 %v875
        %1486 = vmatmul.mubr.bf16.gmra.mrb[0].mxu0 %v874
        %v1487 = vpop.f32.mrb[0].mxu0
        %v1488 = vadd.f32 %v1311, %v1487
        %v1489 = vpop.f32.mrb[0].mxu0
        %v1490 = vpop.f32.mrb[0].mxu0
        %v1491 = vadd.f32 %v1314, %v1490
        %v1492 = vpop.f32.mrb[0].mxu0
        %1493 = vdwg.mxu0
        %v1494 = vmax.f32 %v1352, 0.0
        %v1495 = vmax.f32 %v1355, 0.0
        %v1496 = vmax.f32 %v1360, 0.0
        %v1497 = vmax.f32 %v1363, 0.0
        %v1498 = vmax.f32 %v1368, 0.0
        %v1499 = vmax.f32 %v1371, 0.0
        %v1500 = vmax.f32 %v1376, 0.0
        %v1501 = vmax.f32 %v1379, 0.0
        %v1502 = vmax.f32 %v1384, 0.0
        %v1503 = vmax.f32 %v1387, 0.0
        %v1504 = vmax.f32 %v1392, 0.0
        %v1505 = vmax.f32 %v1395, 0.0
        %v1506 = vmax.f32 %v1400, 0.0
        %v1507 = vmax.f32 %v1403, 0.0
        %v1508 = vmax.f32 %v1408, 0.0
        %v1509 = vmax.f32 %v1411, 0.0
        %v1510 = vmax.f32 %v1416, 0.0
        %v1511 = vmax.f32 %v1419, 0.0
        %v1512 = vmax.f32 %v1424, 0.0
        %v1513 = vmax.f32 %v1427, 0.0
        %v1514 = vmax.f32 %v1432, 0.0
        %v1515 = vmax.f32 %v1435, 0.0
        %v1516 = vmax.f32 %v1440, 0.0
        %v1517 = vmax.f32 %v1443, 0.0
        %v1518 = vmax.f32 %v1448, 0.0
        %v1519 = vmax.f32 %v1451, 0.0
        %v1520 = vmax.f32 %v1456, 0.0
        %v1521 = vmax.f32 %v1459, 0.0
        %v1522 = vmax.f32 %v1464, 0.0
        %v1523 = vmax.f32 %v1467, 0.0
        %v1524 = vmax.f32 %v1472, 0.0
        %v1525 = vmax.f32 %v1475, 0.0
        %v1526 = vmax.f32 %v1480, 0.0
        %v1527 = vmax.f32 %v1483, 0.0
        %v1528 = vmax.f32 %v1488, 0.0
        %v1529 = vmax.f32 %v1491, 0.0
        %v1530 = vstv %s430
        %v1531 = vadd.s32 %v1530, 1
        %v1532 = vadd.s32 %v1530, 2
        %v1533 = vadd.s32 %v1530, 3
        %v1534 = vadd.s32 %v1530, 4
        %v1535 = vadd.s32 %v1530, 5
        %v1536 = vadd.s32 %v1530, 6
        %v1537 = vadd.s32 %v1530, 7
        %v1538 = vadd.s32 %v1530, 8
        %v1539 = vadd.s32 %v1530, 9
        %v1540 = vadd.s32 %v1530, 10
        %v1541 = vadd.s32 %v1530, 11
        %v1542 = vadd.s32 %v1530, 12
        %v1543 = vadd.s32 %v1530, 13
        %v1544 = vadd.s32 %v1530, 14
        %v1545 = vadd.s32 %v1530, 15
        %v1546 = vadd.s32 %v1530, 16
        %v1547 = vadd.s32 %v1530, 17
        %vm1548 = vcmp.ge.s32.totalorder %v1530, 0
        %vm1549 = vcmp.ge.s32.totalorder %v1531, 0
        %vm1550 = vcmp.ge.s32.totalorder %v1532, 0
        %vm1551 = vcmp.ge.s32.totalorder %v1533, 0
        %vm1552 = vcmp.ge.s32.totalorder %v1534, 0
        %vm1553 = vcmp.ge.s32.totalorder %v1535, 0
        %vm1554 = vcmp.ge.s32.totalorder %v1536, 0
        %vm1555 = vcmp.ge.s32.totalorder %v1537, 0
        %vm1556 = vcmp.ge.s32.totalorder %v1538, 0
        %vm1557 = vcmp.ge.s32.totalorder %v1539, 0
        %vm1558 = vcmp.ge.s32.totalorder %v1540, 0
        %vm1559 = vcmp.ge.s32.totalorder %v1541, 0
        %vm1560 = vcmp.ge.s32.totalorder %v1542, 0
        %vm1561 = vcmp.ge.s32.totalorder %v1543, 0
        %vm1562 = vcmp.ge.s32.totalorder %v1544, 0
        %vm1563 = vcmp.ge.s32.totalorder %v1545, 0
        %vm1564 = vcmp.ge.s32.totalorder %v1546, 0
        %vm1565 = vcmp.ge.s32.totalorder %v1547, 0
        %vm1566 = vcmp.lt.s32.totalorder %v1530, 16
        %vm1567 = vcmp.lt.s32.totalorder %v1531, 16
        %vm1568 = vcmp.lt.s32.totalorder %v1532, 16
        %vm1569 = vcmp.lt.s32.totalorder %v1533, 16
        %vm1570 = vcmp.lt.s32.totalorder %v1534, 16
        %vm1571 = vcmp.lt.s32.totalorder %v1535, 16
        %vm1572 = vcmp.lt.s32.totalorder %v1536, 16
        %vm1573 = vcmp.lt.s32.totalorder %v1537, 16
        %vm1574 = vcmp.lt.s32.totalorder %v1538, 16
        %vm1575 = vcmp.lt.s32.totalorder %v1539, 16
        %vm1576 = vcmp.lt.s32.totalorder %v1540, 16
        %vm1577 = vcmp.lt.s32.totalorder %v1541, 16
        %vm1578 = vcmp.lt.s32.totalorder %v1542, 16
        %vm1579 = vcmp.lt.s32.totalorder %v1543, 16
        %vm1580 = vcmp.lt.s32.totalorder %v1544, 16
        %vm1581 = vcmp.lt.s32.totalorder %v1545, 16
        %vm1582 = vcmp.lt.s32.totalorder %v1546, 16
        %vm1583 = vcmp.lt.s32.totalorder %v1547, 16
        %vm1584 = vmand %vm1548, %vm1566
        %vm1585 = vmand %vm1549, %vm1567
        %vm1586 = vmand %vm1550, %vm1568
        %vm1587 = vmand %vm1551, %vm1569
        %vm1588 = vmand %vm1552, %vm1570
        %vm1589 = vmand %vm1553, %vm1571
        %vm1590 = vmand %vm1554, %vm1572
        %vm1591 = vmand %vm1555, %vm1573
        %vm1592 = vmand %vm1556, %vm1574
        %vm1593 = vmand %vm1557, %vm1575
        %vm1594 = vmand %vm1558, %vm1576
        %vm1595 = vmand %vm1559, %vm1577
        %vm1596 = vmand %vm1560, %vm1578
        %vm1597 = vmand %vm1561, %vm1579
        %vm1598 = vmand %vm1562, %vm1580
        %vm1599 = vmand %vm1563, %vm1581
        %vm1600 = vmand %vm1564, %vm1582
        %vm1601 = vmand %vm1565, %vm1583
        %v1602 = vsel %vm1584, %v1494, 0.0
        %v1603 = vsel %vm1584, %v1495, 0.0
        %v1604 = vsel %vm1585, %v1496, 0.0
        %v1605 = vsel %vm1585, %v1497, 0.0
        %v1606 = vsel %vm1586, %v1498, 0.0
        %v1607 = vsel %vm1586, %v1499, 0.0
        %v1608 = vsel %vm1587, %v1500, 0.0
        %v1609 = vsel %vm1587, %v1501, 0.0
        %v1610 = vsel %vm1588, %v1502, 0.0
        %v1611 = vsel %vm1588, %v1503, 0.0
        %v1612 = vsel %vm1589, %v1504, 0.0
        %v1613 = vsel %vm1589, %v1505, 0.0
        %v1614 = vsel %vm1590, %v1506, 0.0
        %v1615 = vsel %vm1590, %v1507, 0.0
        %v1616 = vsel %vm1591, %v1508, 0.0
        %v1617 = vsel %vm1591, %v1509, 0.0
        %v1618 = vsel %vm1592, %v1510, 0.0
        %v1619 = vsel %vm1592, %v1511, 0.0
        %v1620 = vsel %vm1593, %v1512, 0.0
        %v1621 = vsel %vm1593, %v1513, 0.0
        %v1622 = vsel %vm1594, %v1514, 0.0
        %v1623 = vsel %vm1594, %v1515, 0.0
        %v1624 = vsel %vm1595, %v1516, 0.0
        %v1625 = vsel %vm1595, %v1517, 0.0
        %v1626 = vsel %vm1596, %v1518, 0.0
        %v1627 = vsel %vm1596, %v1519, 0.0
        %v1628 = vsel %vm1597, %v1520, 0.0
        %v1629 = vsel %vm1597, %v1521, 0.0
        %v1630 = vsel %vm1598, %v1522, 0.0
        %v1631 = vsel %vm1598, %v1523, 0.0
        %v1632 = vsel %vm1599, %v1524, 0.0
        %v1633 = vsel %vm1599, %v1525, 0.0
        %v1634 = vsel %vm1600, %v1526, 0.0
        %v1635 = vsel %vm1600, %v1527, 0.0
        %v1636 = vsel %vm1601, %v1528, 0.0
        %v1637 = vsel %vm1601, %v1529, 0.0
        %v1638 = vlaneseq
        %v1639 = vshrl.u32 %v1638, 7
        %v1640 = vadd.s32 %v1639, 8
        %vm1641 = vcmp.gt.s32.totalorder %v1639, 0
        %vm1642 = vcmp.gt.s32.totalorder %v1640, 0
        %v1643 = vrot.slane %v1602, 7
        %v1644 = vrot.slane %v1604, 7
        %v1645 = vrot.slane %v1606, 7
        %v1646 = vrot.slane %v1608, 7
        %v1647 = vrot.slane %v1610, 7
        %v1648 = vrot.slane %v1612, 7
        %v1649 = vrot.slane %v1614, 7
        %v1650 = vrot.slane %v1616, 7
        %v1651 = vrot.slane %v1618, 7
        %v1652 = vrot.slane %v1620, 7
        %v1653 = vrot.slane %v1622, 7
        %v1654 = vrot.slane %v1624, 7
        %v1655 = vrot.slane %v1626, 7
        %v1656 = vrot.slane %v1628, 7
        %v1657 = vrot.slane %v1630, 7
        %v1658 = vrot.slane %v1632, 7
        %v1659 = vrot.slane %v1634, 7
        %v1660 = vrot.slane %v1636, 7
        %v1661 = vrot.slane %v1603, 7
        %v1662 = vrot.slane %v1605, 7
        %v1663 = vrot.slane %v1607, 7
        %v1664 = vrot.slane %v1609, 7
        %v1665 = vrot.slane %v1611, 7
        %v1666 = vrot.slane %v1613, 7
        %v1667 = vrot.slane %v1615, 7
        %v1668 = vrot.slane %v1617, 7
        %v1669 = vrot.slane %v1619, 7
        %v1670 = vrot.slane %v1621, 7
        %v1671 = vrot.slane %v1623, 7
        %v1672 = vrot.slane %v1625, 7
        %v1673 = vrot.slane %v1627, 7
        %v1674 = vrot.slane %v1629, 7
        %v1675 = vrot.slane %v1631, 7
        %v1676 = vrot.slane %v1633, 7
        %v1677 = vrot.slane %v1635, 7
        %v1678 = vrot.slane %v1637, 7
        %vm1679 = vcmp.lt.s32.totalorder %v1639, 1
        %v1680 = vsel %vm1679, %v1643, %v1661
        %v1681 = vsel %vm1679, %v1644, %v1662
        %v1682 = vsel %vm1679, %v1645, %v1663
        %v1683 = vsel %vm1679, %v1646, %v1664
        %v1684 = vsel %vm1679, %v1647, %v1665
        %v1685 = vsel %vm1679, %v1648, %v1666
        %v1686 = vsel %vm1679, %v1649, %v1667
        %v1687 = vsel %vm1679, %v1650, %v1668
        %v1688 = vsel %vm1679, %v1651, %v1669
        %v1689 = vsel %vm1679, %v1652, %v1670
        %v1690 = vsel %vm1679, %v1653, %v1671
        %v1691 = vsel %vm1679, %v1654, %v1672
        %v1692 = vsel %vm1679, %v1655, %v1673
        %v1693 = vsel %vm1679, %v1656, %v1674
        %v1694 = vsel %vm1679, %v1657, %v1675
        %v1695 = vsel %vm1679, %v1658, %v1676
        %v1696 = vsel %vm1679, %v1659, %v1677
        %v1697 = vsel %vm1679, %v1660, %v1678
        %v1698 = vsel %vm1679, %v1661, %v1643
        %v1699 = vsel %vm1679, %v1662, %v1644
        %v1700 = vsel %vm1679, %v1663, %v1645
        %v1701 = vsel %vm1679, %v1664, %v1646
        %v1702 = vsel %vm1679, %v1665, %v1647
        %v1703 = vsel %vm1679, %v1666, %v1648
        %v1704 = vsel %vm1679, %v1667, %v1649
        %v1705 = vsel %vm1679, %v1668, %v1650
        %v1706 = vsel %vm1679, %v1669, %v1651
        %v1707 = vsel %vm1679, %v1670, %v1652
        %v1708 = vsel %vm1679, %v1671, %v1653
        %v1709 = vsel %vm1679, %v1672, %v1654
        %v1710 = vsel %vm1679, %v1673, %v1655
        %v1711 = vsel %vm1679, %v1674, %v1656
        %v1712 = vsel %vm1679, %v1675, %v1657
        %v1713 = vsel %vm1679, %v1676, %v1658
        %v1714 = vsel %vm1679, %v1677, %v1659
        %v1715 = vsel %vm1679, %v1678, %v1660
        %v1716 = vsel %vm1641, 1, 0
        %v1717 = vsel %vm1642, 1, 0
        %vm1718 = vcmp.eq.s32.totalorder %v1716, 1
        %vm1719 = vcmp.eq.s32.totalorder %v1717, 1
        %v1720 = vsel %vm1718, %v1698, 0.0
        %v1721 = vsel %vm1719, %v1680, 0.0
        %v1722 = vsel %vm1718, %v1699, 0.0
        %v1723 = vsel %vm1719, %v1681, 0.0
        %v1724 = vsel %vm1718, %v1700, 0.0
        %v1725 = vsel %vm1719, %v1682, 0.0
        %v1726 = vsel %vm1718, %v1701, 0.0
        %v1727 = vsel %vm1719, %v1683, 0.0
        %v1728 = vsel %vm1718, %v1702, 0.0
        %v1729 = vsel %vm1719, %v1684, 0.0
        %v1730 = vsel %vm1718, %v1703, 0.0
        %v1731 = vsel %vm1719, %v1685, 0.0
        %v1732 = vsel %vm1718, %v1704, 0.0
        %v1733 = vsel %vm1719, %v1686, 0.0
        %v1734 = vsel %vm1718, %v1705, 0.0
        %v1735 = vsel %vm1719, %v1687, 0.0
        %v1736 = vsel %vm1718, %v1706, 0.0
        %v1737 = vsel %vm1719, %v1688, 0.0
        %v1738 = vsel %vm1718, %v1707, 0.0
        %v1739 = vsel %vm1719, %v1689, 0.0
        %v1740 = vsel %vm1718, %v1708, 0.0
        %v1741 = vsel %vm1719, %v1690, 0.0
        %v1742 = vsel %vm1718, %v1709, 0.0
        %v1743 = vsel %vm1719, %v1691, 0.0
        %v1744 = vsel %vm1718, %v1710, 0.0
        %v1745 = vsel %vm1719, %v1692, 0.0
        %v1746 = vsel %vm1718, %v1711, 0.0
        %v1747 = vsel %vm1719, %v1693, 0.0
        %v1748 = vsel %vm1718, %v1712, 0.0
        %v1749 = vsel %vm1719, %v1694, 0.0
        %v1750 = vsel %vm1718, %v1713, 0.0
        %v1751 = vsel %vm1719, %v1695, 0.0
        %v1752 = vsel %vm1718, %v1714, 0.0
        %v1753 = vsel %vm1719, %v1696, 0.0
        %v1754 = vsel %vm1718, %v1715, 0.0
        %v1755 = vsel %vm1719, %v1697, 0.0
        %vm1756 = vcmp.lt.s32.totalorder %v1639, 15
        %vm1757 = vcmp.lt.s32.totalorder %v1640, 15
        %v1758 = vrot.slane %v1602, 1
        %v1759 = vrot.slane %v1604, 1
        %v1760 = vrot.slane %v1606, 1
        %v1761 = vrot.slane %v1608, 1
        %v1762 = vrot.slane %v1610, 1
        %v1763 = vrot.slane %v1612, 1
        %v1764 = vrot.slane %v1614, 1
        %v1765 = vrot.slane %v1616, 1
        %v1766 = vrot.slane %v1618, 1
        %v1767 = vrot.slane %v1620, 1
        %v1768 = vrot.slane %v1622, 1
        %v1769 = vrot.slane %v1624, 1
        %v1770 = vrot.slane %v1626, 1
        %v1771 = vrot.slane %v1628, 1
        %v1772 = vrot.slane %v1630, 1
        %v1773 = vrot.slane %v1632, 1
        %v1774 = vrot.slane %v1634, 1
        %v1775 = vrot.slane %v1636, 1
        %v1776 = vrot.slane %v1603, 1
        %v1777 = vrot.slane %v1605, 1
        %v1778 = vrot.slane %v1607, 1
        %v1779 = vrot.slane %v1609, 1
        %v1780 = vrot.slane %v1611, 1
        %v1781 = vrot.slane %v1613, 1
        %v1782 = vrot.slane %v1615, 1
        %v1783 = vrot.slane %v1617, 1
        %v1784 = vrot.slane %v1619, 1
        %v1785 = vrot.slane %v1621, 1
        %v1786 = vrot.slane %v1623, 1
        %v1787 = vrot.slane %v1625, 1
        %v1788 = vrot.slane %v1627, 1
        %v1789 = vrot.slane %v1629, 1
        %v1790 = vrot.slane %v1631, 1
        %v1791 = vrot.slane %v1633, 1
        %v1792 = vrot.slane %v1635, 1
        %v1793 = vrot.slane %v1637, 1
        %vm1794 = vcmp.lt.s32.totalorder %v1639, 7
        %v1795 = vsel %vm1794, %v1758, %v1776
        %v1796 = vsel %vm1794, %v1759, %v1777
        %v1797 = vsel %vm1794, %v1760, %v1778
        %v1798 = vsel %vm1794, %v1761, %v1779
        %v1799 = vsel %vm1794, %v1762, %v1780
        %v1800 = vsel %vm1794, %v1763, %v1781
        %v1801 = vsel %vm1794, %v1764, %v1782
        %v1802 = vsel %vm1794, %v1765, %v1783
        %v1803 = vsel %vm1794, %v1766, %v1784
        %v1804 = vsel %vm1794, %v1767, %v1785
        %v1805 = vsel %vm1794, %v1768, %v1786
        %v1806 = vsel %vm1794, %v1769, %v1787
        %v1807 = vsel %vm1794, %v1770, %v1788
        %v1808 = vsel %vm1794, %v1771, %v1789
        %v1809 = vsel %vm1794, %v1772, %v1790
        %v1810 = vsel %vm1794, %v1773, %v1791
        %v1811 = vsel %vm1794, %v1774, %v1792
        %v1812 = vsel %vm1794, %v1775, %v1793
        %v1813 = vsel %vm1794, %v1776, %v1758
        %v1814 = vsel %vm1794, %v1777, %v1759
        %v1815 = vsel %vm1794, %v1778, %v1760
        %v1816 = vsel %vm1794, %v1779, %v1761
        %v1817 = vsel %vm1794, %v1780, %v1762
        %v1818 = vsel %vm1794, %v1781, %v1763
        %v1819 = vsel %vm1794, %v1782, %v1764
        %v1820 = vsel %vm1794, %v1783, %v1765
        %v1821 = vsel %vm1794, %v1784, %v1766
        %v1822 = vsel %vm1794, %v1785, %v1767
        %v1823 = vsel %vm1794, %v1786, %v1768
        %v1824 = vsel %vm1794, %v1787, %v1769
        %v1825 = vsel %vm1794, %v1788, %v1770
        %v1826 = vsel %vm1794, %v1789, %v1771
        %v1827 = vsel %vm1794, %v1790, %v1772
        %v1828 = vsel %vm1794, %v1791, %v1773
        %v1829 = vsel %vm1794, %v1792, %v1774
        %v1830 = vsel %vm1794, %v1793, %v1775
        %v1831 = vsel %vm1756, 1, 0
        %v1832 = vsel %vm1757, 1, 0
        %vm1833 = vcmp.eq.s32.totalorder %v1831, 1
        %vm1834 = vcmp.eq.s32.totalorder %v1832, 1
        %v1835 = vsel %vm1833, %v1795, 0.0
        %v1836 = vsel %vm1834, %v1813, 0.0
        %v1837 = vsel %vm1833, %v1796, 0.0
        %v1838 = vsel %vm1834, %v1814, 0.0
        %v1839 = vsel %vm1833, %v1797, 0.0
        %v1840 = vsel %vm1834, %v1815, 0.0
        %v1841 = vsel %vm1833, %v1798, 0.0
        %v1842 = vsel %vm1834, %v1816, 0.0
        %v1843 = vsel %vm1833, %v1799, 0.0
        %v1844 = vsel %vm1834, %v1817, 0.0
        %v1845 = vsel %vm1833, %v1800, 0.0
        %v1846 = vsel %vm1834, %v1818, 0.0
        %v1847 = vsel %vm1833, %v1801, 0.0
        %v1848 = vsel %vm1834, %v1819, 0.0
        %v1849 = vsel %vm1833, %v1802, 0.0
        %v1850 = vsel %vm1834, %v1820, 0.0
        %v1851 = vsel %vm1833, %v1803, 0.0
        %v1852 = vsel %vm1834, %v1821, 0.0
        %v1853 = vsel %vm1833, %v1804, 0.0
        %v1854 = vsel %vm1834, %v1822, 0.0
        %v1855 = vsel %vm1833, %v1805, 0.0
        %v1856 = vsel %vm1834, %v1823, 0.0
        %v1857 = vsel %vm1833, %v1806, 0.0
        %v1858 = vsel %vm1834, %v1824, 0.0
        %v1859 = vsel %vm1833, %v1807, 0.0
        %v1860 = vsel %vm1834, %v1825, 0.0
        %v1861 = vsel %vm1833, %v1808, 0.0
        %v1862 = vsel %vm1834, %v1826, 0.0
        %v1863 = vsel %vm1833, %v1809, 0.0
        %v1864 = vsel %vm1834, %v1827, 0.0
        %v1865 = vsel %vm1833, %v1810, 0.0
        %v1866 = vsel %vm1834, %v1828, 0.0
        %v1867 = vsel %vm1833, %v1811, 0.0
        %v1868 = vsel %vm1834, %v1829, 0.0
        %v1869 = vsel %vm1833, %v1812, 0.0
        %v1870 = vsel %vm1834, %v1830, 0.0
        %v1871 = vpack.c.bf16 %v1721, %v1720
        %v1872 = vpack.c.bf16 %v1723, %v1722
        %v1873 = vpack.c.bf16 %v1725, %v1724
        %v1874 = vpack.c.bf16 %v1727, %v1726
        %v1875 = vpack.c.bf16 %v1729, %v1728
        %v1876 = vpack.c.bf16 %v1731, %v1730
        %v1877 = vpack.c.bf16 %v1733, %v1732
        %v1878 = vpack.c.bf16 %v1735, %v1734
        %v1879 = vpack.c.bf16 %v1737, %v1736
        %v1880 = vpack.c.bf16 %v1739, %v1738
        %v1881 = vpack.c.bf16 %v1741, %v1740
        %v1882 = vpack.c.bf16 %v1743, %v1742
        %v1883 = vpack.c.bf16 %v1745, %v1744
        %v1884 = vpack.c.bf16 %v1747, %v1746
        %v1885 = vpack.c.bf16 %v1749, %v1748
        %v1886 = vpack.c.bf16 %v1751, %v1750
        %v1887 = vpack.c.bf16 %v1753, %v1752
        %v1888 = vpack.c.bf16 %v1755, %v1754
        %1889 = vst [vmem:[#allocation2] sm:$0xff] %v1871
        %1890 = vst [vmem:[#allocation2 + $0x18] sm:$0xff] %v1872
        %1891 = vst [vmem:[#allocation2 + $0x30] sm:$0xff] %v1873
        %1892 = vst [vmem:[#allocation2 + $0x48] sm:$0xff] %v1874
        %1893 = vst [vmem:[#allocation2 + $0x60] sm:$0xff] %v1875
        %1894 = vst [vmem:[#allocation2 + $0x78] sm:$0xff] %v1876
        %1895 = vst [vmem:[#allocation2 + $0x90] sm:$0xff] %v1877
        %1896 = vst [vmem:[#allocation2 + $0xa8] sm:$0xff] %v1878
        %1897 = vst [vmem:[#allocation2 + $0xc0] sm:$0xff] %v1879
        %1898 = vst [vmem:[#allocation2 + $0xd8] sm:$0xff] %v1880
        %1899 = vst [vmem:[#allocation2 + $0xf0] sm:$0xff] %v1881
        %1900 = vst [vmem:[#allocation2 + $0x108] sm:$0xff] %v1882
        %1901 = vst [vmem:[#allocation2 + $0x120] sm:$0xff] %v1883
        %1902 = vst [vmem:[#allocation2 + $0x138] sm:$0xff] %v1884
        %1903 = vst [vmem:[#allocation2 + $0x150] sm:$0xff] %v1885
        %1904 = vst [vmem:[#allocation2 + $0x168] sm:$0xff] %v1886
        %1905 = vst [vmem:[#allocation2 + $0x180] sm:$0xff] %v1887
        %1906 = vst [vmem:[#allocation2 + $0x198] sm:$0xff] %v1888
        %v1907 = vpack.c.bf16 %v1603, %v1602
        %v1908 = vpack.c.bf16 %v1605, %v1604
        %v1909 = vpack.c.bf16 %v1607, %v1606
        %v1910 = vpack.c.bf16 %v1609, %v1608
        %v1911 = vpack.c.bf16 %v1611, %v1610
        %v1912 = vpack.c.bf16 %v1613, %v1612
        %v1913 = vpack.c.bf16 %v1615, %v1614
        %v1914 = vpack.c.bf16 %v1617, %v1616
        %v1915 = vpack.c.bf16 %v1619, %v1618
        %v1916 = vpack.c.bf16 %v1621, %v1620
        %v1917 = vpack.c.bf16 %v1623, %v1622
        %v1918 = vpack.c.bf16 %v1625, %v1624
        %v1919 = vpack.c.bf16 %v1627, %v1626
        %v1920 = vpack.c.bf16 %v1629, %v1628
        %v1921 = vpack.c.bf16 %v1631, %v1630
        %v1922 = vpack.c.bf16 %v1633, %v1632
        %v1923 = vpack.c.bf16 %v1635, %v1634
        %v1924 = vpack.c.bf16 %v1637, %v1636
        %1925 = vst [vmem:[#allocation2 + $0x8] sm:$0xff] %v1907
        %1926 = vst [vmem:[#allocation2 + $0x20] sm:$0xff] %v1908
        %1927 = vst [vmem:[#allocation2 + $0x38] sm:$0xff] %v1909
        %1928 = vst [vmem:[#allocation2 + $0x50] sm:$0xff] %v1910
        %1929 = vst [vmem:[#allocation2 + $0x68] sm:$0xff] %v1911
        %1930 = vst [vmem:[#allocation2 + $0x80] sm:$0xff] %v1912
        %1931 = vst [vmem:[#allocation2 + $0x98] sm:$0xff] %v1913
        %1932 = vst [vmem:[#allocation2 + $0xb0] sm:$0xff] %v1914
        %1933 = vst [vmem:[#allocation2 + $0xc8] sm:$0xff] %v1915
        %1934 = vst [vmem:[#allocation2 + $0xe0] sm:$0xff] %v1916
        %1935 = vst [vmem:[#allocation2 + $0xf8] sm:$0xff] %v1917
        %1936 = vst [vmem:[#allocation2 + $0x110] sm:$0xff] %v1918
        %1937 = vst [vmem:[#allocation2 + $0x128] sm:$0xff] %v1919
        %1938 = vst [vmem:[#allocation2 + $0x140] sm:$0xff] %v1920
        %1939 = vst [vmem:[#allocation2 + $0x158] sm:$0xff] %v1921
        %1940 = vst [vmem:[#allocation2 + $0x170] sm:$0xff] %v1922
        %1941 = vst [vmem:[#allocation2 + $0x188] sm:$0xff] %v1923
        %1942 = vst [vmem:[#allocation2 + $0x1a0] sm:$0xff] %v1924
        %v1943 = vpack.c.bf16 %v1836, %v1835
        %v1944 = vpack.c.bf16 %v1838, %v1837
        %v1945 = vpack.c.bf16 %v1840, %v1839
        %v1946 = vpack.c.bf16 %v1842, %v1841
        %v1947 = vpack.c.bf16 %v1844, %v1843
        %v1948 = vpack.c.bf16 %v1846, %v1845
        %v1949 = vpack.c.bf16 %v1848, %v1847
        %v1950 = vpack.c.bf16 %v1850, %v1849
        %v1951 = vpack.c.bf16 %v1852, %v1851
        %v1952 = vpack.c.bf16 %v1854, %v1853
        %v1953 = vpack.c.bf16 %v1856, %v1855
        %v1954 = vpack.c.bf16 %v1858, %v1857
        %v1955 = vpack.c.bf16 %v1860, %v1859
        %v1956 = vpack.c.bf16 %v1862, %v1861
        %v1957 = vpack.c.bf16 %v1864, %v1863
        %v1958 = vpack.c.bf16 %v1866, %v1865
        %v1959 = vpack.c.bf16 %v1868, %v1867
        %v1960 = vpack.c.bf16 %v1870, %v1869
        %1961 = vst [vmem:[#allocation2 + $0x10] sm:$0xff] %v1943
        %1962 = vst [vmem:[#allocation2 + $0x28] sm:$0xff] %v1944
        %1963 = vst [vmem:[#allocation2 + $0x40] sm:$0xff] %v1945
        %1964 = vst [vmem:[#allocation2 + $0x58] sm:$0xff] %v1946
        %1965 = vst [vmem:[#allocation2 + $0x70] sm:$0xff] %v1947
        %1966 = vst [vmem:[#allocation2 + $0x88] sm:$0xff] %v1948
        %1967 = vst [vmem:[#allocation2 + $0xa0] sm:$0xff] %v1949
        %1968 = vst [vmem:[#allocation2 + $0xb8] sm:$0xff] %v1950
        %1969 = vst [vmem:[#allocation2 + $0xd0] sm:$0xff] %v1951
        %1970 = vst [vmem:[#allocation2 + $0xe8] sm:$0xff] %v1952
        %1971 = vst [vmem:[#allocation2 + $0x100] sm:$0xff] %v1953
        %1972 = vst [vmem:[#allocation2 + $0x118] sm:$0xff] %v1954
        %1973 = vst [vmem:[#allocation2 + $0x130] sm:$0xff] %v1955
        %1974 = vst [vmem:[#allocation2 + $0x148] sm:$0xff] %v1956
        %1975 = vst [vmem:[#allocation2 + $0x160] sm:$0xff] %v1957
        %1976 = vst [vmem:[#allocation2 + $0x178] sm:$0xff] %v1958
        %1977 = vst [vmem:[#allocation2 + $0x190] sm:$0xff] %v1959
        %1978 = vst [vmem:[#allocation2 + $0x1a8] sm:$0xff] %v1960
        %v1979 = vld [vmem:[#allocation2] sm:$0xff]
        %v1980 = vld [vmem:[#allocation2 + $0x8] sm:$0xff]
        %v1981 = vld [vmem:[#allocation2 + $0x10] sm:$0xff]
        %v1982 = vld [vmem:[#allocation2 + $0x18] sm:$0xff]
        %v1983 = vld [vmem:[#allocation2 + $0x20] sm:$0xff]
        %v1984 = vld [vmem:[#allocation2 + $0x28] sm:$0xff]
        %v1985 = vld [vmem:[#allocation2 + $0x30] sm:$0xff]
        %v1986 = vld [vmem:[#allocation2 + $0x38] sm:$0xff]
        %v1987 = vld [vmem:[#allocation2 + $0x40] sm:$0xff]
        %v1988 = vld [vmem:[#allocation2 + $0x48] sm:$0xff]
        %v1989 = vld [vmem:[#allocation2 + $0x50] sm:$0xff]
        %v1990 = vld [vmem:[#allocation2 + $0x58] sm:$0xff]
        %v1991 = vld [vmem:[#allocation2 + $0x60] sm:$0xff]
        %v1992 = vld [vmem:[#allocation2 + $0x68] sm:$0xff]
        %v1993 = vld [vmem:[#allocation2 + $0x70] sm:$0xff]
        %v1994 = vld [vmem:[#allocation2 + $0x78] sm:$0xff]
        %v1995 = vld [vmem:[#allocation2 + $0x80] sm:$0xff]
        %v1996 = vld [vmem:[#allocation2 + $0x88] sm:$0xff]
        %v1997 = vld [vmem:[#allocation2 + $0x90] sm:$0xff]
        %v1998 = vld [vmem:[#allocation2 + $0x98] sm:$0xff]
        %v1999 = vld [vmem:[#allocation2 + $0xa0] sm:$0xff]
        %v2000 = vld [vmem:[#allocation2 + $0xa8] sm:$0xff]
        %v2001 = vld [vmem:[#allocation2 + $0xb0] sm:$0xff]
        %v2002 = vld [vmem:[#allocation2 + $0xb8] sm:$0xff]
        %v2003 = vld [vmem:[#allocation2 + $0xc0] sm:$0xff]
        %v2004 = vld [vmem:[#allocation2 + $0xc8] sm:$0xff]
        %v2005 = vld [vmem:[#allocation2 + $0xd0] sm:$0xff]
        %v2006 = vld [vmem:[#allocation2 + $0xd8] sm:$0xff]
        %v2007 = vld [vmem:[#allocation2 + $0xe0] sm:$0xff]
        %v2008 = vld [vmem:[#allocation2 + $0xe8] sm:$0xff]
        %v2009 = vld [vmem:[#allocation2 + $0xf0] sm:$0xff]
        %v2010 = vld [vmem:[#allocation2 + $0xf8] sm:$0xff]
        %v2011 = vld [vmem:[#allocation2 + $0x100] sm:$0xff]
        %v2012 = vld [vmem:[#allocation2 + $0x108] sm:$0xff]
        %v2013 = vld [vmem:[#allocation2 + $0x110] sm:$0xff]
        %v2014 = vld [vmem:[#allocation2 + $0x118] sm:$0xff]
        %v2015 = vld [vmem:[#allocation2 + $0x120] sm:$0xff]
        %v2016 = vld [vmem:[#allocation2 + $0x128] sm:$0xff]
        %v2017 = vld [vmem:[#allocation2 + $0x130] sm:$0xff]
        %v2018 = vld [vmem:[#allocation2 + $0x138] sm:$0xff]
        %v2019 = vld [vmem:[#allocation2 + $0x140] sm:$0xff]
        %v2020 = vld [vmem:[#allocation2 + $0x148] sm:$0xff]
        %v2021 = vld [vmem:[#allocation2 + $0x150] sm:$0xff]
        %v2022 = vld [vmem:[#allocation2 + $0x158] sm:$0xff]
        %v2023 = vld [vmem:[#allocation2 + $0x160] sm:$0xff]
        %v2024 = vld [vmem:[#allocation2 + $0x168] sm:$0xff]
        %v2025 = vld [vmem:[#allocation2 + $0x170] sm:$0xff]
        %v2026 = vld [vmem:[#allocation2 + $0x178] sm:$0xff]
        %v2027 = vld [vmem:[#allocation9] sm:$0xf]
        %v2028 = vld [vmem:[#allocation9 + $0x4] sm:$0xf]
        %v2029 = vld [vmem:[#allocation9 + $0x8] sm:$0xf]
        %v2030 = vld [vmem:[#allocation9 + $0xc] sm:$0xf]
        %v2031 = vld [vmem:[#allocation9 + $0x10] sm:$0xf]
        %v2032 = vld [vmem:[#allocation9 + $0x14] sm:$0xf]
        %v2033 = vld [vmem:[#allocation9 + $0x18] sm:$0xf]
        %v2034 = vld [vmem:[#allocation9 + $0x1c] sm:$0xf]
        %v2035 = vld [vmem:[#allocation9 + $0x20] sm:$0xf]
        %v2036 = vld [vmem:[#allocation9 + $0x24] sm:$0xf]
        %v2037 = vld [vmem:[#allocation9 + $0x28] sm:$0xf]
        %v2038 = vld [vmem:[#allocation9 + $0x2c] sm:$0xf]
        %v2039 = vld [vmem:[#allocation9 + $0x30] sm:$0xf]
        %v2040 = vld [vmem:[#allocation9 + $0x34] sm:$0xf]
        %v2041 = vld [vmem:[#allocation9 + $0x38] sm:$0xf]
        %v2042 = vld [vmem:[#allocation9 + $0x3c] sm:$0xf]
        %v2043 = vld [vmem:[#allocation9 + $0x40] sm:$0xf]
        %v2044 = vld [vmem:[#allocation9 + $0x44] sm:$0xf]
        %v2045 = vld [vmem:[#allocation9 + $0x48] sm:$0xf]
        %v2046 = vld [vmem:[#allocation9 + $0x4c] sm:$0xf]
        %v2047 = vld [vmem:[#allocation9 + $0x50] sm:$0xf]
        %v2048 = vld [vmem:[#allocation9 + $0x54] sm:$0xf]
        %v2049 = vld [vmem:[#allocation9 + $0x58] sm:$0xf]
        %v2050 = vld [vmem:[#allocation9 + $0x5c] sm:$0xf]
        %v2051 = vld [vmem:[#allocation9 + $0x60] sm:$0xf]
        %v2052 = vld [vmem:[#allocation9 + $0x64] sm:$0xf]
        %v2053 = vld [vmem:[#allocation9 + $0x68] sm:$0xf]
        %v2054 = vld [vmem:[#allocation9 + $0x6c] sm:$0xf]
        %v2055 = vld [vmem:[#allocation9 + $0x70] sm:$0xf]
        %v2056 = vld [vmem:[#allocation9 + $0x74] sm:$0xf]
        %v2057 = vld [vmem:[#allocation9 + $0x78] sm:$0xf]
        %v2058 = vld [vmem:[#allocation9 + $0x7c] sm:$0xf]
        %v2059 = vld [vmem:[#allocation9 + $0x80] sm:$0xf]
        %v2060 = vld [vmem:[#allocation9 + $0x84] sm:$0xf]
        %v2061 = vld [vmem:[#allocation9 + $0x88] sm:$0xf]
        %v2062 = vld [vmem:[#allocation9 + $0x8c] sm:$0xf]
        %v2063 = vld [vmem:[#allocation9 + $0x90] sm:$0xf]
        %v2064 = vld [vmem:[#allocation9 + $0x94] sm:$0xf]
        %v2065 = vld [vmem:[#allocation9 + $0x98] sm:$0xf]
        %v2066 = vld [vmem:[#allocation9 + $0x9c] sm:$0xf]
        %v2067 = vld [vmem:[#allocation9 + $0xa0] sm:$0xf]
        %v2068 = vld [vmem:[#allocation9 + $0xa4] sm:$0xf]
        %v2069 = vld [vmem:[#allocation9 + $0xa8] sm:$0xf]
        %v2070 = vld [vmem:[#allocation9 + $0xac] sm:$0xf]
        %v2071 = vld [vmem:[#allocation9 + $0xb0] sm:$0xf]
        %v2072 = vld [vmem:[#allocation9 + $0xb4] sm:$0xf]
        %v2073 = vld [vmem:[#allocation9 + $0xb8] sm:$0xf]
        %v2074 = vld [vmem:[#allocation9 + $0xbc] sm:$0xf]
        %s2075 = scalar_lea.vmem [#allocation2], 24
        %v2076 = vld [vmem:[%s2075] sm:$0xff]
        %v2077 = vld [vmem:[%s2075 + $0x8] sm:$0xff]
        %v2078 = vld [vmem:[%s2075 + $0x10] sm:$0xff]
        %v2079 = vld [vmem:[%s2075 + $0x18] sm:$0xff]
        %v2080 = vld [vmem:[%s2075 + $0x20] sm:$0xff]
        %v2081 = vld [vmem:[%s2075 + $0x28] sm:$0xff]
        %v2082 = vld [vmem:[%s2075 + $0x30] sm:$0xff]
        %v2083 = vld [vmem:[%s2075 + $0x38] sm:$0xff]
        %v2084 = vld [vmem:[%s2075 + $0x40] sm:$0xff]
        %v2085 = vld [vmem:[%s2075 + $0x48] sm:$0xff]
        %v2086 = vld [vmem:[%s2075 + $0x50] sm:$0xff]
        %v2087 = vld [vmem:[%s2075 + $0x58] sm:$0xff]
        %v2088 = vld [vmem:[%s2075 + $0x60] sm:$0xff]
        %v2089 = vld [vmem:[%s2075 + $0x68] sm:$0xff]
        %v2090 = vld [vmem:[%s2075 + $0x70] sm:$0xff]
        %v2091 = vld [vmem:[%s2075 + $0x78] sm:$0xff]
        %v2092 = vld [vmem:[%s2075 + $0x80] sm:$0xff]
        %v2093 = vld [vmem:[%s2075 + $0x88] sm:$0xff]
        %v2094 = vld [vmem:[%s2075 + $0x90] sm:$0xff]
        %v2095 = vld [vmem:[%s2075 + $0x98] sm:$0xff]
        %v2096 = vld [vmem:[%s2075 + $0xa0] sm:$0xff]
        %v2097 = vld [vmem:[%s2075 + $0xa8] sm:$0xff]
        %v2098 = vld [vmem:[%s2075 + $0xb0] sm:$0xff]
        %v2099 = vld [vmem:[%s2075 + $0xb8] sm:$0xff]
        %v2100 = vld [vmem:[%s2075 + $0xc0] sm:$0xff]
        %v2101 = vld [vmem:[%s2075 + $0xc8] sm:$0xff]
        %v2102 = vld [vmem:[%s2075 + $0xd0] sm:$0xff]
        %v2103 = vld [vmem:[%s2075 + $0xd8] sm:$0xff]
        %v2104 = vld [vmem:[%s2075 + $0xe0] sm:$0xff]
        %v2105 = vld [vmem:[%s2075 + $0xe8] sm:$0xff]
        %v2106 = vld [vmem:[%s2075 + $0xf0] sm:$0xff]
        %v2107 = vld [vmem:[%s2075 + $0xf8] sm:$0xff]
        %v2108 = vld [vmem:[%s2075 + $0x100] sm:$0xff]
        %v2109 = vld [vmem:[%s2075 + $0x108] sm:$0xff]
        %v2110 = vld [vmem:[%s2075 + $0x110] sm:$0xff]
        %v2111 = vld [vmem:[%s2075 + $0x118] sm:$0xff]
        %v2112 = vld [vmem:[%s2075 + $0x120] sm:$0xff]
        %v2113 = vld [vmem:[%s2075 + $0x128] sm:$0xff]
        %v2114 = vld [vmem:[%s2075 + $0x130] sm:$0xff]
        %v2115 = vld [vmem:[%s2075 + $0x138] sm:$0xff]
        %v2116 = vld [vmem:[%s2075 + $0x140] sm:$0xff]
        %v2117 = vld [vmem:[%s2075 + $0x148] sm:$0xff]
        %v2118 = vld [vmem:[%s2075 + $0x150] sm:$0xff]
        %v2119 = vld [vmem:[%s2075 + $0x158] sm:$0xff]
        %v2120 = vld [vmem:[%s2075 + $0x160] sm:$0xff]
        %v2121 = vld [vmem:[%s2075 + $0x168] sm:$0xff]
        %v2122 = vld [vmem:[%s2075 + $0x170] sm:$0xff]
        %v2123 = vld [vmem:[%s2075 + $0x178] sm:$0xff]
        %s2124 = scalar_lea.vmem [#allocation9], 192
        %v2125 = vld [vmem:[%s2124] sm:$0xf]
        %v2126 = vld [vmem:[%s2124 + $0x4] sm:$0xf]
        %v2127 = vld [vmem:[%s2124 + $0x8] sm:$0xf]
        %v2128 = vld [vmem:[%s2124 + $0xc] sm:$0xf]
        %v2129 = vld [vmem:[%s2124 + $0x10] sm:$0xf]
        %v2130 = vld [vmem:[%s2124 + $0x14] sm:$0xf]
        %v2131 = vld [vmem:[%s2124 + $0x18] sm:$0xf]
        %v2132 = vld [vmem:[%s2124 + $0x1c] sm:$0xf]
        %v2133 = vld [vmem:[%s2124 + $0x20] sm:$0xf]
        %v2134 = vld [vmem:[%s2124 + $0x24] sm:$0xf]
        %v2135 = vld [vmem:[%s2124 + $0x28] sm:$0xf]
        %v2136 = vld [vmem:[%s2124 + $0x2c] sm:$0xf]
        %v2137 = vld [vmem:[%s2124 + $0x30] sm:$0xf]
        %v2138 = vld [vmem:[%s2124 + $0x34] sm:$0xf]
        %v2139 = vld [vmem:[%s2124 + $0x38] sm:$0xf]
        %v2140 = vld [vmem:[%s2124 + $0x3c] sm:$0xf]
        %v2141 = vld [vmem:[%s2124 + $0x40] sm:$0xf]
        %v2142 = vld [vmem:[%s2124 + $0x44] sm:$0xf]
        %v2143 = vld [vmem:[%s2124 + $0x48] sm:$0xf]
        %v2144 = vld [vmem:[%s2124 + $0x4c] sm:$0xf]
        %v2145 = vld [vmem:[%s2124 + $0x50] sm:$0xf]
        %v2146 = vld [vmem:[%s2124 + $0x54] sm:$0xf]
        %v2147 = vld [vmem:[%s2124 + $0x58] sm:$0xf]
        %v2148 = vld [vmem:[%s2124 + $0x5c] sm:$0xf]
        %v2149 = vld [vmem:[%s2124 + $0x60] sm:$0xf]
        %v2150 = vld [vmem:[%s2124 + $0x64] sm:$0xf]
        %v2151 = vld [vmem:[%s2124 + $0x68] sm:$0xf]
        %v2152 = vld [vmem:[%s2124 + $0x6c] sm:$0xf]
        %v2153 = vld [vmem:[%s2124 + $0x70] sm:$0xf]
        %v2154 = vld [vmem:[%s2124 + $0x74] sm:$0xf]
        %v2155 = vld [vmem:[%s2124 + $0x78] sm:$0xf]
        %v2156 = vld [vmem:[%s2124 + $0x7c] sm:$0xf]
        %v2157 = vld [vmem:[%s2124 + $0x80] sm:$0xf]
        %v2158 = vld [vmem:[%s2124 + $0x84] sm:$0xf]
        %v2159 = vld [vmem:[%s2124 + $0x88] sm:$0xf]
        %v2160 = vld [vmem:[%s2124 + $0x8c] sm:$0xf]
        %v2161 = vld [vmem:[%s2124 + $0x90] sm:$0xf]
        %v2162 = vld [vmem:[%s2124 + $0x94] sm:$0xf]
        %v2163 = vld [vmem:[%s2124 + $0x98] sm:$0xf]
        %v2164 = vld [vmem:[%s2124 + $0x9c] sm:$0xf]
        %v2165 = vld [vmem:[%s2124 + $0xa0] sm:$0xf]
        %v2166 = vld [vmem:[%s2124 + $0xa4] sm:$0xf]
        %v2167 = vld [vmem:[%s2124 + $0xa8] sm:$0xf]
        %v2168 = vld [vmem:[%s2124 + $0xac] sm:$0xf]
        %v2169 = vld [vmem:[%s2124 + $0xb0] sm:$0xf]
        %v2170 = vld [vmem:[%s2124 + $0xb4] sm:$0xf]
        %v2171 = vld [vmem:[%s2124 + $0xb8] sm:$0xf]
        %v2172 = vld [vmem:[%s2124 + $0xbc] sm:$0xf]
        %v2221 = vunpack.c.l.b16 %v2125
        %v2222 = vunpack.c.l.b16 %v2126
        %v2223 = vunpack.c.l.b16 %v2127
        %v2224 = vunpack.c.l.b16 %v2128
        %v2225 = vunpack.c.l.b16 %v2129
        %v2226 = vunpack.c.l.b16 %v2130
        %v2227 = vunpack.c.l.b16 %v2131
        %v2228 = vunpack.c.l.b16 %v2132
        %v2229 = vunpack.c.l.b16 %v2133
        %v2230 = vunpack.c.l.b16 %v2134
        %v2231 = vunpack.c.l.b16 %v2135
        %v2232 = vunpack.c.l.b16 %v2136
        %v2233 = vunpack.c.l.b16 %v2137
        %v2234 = vunpack.c.l.b16 %v2138
        %v2235 = vunpack.c.l.b16 %v2139
        %v2236 = vunpack.c.l.b16 %v2140
        %v2237 = vunpack.c.l.b16 %v2141
        %v2238 = vunpack.c.l.b16 %v2142
        %v2239 = vunpack.c.l.b16 %v2143
        %v2240 = vunpack.c.l.b16 %v2144
        %v2241 = vunpack.c.l.b16 %v2145
        %v2242 = vunpack.c.l.b16 %v2146
        %v2243 = vunpack.c.l.b16 %v2147
        %v2244 = vunpack.c.l.b16 %v2148
        %v2245 = vunpack.c.l.b16 %v2149
        %v2246 = vunpack.c.l.b16 %v2150
        %v2247 = vunpack.c.l.b16 %v2151
        %v2248 = vunpack.c.l.b16 %v2152
        %v2249 = vunpack.c.l.b16 %v2153
        %v2250 = vunpack.c.l.b16 %v2154
        %v2251 = vunpack.c.l.b16 %v2155
        %v2252 = vunpack.c.l.b16 %v2156
        %v2253 = vunpack.c.l.b16 %v2157
        %v2254 = vunpack.c.l.b16 %v2158
        %v2255 = vunpack.c.l.b16 %v2159
        %v2256 = vunpack.c.l.b16 %v2160
        %v2257 = vunpack.c.l.b16 %v2161
        %v2258 = vunpack.c.l.b16 %v2162
        %v2259 = vunpack.c.l.b16 %v2163
        %v2260 = vunpack.c.l.b16 %v2164
        %v2261 = vunpack.c.l.b16 %v2165
        %v2262 = vunpack.c.l.b16 %v2166
        %v2263 = vunpack.c.l.b16 %v2167
        %v2264 = vunpack.c.l.b16 %v2168
        %v2265 = vunpack.c.l.b16 %v2169
        %v2266 = vunpack.c.l.b16 %v2170
        %v2267 = vunpack.c.l.b16 %v2171
        %v2268 = vunpack.c.l.b16 %v2172
        %v2269 = vpack.c.b16 %v2222, %v2221
        %v2270 = vpack.c.b16 %v2224, %v2223
        %v2271 = vpack.c.b16 %v2226, %v2225
        %v2272 = vpack.c.b16 %v2228, %v2227
        %v2273 = vpack.c.b16 %v2230, %v2229
        %v2274 = vpack.c.b16 %v2232, %v2231
        %v2275 = vpack.c.b16 %v2234, %v2233
        %v2276 = vpack.c.b16 %v2236, %v2235
        %v2277 = vpack.c.b16 %v2238, %v2237
        %v2278 = vpack.c.b16 %v2240, %v2239
        %v2279 = vpack.c.b16 %v2242, %v2241
        %v2280 = vpack.c.b16 %v2244, %v2243
        %v2281 = vpack.c.b16 %v2246, %v2245
        %v2282 = vpack.c.b16 %v2248, %v2247
        %v2283 = vpack.c.b16 %v2250, %v2249
        %v2284 = vpack.c.b16 %v2252, %v2251
        %v2285 = vpack.c.b16 %v2254, %v2253
        %v2286 = vpack.c.b16 %v2256, %v2255
        %v2287 = vpack.c.b16 %v2258, %v2257
        %v2288 = vpack.c.b16 %v2260, %v2259
        %v2289 = vpack.c.b16 %v2262, %v2261
        %v2290 = vpack.c.b16 %v2264, %v2263
        %v2291 = vpack.c.b16 %v2266, %v2265
        %v2292 = vpack.c.b16 %v2268, %v2267
        %2317 = vmatprep.subr.bf16.mxu0 0
        %2318 = vmatpush1.bf16.msra.mxu0 %v2269
        %2319 = vmatprep.subr.bf16.mxu0 0
        %2320 = vmatpush1.bf16.msra.mxu0 %v2270
        %2321 = vmatprep.subr.bf16.mxu0 0
        %2322 = vmatpush1.bf16.msra.mxu0 %v2271
        %2323 = vmatprep.subr.bf16.mxu0 0
        %2324 = vmatpush1.bf16.msra.mxu0 %v2272
        %2325 = vmatprep.subr.bf16.mxu0 0
        %2326 = vmatpush1.bf16.msra.mxu0 %v2273
        %2327 = vmatprep.subr.bf16.mxu0 0
        %2328 = vmatpush1.bf16.msra.mxu0 %v2274
        %2329 = vmatprep.subr.bf16.mxu0 0
        %2330 = vmatpush1.bf16.msra.mxu0 %v2275
        %2331 = vmatprep.subr.bf16.mxu0 0
        %2332 = vmatpush1.bf16.msra.mxu0 %v2276
        %2333 = vmatprep.subr.bf16.mxu0 0
        %2334 = vmatpush1.bf16.msra.mxu0 %v2277
        %2335 = vmatprep.subr.bf16.mxu0 0
        %2336 = vmatpush1.bf16.msra.mxu0 %v2278
        %2337 = vmatprep.subr.bf16.mxu0 0
        %2338 = vmatpush1.bf16.msra.mxu0 %v2279
        %2339 = vmatprep.subr.bf16.mxu0 0
        %2340 = vmatpush1.bf16.msra.mxu0 %v2280
        %2341 = vmatprep.subr.bf16.mxu0 0
        %2342 = vmatpush1.bf16.msra.mxu0 %v2281
        %2343 = vmatprep.subr.bf16.mxu0 0
        %2344 = vmatpush1.bf16.msra.mxu0 %v2282
        %2345 = vmatprep.subr.bf16.mxu0 0
        %2346 = vmatpush1.bf16.msra.mxu0 %v2283
        %2347 = vmatprep.subr.bf16.mxu0 0
        %2348 = vmatpush1.bf16.msra.mxu0 %v2284
        %2349 = vmatprep.mubr.bf16.mxu0 %v2077
        %2350 = vmatmul.mubr.bf16.gmra.mrb[0].mxu0 %v2076
        %v2351 = vpop.f32.mrb[0].mxu0
        %v2352 = vadd.f32 0.0, %v2351
        %v2353 = vpop.f32.mrb[0].mxu0
        %v2354 = vpop.f32.mrb[0].mxu0
        %v2355 = vadd.f32 0.0, %v2354
        %v2356 = vpop.f32.mrb[0].mxu0
        %2357 = vmatprep.mubr.bf16.mxu0 %v2080
        %2358 = vmatmul.mubr.bf16.gmra.mrb[0].mxu0 %v2079
        %v2359 = vpop.f32.mrb[0].mxu0
        %v2360 = vadd.f32 0.0, %v2359
        %v2361 = vpop.f32.mrb[0].mxu0
        %v2362 = vpop.f32.mrb[0].mxu0
        %v2363 = vadd.f32 0.0, %v2362
        %v2364 = vpop.f32.mrb[0].mxu0
        %2365 = vmatprep.mubr.bf16.mxu0 %v2083
        %2366 = vmatmul.mubr.bf16.gmra.mrb[0].mxu0 %v2082
        %v2367 = vpop.f32.mrb[0].mxu0
        %v2368 = vadd.f32 0.0, %v2367
        %v2369 = vpop.f32.mrb[0].mxu0
        %v2370 = vpop.f32.mrb[0].mxu0
        %v2371 = vadd.f32 0.0, %v2370
        %v2372 = vpop.f32.mrb[0].mxu0
        %2373 = vmatprep.mubr.bf16.mxu0 %v2086
        %2374 = vmatmul.mubr.bf16.gmra.mrb[0].mxu0 %v2085
        %v2375 = vpop.f32.mrb[0].mxu0
        %v2376 = vadd.f32 0.0, %v2375
        %v2377 = vpop.f32.mrb[0].mxu0
        %v2378 = vpop.f32.mrb[0].mxu0
        %v2379 = vadd.f32 0.0, %v2378
        %v2380 = vpop.f32.mrb[0].mxu0
        %2381 = vmatprep.mubr.bf16.mxu0 %v2089
        %2382 = vmatmul.mubr.bf16.gmra.mrb[0].mxu0 %v2088
        %v2383 = vpop.f32.mrb[0].mxu0
        %v2384 = vadd.f32 0.0, %v2383
        %v2385 = vpop.f32.mrb[0].mxu0
        %v2386 = vpop.f32.mrb[0].mxu0
        %v2387 = vadd.f32 0.0, %v2386
        %v2388 = vpop.f32.mrb[0].mxu0
        %2389 = vmatprep.mubr.bf16.mxu0 %v2092
        %2390 = vmatmul.mubr.bf16.gmra.mrb[0].mxu0 %v2091
        %v2391 = vpop.f32.mrb[0].mxu0
        %v2392 = vadd.f32 0.0, %v2391
        %v2393 = vpop.f32.mrb[0].mxu0
        %v2394 = vpop.f32.mrb[0].mxu0
        %v2395 = vadd.f32 0.0, %v2394
        %v2396 = vpop.f32.mrb[0].mxu0
        %2397 = vmatprep.mubr.bf16.mxu0 %v2095
        %2398 = vmatmul.mubr.bf16.gmra.mrb[0].mxu0 %v2094
        %v2399 = vpop.f32.mrb[0].mxu0
        %v2400 = vadd.f32 0.0, %v2399
        %v2401 = vpop.f32.mrb[0].mxu0
        %v2402 = vpop.f32.mrb[0].mxu0
        %v2403 = vadd.f32 0.0, %v2402
        %v2404 = vpop.f32.mrb[0].mxu0
        %2405 = vmatprep.mubr.bf16.mxu0 %v2098
        %2406 = vmatmul.mubr.bf16.gmra.mrb[0].mxu0 %v2097
        %v2407 = vpop.f32.mrb[0].mxu0
        %v2408 = vadd.f32 0.0, %v2407
        %v2409 = vpop.f32.mrb[0].mxu0
        %v2410 = vpop.f32.mrb[0].mxu0
        %v2411 = vadd.f32 0.0, %v2410
        %v2412 = vpop.f32.mrb[0].mxu0
        %2413 = vmatprep.mubr.bf16.mxu0 %v2101
        %2414 = vmatmul.mubr.bf16.gmra.mrb[0].mxu0 %v2100
        %v2415 = vpop.f32.mrb[0].mxu0
        %v2416 = vadd.f32 0.0, %v2415
        %v2417 = vpop.f32.mrb[0].mxu0
        %v2418 = vpop.f32.mrb[0].mxu0
        %v2419 = vadd.f32 0.0, %v2418
        %v2420 = vpop.f32.mrb[0].mxu0
        %2421 = vmatprep.mubr.bf16.mxu0 %v2104
        %2422 = vmatmul.mubr.bf16.gmra.mrb[0].mxu0 %v2103
        %v2423 = vpop.f32.mrb[0].mxu0
        %v2424 = vadd.f32 0.0, %v2423
        %v2425 = vpop.f32.mrb[0].mxu0
        %v2426 = vpop.f32.mrb[0].mxu0
        %v2427 = vadd.f32 0.0, %v2426
        %v2428 = vpop.f32.mrb[0].mxu0
        %2429 = vmatprep.mubr.bf16.mxu0 %v2107
        %2430 = vmatmul.mubr.bf16.gmra.mrb[0].mxu0 %v2106
        %v2431 = vpop.f32.mrb[0].mxu0
        %v2432 = vadd.f32 0.0, %v2431
        %v2433 = vpop.f32.mrb[0].mxu0
        %v2434 = vpop.f32.mrb[0].mxu0
        %v2435 = vadd.f32 0.0, %v2434
        %v2436 = vpop.f32.mrb[0].mxu0
        %2437 = vmatprep.mubr.bf16.mxu0 %v2110
        %2438 = vmatmul.mubr.bf16.gmra.mrb[0].mxu0 %v2109
        %v2439 = vpop.f32.mrb[0].mxu0
        %v2440 = vadd.f32 0.0, %v2439
        %v2441 = vpop.f32.mrb[0].mxu0
        %v2442 = vpop.f32.mrb[0].mxu0
        %v2443 = vadd.f32 0.0, %v2442
        %v2444 = vpop.f32.mrb[0].mxu0
        %2445 = vmatprep.mubr.bf16.mxu0 %v2113
        %2446 = vmatmul.mubr.bf16.gmra.mrb[0].mxu0 %v2112
        %v2447 = vpop.f32.mrb[0].mxu0
        %v2448 = vadd.f32 0.0, %v2447
        %v2449 = vpop.f32.mrb[0].mxu0
        %v2450 = vpop.f32.mrb[0].mxu0
        %v2451 = vadd.f32 0.0, %v2450
        %v2452 = vpop.f32.mrb[0].mxu0
        %2453 = vmatprep.mubr.bf16.mxu0 %v2116
        %2454 = vmatmul.mubr.bf16.gmra.mrb[0].mxu0 %v2115
        %v2455 = vpop.f32.mrb[0].mxu0
        %v2456 = vadd.f32 0.0, %v2455
        %v2457 = vpop.f32.mrb[0].mxu0
        %v2458 = vpop.f32.mrb[0].mxu0
        %v2459 = vadd.f32 0.0, %v2458
        %v2460 = vpop.f32.mrb[0].mxu0
        %2461 = vmatprep.mubr.bf16.mxu0 %v2119
        %2462 = vmatmul.mubr.bf16.gmra.mrb[0].mxu0 %v2118
        %v2463 = vpop.f32.mrb[0].mxu0
        %v2464 = vadd.f32 0.0, %v2463
        %v2465 = vpop.f32.mrb[0].mxu0
        %v2466 = vpop.f32.mrb[0].mxu0
        %v2467 = vadd.f32 0.0, %v2466
        %v2468 = vpop.f32.mrb[0].mxu0
        %2469 = vmatprep.mubr.bf16.mxu0 %v2122
        %2470 = vmatmul.mubr.bf16.gmra.mrb[0].mxu0 %v2121
        %v2471 = vpop.f32.mrb[0].mxu0
        %v2472 = vadd.f32 0.0, %v2471
        %v2473 = vpop.f32.mrb[0].mxu0
        %v2474 = vpop.f32.mrb[0].mxu0
        %v2475 = vadd.f32 0.0, %v2474
        %v2476 = vpop.f32.mrb[0].mxu0
        %2477 = vdwg.mxu0
        %2478 = vmatprep.subr.bf16.mxu0 0
        %2479 = vmatpush1.bf16.msra.mxu0 %v2285
        %2480 = vmatprep.subr.bf16.mxu0 0
        %2481 = vmatpush1.bf16.msra.mxu0 %v2286
        %2482 = vmatprep.subr.bf16.mxu0 0
        %2483 = vmatpush1.bf16.msra.mxu0 %v2287
        %2484 = vmatprep.subr.bf16.mxu0 0
        %2485 = vmatpush1.bf16.msra.mxu0 %v2288
        %2486 = vmatprep.subr.bf16.mxu0 0
        %2487 = vmatpush1.bf16.msra.mxu0 %v2289
        %2488 = vmatprep.subr.bf16.mxu0 0
        %2489 = vmatpush1.bf16.msra.mxu0 %v2290
        %2490 = vmatprep.subr.bf16.mxu0 0
        %2491 = vmatpush1.bf16.msra.mxu0 %v2291
        %2492 = vmatprep.subr.bf16.mxu0 0
        %2493 = vmatpush1.bf16.msra.mxu0 %v2292
        %2494 = vmatprep.subr.bf16.mxu0 0
        %2495 = vmatpush1.bf16.msra.mxu0 0
        %2496 = vmatprep.subr.bf16.mxu0 0
        %2497 = vmatpush1.bf16.msra.mxu0 0
        %2498 = vmatprep.subr.bf16.mxu0 0
        %2499 = vmatpush1.bf16.msra.mxu0 0
        %2500 = vmatprep.subr.bf16.mxu0 0
        %2501 = vmatpush1.bf16.msra.mxu0 0
        %2502 = vmatprep.subr.bf16.mxu0 0
        %2503 = vmatpush1.bf16.msra.mxu0 0
        %2504 = vmatprep.subr.bf16.mxu0 0
        %2505 = vmatpush1.bf16.msra.mxu0 0
        %2506 = vmatprep.subr.bf16.mxu0 0
        %2507 = vmatpush1.bf16.msra.mxu0 0
        %2508 = vmatprep.subr.bf16.mxu0 0
        %2509 = vmatpush1.bf16.msra.mxu0 0
        %2510 = vmatprep.mubr.bf16.mxu0 0
        %2511 = vmatmul.mubr.bf16.gmra.mrb[0].mxu0 %v2078
        %v2512 = vpop.f32.mrb[0].mxu0
        %v2513 = vadd.f32 %v2352, %v2512
        %v2514 = vpop.f32.mrb[0].mxu0
        %v2515 = vpop.f32.mrb[0].mxu0
        %v2516 = vadd.f32 %v2355, %v2515
        %v2517 = vpop.f32.mrb[0].mxu0
        %2518 = vmatprep.mubr.bf16.mxu0 0
        %2519 = vmatmul.mubr.bf16.gmra.mrb[0].mxu0 %v2081
        %v2520 = vpop.f32.mrb[0].mxu0
        %v2521 = vadd.f32 %v2360, %v2520
        %v2522 = vpop.f32.mrb[0].mxu0
        %v2523 = vpop.f32.mrb[0].mxu0
        %v2524 = vadd.f32 %v2363, %v2523
        %v2525 = vpop.f32.mrb[0].mxu0
        %2526 = vmatprep.mubr.bf16.mxu0 0
        %2527 = vmatmul.mubr.bf16.gmra.mrb[0].mxu0 %v2084
        %v2528 = vpop.f32.mrb[0].mxu0
        %v2529 = vadd.f32 %v2368, %v2528
        %v2530 = vpop.f32.mrb[0].mxu0
        %v2531 = vpop.f32.mrb[0].mxu0
        %v2532 = vadd.f32 %v2371, %v2531
        %v2533 = vpop.f32.mrb[0].mxu0
        %2534 = vmatprep.mubr.bf16.mxu0 0
        %2535 = vmatmul.mubr.bf16.gmra.mrb[0].mxu0 %v2087
        %v2536 = vpop.f32.mrb[0].mxu0
        %v2537 = vadd.f32 %v2376, %v2536
        %v2538 = vpop.f32.mrb[0].mxu0
        %v2539 = vpop.f32.mrb[0].mxu0
        %v2540 = vadd.f32 %v2379, %v2539
        %v2541 = vpop.f32.mrb[0].mxu0
        %2542 = vmatprep.mubr.bf16.mxu0 0
        %2543 = vmatmul.mubr.bf16.gmra.mrb[0].mxu0 %v2090
        %v2544 = vpop.f32.mrb[0].mxu0
        %v2545 = vadd.f32 %v2384, %v2544
        %v2546 = vpop.f32.mrb[0].mxu0
        %v2547 = vpop.f32.mrb[0].mxu0
        %v2548 = vadd.f32 %v2387, %v2547
        %v2549 = vpop.f32.mrb[0].mxu0
        %2550 = vmatprep.mubr.bf16.mxu0 0
        %2551 = vmatmul.mubr.bf16.gmra.mrb[0].mxu0 %v2093
        %v2552 = vpop.f32.mrb[0].mxu0
        %v2553 = vadd.f32 %v2392, %v2552
        %v2554 = vpop.f32.mrb[0].mxu0
        %v2555 = vpop.f32.mrb[0].mxu0
        %v2556 = vadd.f32 %v2395, %v2555
        %v2557 = vpop.f32.mrb[0].mxu0
        %2558 = vmatprep.mubr.bf16.mxu0 0
        %2559 = vmatmul.mubr.bf16.gmra.mrb[0].mxu0 %v2096
        %v2560 = vpop.f32.mrb[0].mxu0
        %v2561 = vadd.f32 %v2400, %v2560
        %v2562 = vpop.f32.mrb[0].mxu0
        %v2563 = vpop.f32.mrb[0].mxu0
        %v2564 = vadd.f32 %v2403, %v2563
        %v2565 = vpop.f32.mrb[0].mxu0
        %2566 = vmatprep.mubr.bf16.mxu0 0
        %2567 = vmatmul.mubr.bf16.gmra.mrb[0].mxu0 %v2099
        %v2568 = vpop.f32.mrb[0].mxu0
        %v2569 = vadd.f32 %v2408, %v2568
        %v2570 = vpop.f32.mrb[0].mxu0
        %v2571 = vpop.f32.mrb[0].mxu0
        %v2572 = vadd.f32 %v2411, %v2571
        %v2573 = vpop.f32.mrb[0].mxu0
        %2574 = vmatprep.mubr.bf16.mxu0 0
        %2575 = vmatmul.mubr.bf16.gmra.mrb[0].mxu0 %v2102
        %v2576 = vpop.f32.mrb[0].mxu0
        %v2577 = vadd.f32 %v2416, %v2576
        %v2578 = vpop.f32.mrb[0].mxu0
        %v2579 = vpop.f32.mrb[0].mxu0
        %v2580 = vadd.f32 %v2419, %v2579
        %v2581 = vpop.f32.mrb[0].mxu0
        %2582 = vmatprep.mubr.bf16.mxu0 0
        %2583 = vmatmul.mubr.bf16.gmra.mrb[0].mxu0 %v2105
        %v2584 = vpop.f32.mrb[0].mxu0
        %v2585 = vadd.f32 %v2424, %v2584
        %v2586 = vpop.f32.mrb[0].mxu0
        %v2587 = vpop.f32.mrb[0].mxu0
        %v2588 = vadd.f32 %v2427, %v2587
        %v2589 = vpop.f32.mrb[0].mxu0
        %2590 = vmatprep.mubr.bf16.mxu0 0
        %2591 = vmatmul.mubr.bf16.gmra.mrb[0].mxu0 %v2108
        %v2592 = vpop.f32.mrb[0].mxu0
        %v2593 = vadd.f32 %v2432, %v2592
        %v2594 = vpop.f32.mrb[0].mxu0
        %v2595 = vpop.f32.mrb[0].mxu0
        %v2596 = vadd.f32 %v2435, %v2595
        %v2597 = vpop.f32.mrb[0].mxu0
        %2598 = vmatprep.mubr.bf16.mxu0 0
        %2599 = vmatmul.mubr.bf16.gmra.mrb[0].mxu0 %v2111
        %v2600 = vpop.f32.mrb[0].mxu0
        %v2601 = vadd.f32 %v2440, %v2600
        %v2602 = vpop.f32.mrb[0].mxu0
        %v2603 = vpop.f32.mrb[0].mxu0
        %v2604 = vadd.f32 %v2443, %v2603
        %v2605 = vpop.f32.mrb[0].mxu0
        %2606 = vmatprep.mubr.bf16.mxu0 0
        %2607 = vmatmul.mubr.bf16.gmra.mrb[0].mxu0 %v2114
        %v2608 = vpop.f32.mrb[0].mxu0
        %v2609 = vadd.f32 %v2448, %v2608
        %v2610 = vpop.f32.mrb[0].mxu0
        %v2611 = vpop.f32.mrb[0].mxu0
        %v2612 = vadd.f32 %v2451, %v2611
        %v2613 = vpop.f32.mrb[0].mxu0
        %2614 = vmatprep.mubr.bf16.mxu0 0
        %2615 = vmatmul.mubr.bf16.gmra.mrb[0].mxu0 %v2117
        %v2616 = vpop.f32.mrb[0].mxu0
        %v2617 = vadd.f32 %v2456, %v2616
        %v2618 = vpop.f32.mrb[0].mxu0
        %v2619 = vpop.f32.mrb[0].mxu0
        %v2620 = vadd.f32 %v2459, %v2619
        %v2621 = vpop.f32.mrb[0].mxu0
        %2622 = vmatprep.mubr.bf16.mxu0 0
        %2623 = vmatmul.mubr.bf16.gmra.mrb[0].mxu0 %v2120
        %v2624 = vpop.f32.mrb[0].mxu0
        %v2625 = vadd.f32 %v2464, %v2624
        %v2626 = vpop.f32.mrb[0].mxu0
        %v2627 = vpop.f32.mrb[0].mxu0
        %v2628 = vadd.f32 %v2467, %v2627
        %v2629 = vpop.f32.mrb[0].mxu0
        %2630 = vmatprep.mubr.bf16.mxu0 0
        %2631 = vmatmul.mubr.bf16.gmra.mrb[0].mxu0 %v2123
        %v2632 = vpop.f32.mrb[0].mxu0
        %v2633 = vadd.f32 %v2472, %v2632
        %v2634 = vpop.f32.mrb[0].mxu0
        %v2635 = vpop.f32.mrb[0].mxu0
        %v2636 = vadd.f32 %v2475, %v2635
        %v2637 = vpop.f32.mrb[0].mxu0
        %2638 = vdwg.mxu0
        %v2687 = vunpack.c.l.b16 %v2027
        %v2688 = vunpack.c.l.b16 %v2028
        %v2689 = vunpack.c.l.b16 %v2029
        %v2690 = vunpack.c.l.b16 %v2030
        %v2691 = vunpack.c.l.b16 %v2031
        %v2692 = vunpack.c.l.b16 %v2032
        %v2693 = vunpack.c.l.b16 %v2033
        %v2694 = vunpack.c.l.b16 %v2034
        %v2695 = vunpack.c.l.b16 %v2035
        %v2696 = vunpack.c.l.b16 %v2036
        %v2697 = vunpack.c.l.b16 %v2037
        %v2698 = vunpack.c.l.b16 %v2038
        %v2699 = vunpack.c.l.b16 %v2039
        %v2700 = vunpack.c.l.b16 %v2040
        %v2701 = vunpack.c.l.b16 %v2041
        %v2702 = vunpack.c.l.b16 %v2042
        %v2703 = vunpack.c.l.b16 %v2043
        %v2704 = vunpack.c.l.b16 %v2044
        %v2705 = vunpack.c.l.b16 %v2045
        %v2706 = vunpack.c.l.b16 %v2046
        %v2707 = vunpack.c.l.b16 %v2047
        %v2708 = vunpack.c.l.b16 %v2048
        %v2709 = vunpack.c.l.b16 %v2049
        %v2710 = vunpack.c.l.b16 %v2050
        %v2711 = vunpack.c.l.b16 %v2051
        %v2712 = vunpack.c.l.b16 %v2052
        %v2713 = vunpack.c.l.b16 %v2053
        %v2714 = vunpack.c.l.b16 %v2054
        %v2715 = vunpack.c.l.b16 %v2055
        %v2716 = vunpack.c.l.b16 %v2056
        %v2717 = vunpack.c.l.b16 %v2057
        %v2718 = vunpack.c.l.b16 %v2058
        %v2719 = vunpack.c.l.b16 %v2059
        %v2720 = vunpack.c.l.b16 %v2060
        %v2721 = vunpack.c.l.b16 %v2061
        %v2722 = vunpack.c.l.b16 %v2062
        %v2723 = vunpack.c.l.b16 %v2063
        %v2724 = vunpack.c.l.b16 %v2064
        %v2725 = vunpack.c.l.b16 %v2065
        %v2726 = vunpack.c.l.b16 %v2066
        %v2727 = vunpack.c.l.b16 %v2067
        %v2728 = vunpack.c.l.b16 %v2068
        %v2729 = vunpack.c.l.b16 %v2069
        %v2730 = vunpack.c.l.b16 %v2070
        %v2731 = vunpack.c.l.b16 %v2071
        %v2732 = vunpack.c.l.b16 %v2072
        %v2733 = vunpack.c.l.b16 %v2073
        %v2734 = vunpack.c.l.b16 %v2074
        %v2735 = vpack.c.b16 %v2688, %v2687
        %v2736 = vpack.c.b16 %v2690, %v2689
        %v2737 = vpack.c.b16 %v2692, %v2691
        %v2738 = vpack.c.b16 %v2694, %v2693
        %v2739 = vpack.c.b16 %v2696, %v2695
        %v2740 = vpack.c.b16 %v2698, %v2697
        %v2741 = vpack.c.b16 %v2700, %v2699
        %v2742 = vpack.c.b16 %v2702, %v2701
        %v2743 = vpack.c.b16 %v2704, %v2703
        %v2744 = vpack.c.b16 %v2706, %v2705
        %v2745 = vpack.c.b16 %v2708, %v2707
        %v2746 = vpack.c.b16 %v2710, %v2709
        %v2747 = vpack.c.b16 %v2712, %v2711
        %v2748 = vpack.c.b16 %v2714, %v2713
        %v2749 = vpack.c.b16 %v2716, %v2715
        %v2750 = vpack.c.b16 %v2718, %v2717
        %v2751 = vpack.c.b16 %v2720, %v2719
        %v2752 = vpack.c.b16 %v2722, %v2721
        %v2753 = vpack.c.b16 %v2724, %v2723
        %v2754 = vpack.c.b16 %v2726, %v2725
        %v2755 = vpack.c.b16 %v2728, %v2727
        %v2756 = vpack.c.b16 %v2730, %v2729
        %v2757 = vpack.c.b16 %v2732, %v2731
        %v2758 = vpack.c.b16 %v2734, %v2733
        %2783 = vmatprep.subr.bf16.mxu0 0
        %2784 = vmatpush1.bf16.msra.mxu0 %v2735
        %2785 = vmatprep.subr.bf16.mxu0 0
        %2786 = vmatpush1.bf16.msra.mxu0 %v2736
        %2787 = vmatprep.subr.bf16.mxu0 0
        %2788 = vmatpush1.bf16.msra.mxu0 %v2737
        %2789 = vmatprep.subr.bf16.mxu0 0
        %2790 = vmatpush1.bf16.msra.mxu0 %v2738
        %2791 = vmatprep.subr.bf16.mxu0 0
        %2792 = vmatpush1.bf16.msra.mxu0 %v2739
        %2793 = vmatprep.subr.bf16.mxu0 0
        %2794 = vmatpush1.bf16.msra.mxu0 %v2740
        %2795 = vmatprep.subr.bf16.mxu0 0
        %2796 = vmatpush1.bf16.msra.mxu0 %v2741
        %2797 = vmatprep.subr.bf16.mxu0 0
        %2798 = vmatpush1.bf16.msra.mxu0 %v2742
        %2799 = vmatprep.subr.bf16.mxu0 0
        %2800 = vmatpush1.bf16.msra.mxu0 %v2743
        %2801 = vmatprep.subr.bf16.mxu0 0
        %2802 = vmatpush1.bf16.msra.mxu0 %v2744
        %2803 = vmatprep.subr.bf16.mxu0 0
        %2804 = vmatpush1.bf16.msra.mxu0 %v2745
        %2805 = vmatprep.subr.bf16.mxu0 0
        %2806 = vmatpush1.bf16.msra.mxu0 %v2746
        %2807 = vmatprep.subr.bf16.mxu0 0
        %2808 = vmatpush1.bf16.msra.mxu0 %v2747
        %2809 = vmatprep.subr.bf16.mxu0 0
        %2810 = vmatpush1.bf16.msra.mxu0 %v2748
        %2811 = vmatprep.subr.bf16.mxu0 0
        %2812 = vmatpush1.bf16.msra.mxu0 %v2749
        %2813 = vmatprep.subr.bf16.mxu0 0
        %2814 = vmatpush1.bf16.msra.mxu0 %v2750
        %2815 = vmatprep.mubr.bf16.mxu0 %v1980
        %2816 = vmatmul.mubr.bf16.gmra.mrb[0].mxu0 %v1979
        %v2817 = vpop.f32.mrb[0].mxu0
        %v2818 = vadd.f32 %v2513, %v2817
        %v2819 = vpop.f32.mrb[0].mxu0
        %v2820 = vpop.f32.mrb[0].mxu0
        %v2821 = vadd.f32 %v2516, %v2820
        %v2822 = vpop.f32.mrb[0].mxu0
        %2823 = vmatprep.mubr.bf16.mxu0 %v1983
        %2824 = vmatmul.mubr.bf16.gmra.mrb[0].mxu0 %v1982
        %v2825 = vpop.f32.mrb[0].mxu0
        %v2826 = vadd.f32 %v2521, %v2825
        %v2827 = vpop.f32.mrb[0].mxu0
        %v2828 = vpop.f32.mrb[0].mxu0
        %v2829 = vadd.f32 %v2524, %v2828
        %v2830 = vpop.f32.mrb[0].mxu0
        %2831 = vmatprep.mubr.bf16.mxu0 %v1986
        %2832 = vmatmul.mubr.bf16.gmra.mrb[0].mxu0 %v1985
        %v2833 = vpop.f32.mrb[0].mxu0
        %v2834 = vadd.f32 %v2529, %v2833
        %v2835 = vpop.f32.mrb[0].mxu0
        %v2836 = vpop.f32.mrb[0].mxu0
        %v2837 = vadd.f32 %v2532, %v2836
        %v2838 = vpop.f32.mrb[0].mxu0
        %2839 = vmatprep.mubr.bf16.mxu0 %v1989
        %2840 = vmatmul.mubr.bf16.gmra.mrb[0].mxu0 %v1988
        %v2841 = vpop.f32.mrb[0].mxu0
        %v2842 = vadd.f32 %v2537, %v2841
        %v2843 = vpop.f32.mrb[0].mxu0
        %v2844 = vpop.f32.mrb[0].mxu0
        %v2845 = vadd.f32 %v2540, %v2844
        %v2846 = vpop.f32.mrb[0].mxu0
        %2847 = vmatprep.mubr.bf16.mxu0 %v1992
        %2848 = vmatmul.mubr.bf16.gmra.mrb[0].mxu0 %v1991
        %v2849 = vpop.f32.mrb[0].mxu0
        %v2850 = vadd.f32 %v2545, %v2849
        %v2851 = vpop.f32.mrb[0].mxu0
        %v2852 = vpop.f32.mrb[0].mxu0
        %v2853 = vadd.f32 %v2548, %v2852
        %v2854 = vpop.f32.mrb[0].mxu0
        %2855 = vmatprep.mubr.bf16.mxu0 %v1995
        %2856 = vmatmul.mubr.bf16.gmra.mrb[0].mxu0 %v1994
        %v2857 = vpop.f32.mrb[0].mxu0
        %v2858 = vadd.f32 %v2553, %v2857
        %v2859 = vpop.f32.mrb[0].mxu0
        %v2860 = vpop.f32.mrb[0].mxu0
        %v2861 = vadd.f32 %v2556, %v2860
        %v2862 = vpop.f32.mrb[0].mxu0
        %2863 = vmatprep.mubr.bf16.mxu0 %v1998
        %2864 = vmatmul.mubr.bf16.gmra.mrb[0].mxu0 %v1997
        %v2865 = vpop.f32.mrb[0].mxu0
        %v2866 = vadd.f32 %v2561, %v2865
        %v2867 = vpop.f32.mrb[0].mxu0
        %v2868 = vpop.f32.mrb[0].mxu0
        %v2869 = vadd.f32 %v2564, %v2868
        %v2870 = vpop.f32.mrb[0].mxu0
        %2871 = vmatprep.mubr.bf16.mxu0 %v2001
        %2872 = vmatmul.mubr.bf16.gmra.mrb[0].mxu0 %v2000
        %v2873 = vpop.f32.mrb[0].mxu0
        %v2874 = vadd.f32 %v2569, %v2873
        %v2875 = vpop.f32.mrb[0].mxu0
        %v2876 = vpop.f32.mrb[0].mxu0
        %v2877 = vadd.f32 %v2572, %v2876
        %v2878 = vpop.f32.mrb[0].mxu0
        %2879 = vmatprep.mubr.bf16.mxu0 %v2004
        %2880 = vmatmul.mubr.bf16.gmra.mrb[0].mxu0 %v2003
        %v2881 = vpop.f32.mrb[0].mxu0
        %v2882 = vadd.f32 %v2577, %v2881
        %v2883 = vpop.f32.mrb[0].mxu0
        %v2884 = vpop.f32.mrb[0].mxu0
        %v2885 = vadd.f32 %v2580, %v2884
        %v2886 = vpop.f32.mrb[0].mxu0
        %2887 = vmatprep.mubr.bf16.mxu0 %v2007
        %2888 = vmatmul.mubr.bf16.gmra.mrb[0].mxu0 %v2006
        %v2889 = vpop.f32.mrb[0].mxu0
        %v2890 = vadd.f32 %v2585, %v2889
        %v2891 = vpop.f32.mrb[0].mxu0
        %v2892 = vpop.f32.mrb[0].mxu0
        %v2893 = vadd.f32 %v2588, %v2892
        %v2894 = vpop.f32.mrb[0].mxu0
        %2895 = vmatprep.mubr.bf16.mxu0 %v2010
        %2896 = vmatmul.mubr.bf16.gmra.mrb[0].mxu0 %v2009
        %v2897 = vpop.f32.mrb[0].mxu0
        %v2898 = vadd.f32 %v2593, %v2897
        %v2899 = vpop.f32.mrb[0].mxu0
        %v2900 = vpop.f32.mrb[0].mxu0
        %v2901 = vadd.f32 %v2596, %v2900
        %v2902 = vpop.f32.mrb[0].mxu0
        %2903 = vmatprep.mubr.bf16.mxu0 %v2013
        %2904 = vmatmul.mubr.bf16.gmra.mrb[0].mxu0 %v2012
        %v2905 = vpop.f32.mrb[0].mxu0
        %v2906 = vadd.f32 %v2601, %v2905
        %v2907 = vpop.f32.mrb[0].mxu0
        %v2908 = vpop.f32.mrb[0].mxu0
        %v2909 = vadd.f32 %v2604, %v2908
        %v2910 = vpop.f32.mrb[0].mxu0
        %2911 = vmatprep.mubr.bf16.mxu0 %v2016
        %2912 = vmatmul.mubr.bf16.gmra.mrb[0].mxu0 %v2015
        %v2913 = vpop.f32.mrb[0].mxu0
        %v2914 = vadd.f32 %v2609, %v2913
        %v2915 = vpop.f32.mrb[0].mxu0
        %v2916 = vpop.f32.mrb[0].mxu0
        %v2917 = vadd.f32 %v2612, %v2916
        %v2918 = vpop.f32.mrb[0].mxu0
        %2919 = vmatprep.mubr.bf16.mxu0 %v2019
        %2920 = vmatmul.mubr.bf16.gmra.mrb[0].mxu0 %v2018
        %v2921 = vpop.f32.mrb[0].mxu0
        %v2922 = vadd.f32 %v2617, %v2921
        %v2923 = vpop.f32.mrb[0].mxu0
        %v2924 = vpop.f32.mrb[0].mxu0
        %v2925 = vadd.f32 %v2620, %v2924
        %v2926 = vpop.f32.mrb[0].mxu0
        %2927 = vmatprep.mubr.bf16.mxu0 %v2022
        %2928 = vmatmul.mubr.bf16.gmra.mrb[0].mxu0 %v2021
        %v2929 = vpop.f32.mrb[0].mxu0
        %v2930 = vadd.f32 %v2625, %v2929
        %v2931 = vpop.f32.mrb[0].mxu0
        %v2932 = vpop.f32.mrb[0].mxu0
        %v2933 = vadd.f32 %v2628, %v2932
        %v2934 = vpop.f32.mrb[0].mxu0
        %2935 = vmatprep.mubr.bf16.mxu0 %v2025
        %2936 = vmatmul.mubr.bf16.gmra.mrb[0].mxu0 %v2024
        %v2937 = vpop.f32.mrb[0].mxu0
        %v2938 = vadd.f32 %v2633, %v2937
        %v2939 = vpop.f32.mrb[0].mxu0
        %v2940 = vpop.f32.mrb[0].mxu0
        %v2941 = vadd.f32 %v2636, %v2940
        %v2942 = vpop.f32.mrb[0].mxu0
        %2943 = vdwg.mxu0
        %2944 = vmatprep.subr.bf16.mxu0 0
        %2945 = vmatpush1.bf16.msra.mxu0 %v2751
        %2946 = vmatprep.subr.bf16.mxu0 0
        %2947 = vmatpush1.bf16.msra.mxu0 %v2752
        %2948 = vmatprep.subr.bf16.mxu0 0
        %2949 = vmatpush1.bf16.msra.mxu0 %v2753
        %2950 = vmatprep.subr.bf16.mxu0 0
        %2951 = vmatpush1.bf16.msra.mxu0 %v2754
        %2952 = vmatprep.subr.bf16.mxu0 0
        %2953 = vmatpush1.bf16.msra.mxu0 %v2755
        %2954 = vmatprep.subr.bf16.mxu0 0
        %2955 = vmatpush1.bf16.msra.mxu0 %v2756
        %2956 = vmatprep.subr.bf16.mxu0 0
        %2957 = vmatpush1.bf16.msra.mxu0 %v2757
        %2958 = vmatprep.subr.bf16.mxu0 0
        %2959 = vmatpush1.bf16.msra.mxu0 %v2758
        %2960 = vmatprep.subr.bf16.mxu0 0
        %2961 = vmatpush1.bf16.msra.mxu0 0
        %2962 = vmatprep.subr.bf16.mxu0 0
        %2963 = vmatpush1.bf16.msra.mxu0 0
        %2964 = vmatprep.subr.bf16.mxu0 0
        %2965 = vmatpush1.bf16.msra.mxu0 0
        %2966 = vmatprep.subr.bf16.mxu0 0
        %2967 = vmatpush1.bf16.msra.mxu0 0
        %2968 = vmatprep.subr.bf16.mxu0 0
        %2969 = vmatpush1.bf16.msra.mxu0 0
        %2970 = vmatprep.subr.bf16.mxu0 0
        %2971 = vmatpush1.bf16.msra.mxu0 0
        %2972 = vmatprep.subr.bf16.mxu0 0
        %2973 = vmatpush1.bf16.msra.mxu0 0
        %2974 = vmatprep.subr.bf16.mxu0 0
        %2975 = vmatpush1.bf16.msra.mxu0 0
        %2976 = vmatprep.mubr.bf16.mxu0 0
        %2977 = vmatmul.mubr.bf16.gmra.mrb[0].mxu0 %v1981
        %v2978 = vpop.f32.mrb[0].mxu0
        %v2979 = vadd.f32 %v2818, %v2978
        %v2980 = vpop.f32.mrb[0].mxu0
        %v2981 = vpop.f32.mrb[0].mxu0
        %v2982 = vadd.f32 %v2821, %v2981
        %v2983 = vpop.f32.mrb[0].mxu0
        %2984 = vmatprep.mubr.bf16.mxu0 0
        %2985 = vmatmul.mubr.bf16.gmra.mrb[0].mxu0 %v1984
        %v2986 = vpop.f32.mrb[0].mxu0
        %v2987 = vadd.f32 %v2826, %v2986
        %v2988 = vpop.f32.mrb[0].mxu0
        %v2989 = vpop.f32.mrb[0].mxu0
        %v2990 = vadd.f32 %v2829, %v2989
        %v2991 = vpop.f32.mrb[0].mxu0
        %2992 = vmatprep.mubr.bf16.mxu0 0
        %2993 = vmatmul.mubr.bf16.gmra.mrb[0].mxu0 %v1987
        %v2994 = vpop.f32.mrb[0].mxu0
        %v2995 = vadd.f32 %v2834, %v2994
        %v2996 = vpop.f32.mrb[0].mxu0
        %v2997 = vpop.f32.mrb[0].mxu0
        %v2998 = vadd.f32 %v2837, %v2997
        %v2999 = vpop.f32.mrb[0].mxu0
        %3000 = vmatprep.mubr.bf16.mxu0 0
        %3001 = vmatmul.mubr.bf16.gmra.mrb[0].mxu0 %v1990
        %v3002 = vpop.f32.mrb[0].mxu0
        %v3003 = vadd.f32 %v2842, %v3002
        %v3004 = vpop.f32.mrb[0].mxu0
        %v3005 = vpop.f32.mrb[0].mxu0
        %v3006 = vadd.f32 %v2845, %v3005
        %v3007 = vpop.f32.mrb[0].mxu0
        %3008 = vmatprep.mubr.bf16.mxu0 0
        %3009 = vmatmul.mubr.bf16.gmra.mrb[0].mxu0 %v1993
        %v3010 = vpop.f32.mrb[0].mxu0
        %v3011 = vadd.f32 %v2850, %v3010
        %v3012 = vpop.f32.mrb[0].mxu0
        %v3013 = vpop.f32.mrb[0].mxu0
        %v3014 = vadd.f32 %v2853, %v3013
        %v3015 = vpop.f32.mrb[0].mxu0
        %3016 = vmatprep.mubr.bf16.mxu0 0
        %3017 = vmatmul.mubr.bf16.gmra.mrb[0].mxu0 %v1996
        %v3018 = vpop.f32.mrb[0].mxu0
        %v3019 = vadd.f32 %v2858, %v3018
        %v3020 = vpop.f32.mrb[0].mxu0
        %v3021 = vpop.f32.mrb[0].mxu0
        %v3022 = vadd.f32 %v2861, %v3021
        %v3023 = vpop.f32.mrb[0].mxu0
        %3024 = vmatprep.mubr.bf16.mxu0 0
        %3025 = vmatmul.mubr.bf16.gmra.mrb[0].mxu0 %v1999
        %v3026 = vpop.f32.mrb[0].mxu0
        %v3027 = vadd.f32 %v2866, %v3026
        %v3028 = vpop.f32.mrb[0].mxu0
        %v3029 = vpop.f32.mrb[0].mxu0
        %v3030 = vadd.f32 %v2869, %v3029
        %v3031 = vpop.f32.mrb[0].mxu0
        %3032 = vmatprep.mubr.bf16.mxu0 0
        %3033 = vmatmul.mubr.bf16.gmra.mrb[0].mxu0 %v2002
        %v3034 = vpop.f32.mrb[0].mxu0
        %v3035 = vadd.f32 %v2874, %v3034
        %v3036 = vpop.f32.mrb[0].mxu0
        %v3037 = vpop.f32.mrb[0].mxu0
        %v3038 = vadd.f32 %v2877, %v3037
        %v3039 = vpop.f32.mrb[0].mxu0
        %3040 = vmatprep.mubr.bf16.mxu0 0
        %3041 = vmatmul.mubr.bf16.gmra.mrb[0].mxu0 %v2005
        %v3042 = vpop.f32.mrb[0].mxu0
        %v3043 = vadd.f32 %v2882, %v3042
        %v3044 = vpop.f32.mrb[0].mxu0
        %v3045 = vpop.f32.mrb[0].mxu0
        %v3046 = vadd.f32 %v2885, %v3045
        %v3047 = vpop.f32.mrb[0].mxu0
        %3048 = vmatprep.mubr.bf16.mxu0 0
        %3049 = vmatmul.mubr.bf16.gmra.mrb[0].mxu0 %v2008
        %v3050 = vpop.f32.mrb[0].mxu0
        %v3051 = vadd.f32 %v2890, %v3050
        %v3052 = vpop.f32.mrb[0].mxu0
        %v3053 = vpop.f32.mrb[0].mxu0
        %v3054 = vadd.f32 %v2893, %v3053
        %v3055 = vpop.f32.mrb[0].mxu0
        %3056 = vmatprep.mubr.bf16.mxu0 0
        %3057 = vmatmul.mubr.bf16.gmra.mrb[0].mxu0 %v2011
        %v3058 = vpop.f32.mrb[0].mxu0
        %v3059 = vadd.f32 %v2898, %v3058
        %v3060 = vpop.f32.mrb[0].mxu0
        %v3061 = vpop.f32.mrb[0].mxu0
        %v3062 = vadd.f32 %v2901, %v3061
        %v3063 = vpop.f32.mrb[0].mxu0
        %3064 = vmatprep.mubr.bf16.mxu0 0
        %3065 = vmatmul.mubr.bf16.gmra.mrb[0].mxu0 %v2014
        %v3066 = vpop.f32.mrb[0].mxu0
        %v3067 = vadd.f32 %v2906, %v3066
        %v3068 = vpop.f32.mrb[0].mxu0
        %v3069 = vpop.f32.mrb[0].mxu0
        %v3070 = vadd.f32 %v2909, %v3069
        %v3071 = vpop.f32.mrb[0].mxu0
        %3072 = vmatprep.mubr.bf16.mxu0 0
        %3073 = vmatmul.mubr.bf16.gmra.mrb[0].mxu0 %v2017
        %v3074 = vpop.f32.mrb[0].mxu0
        %v3075 = vadd.f32 %v2914, %v3074
        %v3076 = vpop.f32.mrb[0].mxu0
        %v3077 = vpop.f32.mrb[0].mxu0
        %v3078 = vadd.f32 %v2917, %v3077
        %v3079 = vpop.f32.mrb[0].mxu0
        %3080 = vmatprep.mubr.bf16.mxu0 0
        %3081 = vmatmul.mubr.bf16.gmra.mrb[0].mxu0 %v2020
        %v3082 = vpop.f32.mrb[0].mxu0
        %v3083 = vadd.f32 %v2922, %v3082
        %v3084 = vpop.f32.mrb[0].mxu0
        %v3085 = vpop.f32.mrb[0].mxu0
        %v3086 = vadd.f32 %v2925, %v3085
        %v3087 = vpop.f32.mrb[0].mxu0
        %3088 = vmatprep.mubr.bf16.mxu0 0
        %3089 = vmatmul.mubr.bf16.gmra.mrb[0].mxu0 %v2023
        %v3090 = vpop.f32.mrb[0].mxu0
        %v3091 = vadd.f32 %v2930, %v3090
        %v3092 = vpop.f32.mrb[0].mxu0
        %v3093 = vpop.f32.mrb[0].mxu0
        %v3094 = vadd.f32 %v2933, %v3093
        %v3095 = vpop.f32.mrb[0].mxu0
        %3096 = vmatprep.mubr.bf16.mxu0 0
        %3097 = vmatmul.mubr.bf16.gmra.mrb[0].mxu0 %v2026
        %v3098 = vpop.f32.mrb[0].mxu0
        %v3099 = vadd.f32 %v2938, %v3098
        %v3100 = vpop.f32.mrb[0].mxu0
        %v3101 = vpop.f32.mrb[0].mxu0
        %v3102 = vadd.f32 %v2941, %v3101
        %v3103 = vpop.f32.mrb[0].mxu0
        %3104 = vdwg.mxu0
        %s3105 = scalar_lea.vmem [#allocation2], 48
        %v3106 = vld [vmem:[%s3105] sm:$0xff]
        %v3107 = vld [vmem:[%s3105 + $0x8] sm:$0xff]
        %v3108 = vld [vmem:[%s3105 + $0x10] sm:$0xff]
        %v3109 = vld [vmem:[%s3105 + $0x18] sm:$0xff]
        %v3110 = vld [vmem:[%s3105 + $0x20] sm:$0xff]
        %v3111 = vld [vmem:[%s3105 + $0x28] sm:$0xff]
        %v3112 = vld [vmem:[%s3105 + $0x30] sm:$0xff]
        %v3113 = vld [vmem:[%s3105 + $0x38] sm:$0xff]
        %v3114 = vld [vmem:[%s3105 + $0x40] sm:$0xff]
        %v3115 = vld [vmem:[%s3105 + $0x48] sm:$0xff]
        %v3116 = vld [vmem:[%s3105 + $0x50] sm:$0xff]
        %v3117 = vld [vmem:[%s3105 + $0x58] sm:$0xff]
        %v3118 = vld [vmem:[%s3105 + $0x60] sm:$0xff]
        %v3119 = vld [vmem:[%s3105 + $0x68] sm:$0xff]
        %v3120 = vld [vmem:[%s3105 + $0x70] sm:$0xff]
        %v3121 = vld [vmem:[%s3105 + $0x78] sm:$0xff]
        %v3122 = vld [vmem:[%s3105 + $0x80] sm:$0xff]
        %v3123 = vld [vmem:[%s3105 + $0x88] sm:$0xff]
        %v3124 = vld [vmem:[%s3105 + $0x90] sm:$0xff]
        %v3125 = vld [vmem:[%s3105 + $0x98] sm:$0xff]
        %v3126 = vld [vmem:[%s3105 + $0xa0] sm:$0xff]
        %v3127 = vld [vmem:[%s3105 + $0xa8] sm:$0xff]
        %v3128 = vld [vmem:[%s3105 + $0xb0] sm:$0xff]
        %v3129 = vld [vmem:[%s3105 + $0xb8] sm:$0xff]
        %v3130 = vld [vmem:[%s3105 + $0xc0] sm:$0xff]
        %v3131 = vld [vmem:[%s3105 + $0xc8] sm:$0xff]
        %v3132 = vld [vmem:[%s3105 + $0xd0] sm:$0xff]
        %v3133 = vld [vmem:[%s3105 + $0xd8] sm:$0xff]
        %v3134 = vld [vmem:[%s3105 + $0xe0] sm:$0xff]
        %v3135 = vld [vmem:[%s3105 + $0xe8] sm:$0xff]
        %v3136 = vld [vmem:[%s3105 + $0xf0] sm:$0xff]
        %v3137 = vld [vmem:[%s3105 + $0xf8] sm:$0xff]
        %v3138 = vld [vmem:[%s3105 + $0x100] sm:$0xff]
        %v3139 = vld [vmem:[%s3105 + $0x108] sm:$0xff]
        %v3140 = vld [vmem:[%s3105 + $0x110] sm:$0xff]
        %v3141 = vld [vmem:[%s3105 + $0x118] sm:$0xff]
        %v3142 = vld [vmem:[%s3105 + $0x120] sm:$0xff]
        %v3143 = vld [vmem:[%s3105 + $0x128] sm:$0xff]
        %v3144 = vld [vmem:[%s3105 + $0x130] sm:$0xff]
        %v3145 = vld [vmem:[%s3105 + $0x138] sm:$0xff]
        %v3146 = vld [vmem:[%s3105 + $0x140] sm:$0xff]
        %v3147 = vld [vmem:[%s3105 + $0x148] sm:$0xff]
        %v3148 = vld [vmem:[%s3105 + $0x150] sm:$0xff]
        %v3149 = vld [vmem:[%s3105 + $0x158] sm:$0xff]
        %v3150 = vld [vmem:[%s3105 + $0x160] sm:$0xff]
        %v3151 = vld [vmem:[%s3105 + $0x168] sm:$0xff]
        %v3152 = vld [vmem:[%s3105 + $0x170] sm:$0xff]
        %v3153 = vld [vmem:[%s3105 + $0x178] sm:$0xff]
        %s3154 = scalar_lea.vmem [#allocation9], 384
        %v3155 = vld [vmem:[%s3154] sm:$0xf]
        %v3156 = vld [vmem:[%s3154 + $0x4] sm:$0xf]
        %v3157 = vld [vmem:[%s3154 + $0x8] sm:$0xf]
        %v3158 = vld [vmem:[%s3154 + $0xc] sm:$0xf]
        %v3159 = vld [vmem:[%s3154 + $0x10] sm:$0xf]
        %v3160 = vld [vmem:[%s3154 + $0x14] sm:$0xf]
        %v3161 = vld [vmem:[%s3154 + $0x18] sm:$0xf]
        %v3162 = vld [vmem:[%s3154 + $0x1c] sm:$0xf]
        %v3163 = vld [vmem:[%s3154 + $0x20] sm:$0xf]
        %v3164 = vld [vmem:[%s3154 + $0x24] sm:$0xf]
        %v3165 = vld [vmem:[%s3154 + $0x28] sm:$0xf]
        %v3166 = vld [vmem:[%s3154 + $0x2c] sm:$0xf]
        %v3167 = vld [vmem:[%s3154 + $0x30] sm:$0xf]
        %v3168 = vld [vmem:[%s3154 + $0x34] sm:$0xf]
        %v3169 = vld [vmem:[%s3154 + $0x38] sm:$0xf]
        %v3170 = vld [vmem:[%s3154 + $0x3c] sm:$0xf]
        %v3171 = vld [vmem:[%s3154 + $0x40] sm:$0xf]
        %v3172 = vld [vmem:[%s3154 + $0x44] sm:$0xf]
        %v3173 = vld [vmem:[%s3154 + $0x48] sm:$0xf]
        %v3174 = vld [vmem:[%s3154 + $0x4c] sm:$0xf]
        %v3175 = vld [vmem:[%s3154 + $0x50] sm:$0xf]
        %v3176 = vld [vmem:[%s3154 + $0x54] sm:$0xf]
        %v3177 = vld [vmem:[%s3154 + $0x58] sm:$0xf]
        %v3178 = vld [vmem:[%s3154 + $0x5c] sm:$0xf]
        %v3179 = vld [vmem:[%s3154 + $0x60] sm:$0xf]
        %v3180 = vld [vmem:[%s3154 + $0x64] sm:$0xf]
        %v3181 = vld [vmem:[%s3154 + $0x68] sm:$0xf]
        %v3182 = vld [vmem:[%s3154 + $0x6c] sm:$0xf]
        %v3183 = vld [vmem:[%s3154 + $0x70] sm:$0xf]
        %v3184 = vld [vmem:[%s3154 + $0x74] sm:$0xf]
        %v3185 = vld [vmem:[%s3154 + $0x78] sm:$0xf]
        %v3186 = vld [vmem:[%s3154 + $0x7c] sm:$0xf]
        %v3187 = vld [vmem:[%s3154 + $0x80] sm:$0xf]
        %v3188 = vld [vmem:[%s3154 + $0x84] sm:$0xf]
        %v3189 = vld [vmem:[%s3154 + $0x88] sm:$0xf]
        %v3190 = vld [vmem:[%s3154 + $0x8c] sm:$0xf]
        %v3191 = vld [vmem:[%s3154 + $0x90] sm:$0xf]
        %v3192 = vld [vmem:[%s3154 + $0x94] sm:$0xf]
        %v3193 = vld [vmem:[%s3154 + $0x98] sm:$0xf]
        %v3194 = vld [vmem:[%s3154 + $0x9c] sm:$0xf]
        %v3195 = vld [vmem:[%s3154 + $0xa0] sm:$0xf]
        %v3196 = vld [vmem:[%s3154 + $0xa4] sm:$0xf]
        %v3197 = vld [vmem:[%s3154 + $0xa8] sm:$0xf]
        %v3198 = vld [vmem:[%s3154 + $0xac] sm:$0xf]
        %v3199 = vld [vmem:[%s3154 + $0xb0] sm:$0xf]
        %v3200 = vld [vmem:[%s3154 + $0xb4] sm:$0xf]
        %v3201 = vld [vmem:[%s3154 + $0xb8] sm:$0xf]
        %v3202 = vld [vmem:[%s3154 + $0xbc] sm:$0xf]
        %v3251 = vunpack.c.l.b16 %v3155
        %v3252 = vunpack.c.l.b16 %v3156
        %v3253 = vunpack.c.l.b16 %v3157
        %v3254 = vunpack.c.l.b16 %v3158
        %v3255 = vunpack.c.l.b16 %v3159
        %v3256 = vunpack.c.l.b16 %v3160
        %v3257 = vunpack.c.l.b16 %v3161
        %v3258 = vunpack.c.l.b16 %v3162
        %v3259 = vunpack.c.l.b16 %v3163
        %v3260 = vunpack.c.l.b16 %v3164
        %v3261 = vunpack.c.l.b16 %v3165
        %v3262 = vunpack.c.l.b16 %v3166
        %v3263 = vunpack.c.l.b16 %v3167
        %v3264 = vunpack.c.l.b16 %v3168
        %v3265 = vunpack.c.l.b16 %v3169
        %v3266 = vunpack.c.l.b16 %v3170
        %v3267 = vunpack.c.l.b16 %v3171
        %v3268 = vunpack.c.l.b16 %v3172
        %v3269 = vunpack.c.l.b16 %v3173
        %v3270 = vunpack.c.l.b16 %v3174
        %v3271 = vunpack.c.l.b16 %v3175
        %v3272 = vunpack.c.l.b16 %v3176
        %v3273 = vunpack.c.l.b16 %v3177
        %v3274 = vunpack.c.l.b16 %v3178
        %v3275 = vunpack.c.l.b16 %v3179
        %v3276 = vunpack.c.l.b16 %v3180
        %v3277 = vunpack.c.l.b16 %v3181
        %v3278 = vunpack.c.l.b16 %v3182
        %v3279 = vunpack.c.l.b16 %v3183
        %v3280 = vunpack.c.l.b16 %v3184
        %v3281 = vunpack.c.l.b16 %v3185
        %v3282 = vunpack.c.l.b16 %v3186
        %v3283 = vunpack.c.l.b16 %v3187
        %v3284 = vunpack.c.l.b16 %v3188
        %v3285 = vunpack.c.l.b16 %v3189
        %v3286 = vunpack.c.l.b16 %v3190
        %v3287 = vunpack.c.l.b16 %v3191
        %v3288 = vunpack.c.l.b16 %v3192
        %v3289 = vunpack.c.l.b16 %v3193
        %v3290 = vunpack.c.l.b16 %v3194
        %v3291 = vunpack.c.l.b16 %v3195
        %v3292 = vunpack.c.l.b16 %v3196
        %v3293 = vunpack.c.l.b16 %v3197
        %v3294 = vunpack.c.l.b16 %v3198
        %v3295 = vunpack.c.l.b16 %v3199
        %v3296 = vunpack.c.l.b16 %v3200
        %v3297 = vunpack.c.l.b16 %v3201
        %v3298 = vunpack.c.l.b16 %v3202
        %v3299 = vpack.c.b16 %v3252, %v3251
        %v3300 = vpack.c.b16 %v3254, %v3253
        %v3301 = vpack.c.b16 %v3256, %v3255
        %v3302 = vpack.c.b16 %v3258, %v3257
        %v3303 = vpack.c.b16 %v3260, %v3259
        %v3304 = vpack.c.b16 %v3262, %v3261
        %v3305 = vpack.c.b16 %v3264, %v3263
        %v3306 = vpack.c.b16 %v3266, %v3265
        %v3307 = vpack.c.b16 %v3268, %v3267
        %v3308 = vpack.c.b16 %v3270, %v3269
        %v3309 = vpack.c.b16 %v3272, %v3271
        %v3310 = vpack.c.b16 %v3274, %v3273
        %v3311 = vpack.c.b16 %v3276, %v3275
        %v3312 = vpack.c.b16 %v3278, %v3277
        %v3313 = vpack.c.b16 %v3280, %v3279
        %v3314 = vpack.c.b16 %v3282, %v3281
        %v3315 = vpack.c.b16 %v3284, %v3283
        %v3316 = vpack.c.b16 %v3286, %v3285
        %v3317 = vpack.c.b16 %v3288, %v3287
        %v3318 = vpack.c.b16 %v3290, %v3289
        %v3319 = vpack.c.b16 %v3292, %v3291
        %v3320 = vpack.c.b16 %v3294, %v3293
        %v3321 = vpack.c.b16 %v3296, %v3295
        %v3322 = vpack.c.b16 %v3298, %v3297
        %3347 = vmatprep.subr.bf16.mxu0 0
        %3348 = vmatpush1.bf16.msra.mxu0 %v3299
        %3349 = vmatprep.subr.bf16.mxu0 0
        %3350 = vmatpush1.bf16.msra.mxu0 %v3300
        %3351 = vmatprep.subr.bf16.mxu0 0
        %3352 = vmatpush1.bf16.msra.mxu0 %v3301
        %3353 = vmatprep.subr.bf16.mxu0 0
        %3354 = vmatpush1.bf16.msra.mxu0 %v3302
        %3355 = vmatprep.subr.bf16.mxu0 0
        %3356 = vmatpush1.bf16.msra.mxu0 %v3303
        %3357 = vmatprep.subr.bf16.mxu0 0
        %3358 = vmatpush1.bf16.msra.mxu0 %v3304
        %3359 = vmatprep.subr.bf16.mxu0 0
        %3360 = vmatpush1.bf16.msra.mxu0 %v3305
        %3361 = vmatprep.subr.bf16.mxu0 0
        %3362 = vmatpush1.bf16.msra.mxu0 %v3306
        %3363 = vmatprep.subr.bf16.mxu0 0
        %3364 = vmatpush1.bf16.msra.mxu0 %v3307
        %3365 = vmatprep.subr.bf16.mxu0 0
        %3366 = vmatpush1.bf16.msra.mxu0 %v3308
        %3367 = vmatprep.subr.bf16.mxu0 0
        %3368 = vmatpush1.bf16.msra.mxu0 %v3309
        %3369 = vmatprep.subr.bf16.mxu0 0
        %3370 = vmatpush1.bf16.msra.mxu0 %v3310
        %3371 = vmatprep.subr.bf16.mxu0 0
        %3372 = vmatpush1.bf16.msra.mxu0 %v3311
        %3373 = vmatprep.subr.bf16.mxu0 0
        %3374 = vmatpush1.bf16.msra.mxu0 %v3312
        %3375 = vmatprep.subr.bf16.mxu0 0
        %3376 = vmatpush1.bf16.msra.mxu0 %v3313
        %3377 = vmatprep.subr.bf16.mxu0 0
        %3378 = vmatpush1.bf16.msra.mxu0 %v3314
        %3379 = vmatprep.mubr.bf16.mxu0 %v3107
        %3380 = vmatmul.mubr.bf16.gmra.mrb[0].mxu0 %v3106
        %v3381 = vpop.f32.mrb[0].mxu0
        %v3382 = vadd.f32 0.0, %v3381
        %v3383 = vpop.f32.mrb[0].mxu0
        %v3384 = vpop.f32.mrb[0].mxu0
        %v3385 = vadd.f32 0.0, %v3384
        %v3386 = vpop.f32.mrb[0].mxu0
        %3387 = vmatprep.mubr.bf16.mxu0 %v3110
        %3388 = vmatmul.mubr.bf16.gmra.mrb[0].mxu0 %v3109
        %v3389 = vpop.f32.mrb[0].mxu0
        %v3390 = vadd.f32 0.0, %v3389
        %v3391 = vpop.f32.mrb[0].mxu0
        %v3392 = vpop.f32.mrb[0].mxu0
        %v3393 = vadd.f32 0.0, %v3392
        %v3394 = vpop.f32.mrb[0].mxu0
        %3395 = vmatprep.mubr.bf16.mxu0 %v3113
        %3396 = vmatmul.mubr.bf16.gmra.mrb[0].mxu0 %v3112
        %v3397 = vpop.f32.mrb[0].mxu0
        %v3398 = vadd.f32 0.0, %v3397
        %v3399 = vpop.f32.mrb[0].mxu0
        %v3400 = vpop.f32.mrb[0].mxu0
        %v3401 = vadd.f32 0.0, %v3400
        %v3402 = vpop.f32.mrb[0].mxu0
        %3403 = vmatprep.mubr.bf16.mxu0 %v3116
        %3404 = vmatmul.mubr.bf16.gmra.mrb[0].mxu0 %v3115
        %v3405 = vpop.f32.mrb[0].mxu0
        %v3406 = vadd.f32 0.0, %v3405
        %v3407 = vpop.f32.mrb[0].mxu0
        %v3408 = vpop.f32.mrb[0].mxu0
        %v3409 = vadd.f32 0.0, %v3408
        %v3410 = vpop.f32.mrb[0].mxu0
        %3411 = vmatprep.mubr.bf16.mxu0 %v3119
        %3412 = vmatmul.mubr.bf16.gmra.mrb[0].mxu0 %v3118
        %v3413 = vpop.f32.mrb[0].mxu0
        %v3414 = vadd.f32 0.0, %v3413
        %v3415 = vpop.f32.mrb[0].mxu0
        %v3416 = vpop.f32.mrb[0].mxu0
        %v3417 = vadd.f32 0.0, %v3416
        %v3418 = vpop.f32.mrb[0].mxu0
        %3419 = vmatprep.mubr.bf16.mxu0 %v3122
        %3420 = vmatmul.mubr.bf16.gmra.mrb[0].mxu0 %v3121
        %v3421 = vpop.f32.mrb[0].mxu0
        %v3422 = vadd.f32 0.0, %v3421
        %v3423 = vpop.f32.mrb[0].mxu0
        %v3424 = vpop.f32.mrb[0].mxu0
        %v3425 = vadd.f32 0.0, %v3424
        %v3426 = vpop.f32.mrb[0].mxu0
        %3427 = vmatprep.mubr.bf16.mxu0 %v3125
        %3428 = vmatmul.mubr.bf16.gmra.mrb[0].mxu0 %v3124
        %v3429 = vpop.f32.mrb[0].mxu0
        %v3430 = vadd.f32 0.0, %v3429
        %v3431 = vpop.f32.mrb[0].mxu0
        %v3432 = vpop.f32.mrb[0].mxu0
        %v3433 = vadd.f32 0.0, %v3432
        %v3434 = vpop.f32.mrb[0].mxu0
        %3435 = vmatprep.mubr.bf16.mxu0 %v3128
        %3436 = vmatmul.mubr.bf16.gmra.mrb[0].mxu0 %v3127
        %v3437 = vpop.f32.mrb[0].mxu0
        %v3438 = vadd.f32 0.0, %v3437
        %v3439 = vpop.f32.mrb[0].mxu0
        %v3440 = vpop.f32.mrb[0].mxu0
        %v3441 = vadd.f32 0.0, %v3440
        %v3442 = vpop.f32.mrb[0].mxu0
        %3443 = vmatprep.mubr.bf16.mxu0 %v3131
        %3444 = vmatmul.mubr.bf16.gmra.mrb[0].mxu0 %v3130
        %v3445 = vpop.f32.mrb[0].mxu0
        %v3446 = vadd.f32 0.0, %v3445
        %v3447 = vpop.f32.mrb[0].mxu0
        %v3448 = vpop.f32.mrb[0].mxu0
        %v3449 = vadd.f32 0.0, %v3448
        %v3450 = vpop.f32.mrb[0].mxu0
        %3451 = vmatprep.mubr.bf16.mxu0 %v3134
        %3452 = vmatmul.mubr.bf16.gmra.mrb[0].mxu0 %v3133
        %v3453 = vpop.f32.mrb[0].mxu0
        %v3454 = vadd.f32 0.0, %v3453
        %v3455 = vpop.f32.mrb[0].mxu0
        %v3456 = vpop.f32.mrb[0].mxu0
        %v3457 = vadd.f32 0.0, %v3456
        %v3458 = vpop.f32.mrb[0].mxu0
        %3459 = vmatprep.mubr.bf16.mxu0 %v3137
        %3460 = vmatmul.mubr.bf16.gmra.mrb[0].mxu0 %v3136
        %v3461 = vpop.f32.mrb[0].mxu0
        %v3462 = vadd.f32 0.0, %v3461
        %v3463 = vpop.f32.mrb[0].mxu0
        %v3464 = vpop.f32.mrb[0].mxu0
        %v3465 = vadd.f32 0.0, %v3464
        %v3466 = vpop.f32.mrb[0].mxu0
        %3467 = vmatprep.mubr.bf16.mxu0 %v3140
        %3468 = vmatmul.mubr.bf16.gmra.mrb[0].mxu0 %v3139
        %v3469 = vpop.f32.mrb[0].mxu0
        %v3470 = vadd.f32 0.0, %v3469
        %v3471 = vpop.f32.mrb[0].mxu0
        %v3472 = vpop.f32.mrb[0].mxu0
        %v3473 = vadd.f32 0.0, %v3472
        %v3474 = vpop.f32.mrb[0].mxu0
        %3475 = vmatprep.mubr.bf16.mxu0 %v3143
        %3476 = vmatmul.mubr.bf16.gmra.mrb[0].mxu0 %v3142
        %v3477 = vpop.f32.mrb[0].mxu0
        %v3478 = vadd.f32 0.0, %v3477
        %v3479 = vpop.f32.mrb[0].mxu0
        %v3480 = vpop.f32.mrb[0].mxu0
        %v3481 = vadd.f32 0.0, %v3480
        %v3482 = vpop.f32.mrb[0].mxu0
        %3483 = vmatprep.mubr.bf16.mxu0 %v3146
        %3484 = vmatmul.mubr.bf16.gmra.mrb[0].mxu0 %v3145
        %v3485 = vpop.f32.mrb[0].mxu0
        %v3486 = vadd.f32 0.0, %v3485
        %v3487 = vpop.f32.mrb[0].mxu0
        %v3488 = vpop.f32.mrb[0].mxu0
        %v3489 = vadd.f32 0.0, %v3488
        %v3490 = vpop.f32.mrb[0].mxu0
        %3491 = vmatprep.mubr.bf16.mxu0 %v3149
        %3492 = vmatmul.mubr.bf16.gmra.mrb[0].mxu0 %v3148
        %v3493 = vpop.f32.mrb[0].mxu0
        %v3494 = vadd.f32 0.0, %v3493
        %v3495 = vpop.f32.mrb[0].mxu0
        %v3496 = vpop.f32.mrb[0].mxu0
        %v3497 = vadd.f32 0.0, %v3496
        %v3498 = vpop.f32.mrb[0].mxu0
        %3499 = vmatprep.mubr.bf16.mxu0 %v3152
        %3500 = vmatmul.mubr.bf16.gmra.mrb[0].mxu0 %v3151
        %v3501 = vpop.f32.mrb[0].mxu0
        %v3502 = vadd.f32 0.0, %v3501
        %v3503 = vpop.f32.mrb[0].mxu0
        %v3504 = vpop.f32.mrb[0].mxu0
        %v3505 = vadd.f32 0.0, %v3504
        %v3506 = vpop.f32.mrb[0].mxu0
        %3507 = vdwg.mxu0
        %3508 = vmatprep.subr.bf16.mxu0 0
        %3509 = vmatpush1.bf16.msra.mxu0 %v3315
        %3510 = vmatprep.subr.bf16.mxu0 0
        %3511 = vmatpush1.bf16.msra.mxu0 %v3316
        %3512 = vmatprep.subr.bf16.mxu0 0
        %3513 = vmatpush1.bf16.msra.mxu0 %v3317
        %3514 = vmatprep.subr.bf16.mxu0 0
        %3515 = vmatpush1.bf16.msra.mxu0 %v3318
        %3516 = vmatprep.subr.bf16.mxu0 0
        %3517 = vmatpush1.bf16.msra.mxu0 %v3319
        %3518 = vmatprep.subr.bf16.mxu0 0
        %3519 = vmatpush1.bf16.msra.mxu0 %v3320
        %3520 = vmatprep.subr.bf16.mxu0 0
        %3521 = vmatpush1.bf16.msra.mxu0 %v3321
        %3522 = vmatprep.subr.bf16.mxu0 0
        %3523 = vmatpush1.bf16.msra.mxu0 %v3322
        %3524 = vmatprep.subr.bf16.mxu0 0
        %3525 = vmatpush1.bf16.msra.mxu0 0
        %3526 = vmatprep.subr.bf16.mxu0 0
        %3527 = vmatpush1.bf16.msra.mxu0 0
        %3528 = vmatprep.subr.bf16.mxu0 0
        %3529 = vmatpush1.bf16.msra.mxu0 0
        %3530 = vmatprep.subr.bf16.mxu0 0
        %3531 = vmatpush1.bf16.msra.mxu0 0
        %3532 = vmatprep.subr.bf16.mxu0 0
        %3533 = vmatpush1.bf16.msra.mxu0 0
        %3534 = vmatprep.subr.bf16.mxu0 0
        %3535 = vmatpush1.bf16.msra.mxu0 0
        %3536 = vmatprep.subr.bf16.mxu0 0
        %3537 = vmatpush1.bf16.msra.mxu0 0
        %3538 = vmatprep.subr.bf16.mxu0 0
        %3539 = vmatpush1.bf16.msra.mxu0 0
        %3540 = vmatprep.mubr.bf16.mxu0 0
        %3541 = vmatmul.mubr.bf16.gmra.mrb[0].mxu0 %v3108
        %v3542 = vpop.f32.mrb[0].mxu0
        %v3543 = vadd.f32 %v3382, %v3542
        %v3544 = vpop.f32.mrb[0].mxu0
        %v3545 = vpop.f32.mrb[0].mxu0
        %v3546 = vadd.f32 %v3385, %v3545
        %v3547 = vpop.f32.mrb[0].mxu0
        %3548 = vmatprep.mubr.bf16.mxu0 0
        %3549 = vmatmul.mubr.bf16.gmra.mrb[0].mxu0 %v3111
        %v3550 = vpop.f32.mrb[0].mxu0
        %v3551 = vadd.f32 %v3390, %v3550
        %v3552 = vpop.f32.mrb[0].mxu0
        %v3553 = vpop.f32.mrb[0].mxu0
        %v3554 = vadd.f32 %v3393, %v3553
        %v3555 = vpop.f32.mrb[0].mxu0
        %3556 = vmatprep.mubr.bf16.mxu0 0
        %3557 = vmatmul.mubr.bf16.gmra.mrb[0].mxu0 %v3114
        %v3558 = vpop.f32.mrb[0].mxu0
        %v3559 = vadd.f32 %v3398, %v3558
        %v3560 = vpop.f32.mrb[0].mxu0
        %v3561 = vpop.f32.mrb[0].mxu0
        %v3562 = vadd.f32 %v3401, %v3561
        %v3563 = vpop.f32.mrb[0].mxu0
        %3564 = vmatprep.mubr.bf16.mxu0 0
        %3565 = vmatmul.mubr.bf16.gmra.mrb[0].mxu0 %v3117
        %v3566 = vpop.f32.mrb[0].mxu0
        %v3567 = vadd.f32 %v3406, %v3566
        %v3568 = vpop.f32.mrb[0].mxu0
        %v3569 = vpop.f32.mrb[0].mxu0
        %v3570 = vadd.f32 %v3409, %v3569
        %v3571 = vpop.f32.mrb[0].mxu0
        %3572 = vmatprep.mubr.bf16.mxu0 0
        %3573 = vmatmul.mubr.bf16.gmra.mrb[0].mxu0 %v3120
        %v3574 = vpop.f32.mrb[0].mxu0
        %v3575 = vadd.f32 %v3414, %v3574
        %v3576 = vpop.f32.mrb[0].mxu0
        %v3577 = vpop.f32.mrb[0].mxu0
        %v3578 = vadd.f32 %v3417, %v3577
        %v3579 = vpop.f32.mrb[0].mxu0
        %3580 = vmatprep.mubr.bf16.mxu0 0
        %3581 = vmatmul.mubr.bf16.gmra.mrb[0].mxu0 %v3123
        %v3582 = vpop.f32.mrb[0].mxu0
        %v3583 = vadd.f32 %v3422, %v3582
        %v3584 = vpop.f32.mrb[0].mxu0
        %v3585 = vpop.f32.mrb[0].mxu0
        %v3586 = vadd.f32 %v3425, %v3585
        %v3587 = vpop.f32.mrb[0].mxu0
        %3588 = vmatprep.mubr.bf16.mxu0 0
        %3589 = vmatmul.mubr.bf16.gmra.mrb[0].mxu0 %v3126
        %v3590 = vpop.f32.mrb[0].mxu0
        %v3591 = vadd.f32 %v3430, %v3590
        %v3592 = vpop.f32.mrb[0].mxu0
        %v3593 = vpop.f32.mrb[0].mxu0
        %v3594 = vadd.f32 %v3433, %v3593
        %v3595 = vpop.f32.mrb[0].mxu0
        %3596 = vmatprep.mubr.bf16.mxu0 0
        %3597 = vmatmul.mubr.bf16.gmra.mrb[0].mxu0 %v3129
        %v3598 = vpop.f32.mrb[0].mxu0
        %v3599 = vadd.f32 %v3438, %v3598
        %v3600 = vpop.f32.mrb[0].mxu0
        %v3601 = vpop.f32.mrb[0].mxu0
        %v3602 = vadd.f32 %v3441, %v3601
        %v3603 = vpop.f32.mrb[0].mxu0
        %3604 = vmatprep.mubr.bf16.mxu0 0
        %3605 = vmatmul.mubr.bf16.gmra.mrb[0].mxu0 %v3132
        %v3606 = vpop.f32.mrb[0].mxu0
        %v3607 = vadd.f32 %v3446, %v3606
        %v3608 = vpop.f32.mrb[0].mxu0
        %v3609 = vpop.f32.mrb[0].mxu0
        %v3610 = vadd.f32 %v3449, %v3609
        %v3611 = vpop.f32.mrb[0].mxu0
        %3612 = vmatprep.mubr.bf16.mxu0 0
        %3613 = vmatmul.mubr.bf16.gmra.mrb[0].mxu0 %v3135
        %v3614 = vpop.f32.mrb[0].mxu0
        %v3615 = vadd.f32 %v3454, %v3614
        %v3616 = vpop.f32.mrb[0].mxu0
        %v3617 = vpop.f32.mrb[0].mxu0
        %v3618 = vadd.f32 %v3457, %v3617
        %v3619 = vpop.f32.mrb[0].mxu0
        %3620 = vmatprep.mubr.bf16.mxu0 0
        %3621 = vmatmul.mubr.bf16.gmra.mrb[0].mxu0 %v3138
        %v3622 = vpop.f32.mrb[0].mxu0
        %v3623 = vadd.f32 %v3462, %v3622
        %v3624 = vpop.f32.mrb[0].mxu0
        %v3625 = vpop.f32.mrb[0].mxu0
        %v3626 = vadd.f32 %v3465, %v3625
        %v3627 = vpop.f32.mrb[0].mxu0
        %3628 = vmatprep.mubr.bf16.mxu0 0
        %3629 = vmatmul.mubr.bf16.gmra.mrb[0].mxu0 %v3141
        %v3630 = vpop.f32.mrb[0].mxu0
        %v3631 = vadd.f32 %v3470, %v3630
        %v3632 = vpop.f32.mrb[0].mxu0
        %v3633 = vpop.f32.mrb[0].mxu0
        %v3634 = vadd.f32 %v3473, %v3633
        %v3635 = vpop.f32.mrb[0].mxu0
        %3636 = vmatprep.mubr.bf16.mxu0 0
        %3637 = vmatmul.mubr.bf16.gmra.mrb[0].mxu0 %v3144
        %v3638 = vpop.f32.mrb[0].mxu0
        %v3639 = vadd.f32 %v3478, %v3638
        %v3640 = vpop.f32.mrb[0].mxu0
        %v3641 = vpop.f32.mrb[0].mxu0
        %v3642 = vadd.f32 %v3481, %v3641
        %v3643 = vpop.f32.mrb[0].mxu0
        %3644 = vmatprep.mubr.bf16.mxu0 0
        %3645 = vmatmul.mubr.bf16.gmra.mrb[0].mxu0 %v3147
        %v3646 = vpop.f32.mrb[0].mxu0
        %v3647 = vadd.f32 %v3486, %v3646
        %v3648 = vpop.f32.mrb[0].mxu0
        %v3649 = vpop.f32.mrb[0].mxu0
        %v3650 = vadd.f32 %v3489, %v3649
        %v3651 = vpop.f32.mrb[0].mxu0
        %3652 = vmatprep.mubr.bf16.mxu0 0
        %3653 = vmatmul.mubr.bf16.gmra.mrb[0].mxu0 %v3150
        %v3654 = vpop.f32.mrb[0].mxu0
        %v3655 = vadd.f32 %v3494, %v3654
        %v3656 = vpop.f32.mrb[0].mxu0
        %v3657 = vpop.f32.mrb[0].mxu0
        %v3658 = vadd.f32 %v3497, %v3657
        %v3659 = vpop.f32.mrb[0].mxu0
        %3660 = vmatprep.mubr.bf16.mxu0 0
        %3661 = vmatmul.mubr.bf16.gmra.mrb[0].mxu0 %v3153
        %v3662 = vpop.f32.mrb[0].mxu0
        %v3663 = vadd.f32 %v3502, %v3662
        %v3664 = vpop.f32.mrb[0].mxu0
        %v3665 = vpop.f32.mrb[0].mxu0
        %v3666 = vadd.f32 %v3505, %v3665
        %v3667 = vpop.f32.mrb[0].mxu0
        %3668 = vdwg.mxu0
        %v3669 = vadd.f32 %v2979, %v3543
        %v3670 = vadd.f32 %v2982, %v3546
        %v3671 = vadd.f32 %v2987, %v3551
        %v3672 = vadd.f32 %v2990, %v3554
        %v3673 = vadd.f32 %v2995, %v3559
        %v3674 = vadd.f32 %v2998, %v3562
        %v3675 = vadd.f32 %v3003, %v3567
        %v3676 = vadd.f32 %v3006, %v3570
        %v3677 = vadd.f32 %v3011, %v3575
        %v3678 = vadd.f32 %v3014, %v3578
        %v3679 = vadd.f32 %v3019, %v3583
        %v3680 = vadd.f32 %v3022, %v3586
        %v3681 = vadd.f32 %v3027, %v3591
        %v3682 = vadd.f32 %v3030, %v3594
        %v3683 = vadd.f32 %v3035, %v3599
        %v3684 = vadd.f32 %v3038, %v3602
        %v3685 = vadd.f32 %v3043, %v3607
        %v3686 = vadd.f32 %v3046, %v3610
        %v3687 = vadd.f32 %v3051, %v3615
        %v3688 = vadd.f32 %v3054, %v3618
        %v3689 = vadd.f32 %v3059, %v3623
        %v3690 = vadd.f32 %v3062, %v3626
        %v3691 = vadd.f32 %v3067, %v3631
        %v3692 = vadd.f32 %v3070, %v3634
        %v3693 = vadd.f32 %v3075, %v3639
        %v3694 = vadd.f32 %v3078, %v3642
        %v3695 = vadd.f32 %v3083, %v3647
        %v3696 = vadd.f32 %v3086, %v3650
        %v3697 = vadd.f32 %v3091, %v3655
        %v3698 = vadd.f32 %v3094, %v3658
        %v3699 = vadd.f32 %v3099, %v3663
        %v3700 = vadd.f32 %v3102, %v3666
        %v3701 = vld [vmem:[%s5] sm:$0x1]
        %v3703 = vlaneseq
        %v3704 = vshrl.u32 %v3703, 7
        %v3705 = vsub.s32 0, %v3704
        %v3706 = vrot.slane %v3701, %v3705
        %v3708 = vadd.f32 %v3669, %v3706
        %v3709 = vadd.f32 %v3670, %v3706
        %v3710 = vadd.f32 %v3671, %v3706
        %v3711 = vadd.f32 %v3672, %v3706
        %v3712 = vadd.f32 %v3673, %v3706
        %v3713 = vadd.f32 %v3674, %v3706
        %v3714 = vadd.f32 %v3675, %v3706
        %v3715 = vadd.f32 %v3676, %v3706
        %v3716 = vadd.f32 %v3677, %v3706
        %v3717 = vadd.f32 %v3678, %v3706
        %v3718 = vadd.f32 %v3679, %v3706
        %v3719 = vadd.f32 %v3680, %v3706
        %v3720 = vadd.f32 %v3681, %v3706
        %v3721 = vadd.f32 %v3682, %v3706
        %v3722 = vadd.f32 %v3683, %v3706
        %v3723 = vadd.f32 %v3684, %v3706
        %v3724 = vadd.f32 %v3685, %v3706
        %v3725 = vadd.f32 %v3686, %v3706
        %v3726 = vadd.f32 %v3687, %v3706
        %v3727 = vadd.f32 %v3688, %v3706
        %v3728 = vadd.f32 %v3689, %v3706
        %v3729 = vadd.f32 %v3690, %v3706
        %v3730 = vadd.f32 %v3691, %v3706
        %v3731 = vadd.f32 %v3692, %v3706
        %v3732 = vadd.f32 %v3693, %v3706
        %v3733 = vadd.f32 %v3694, %v3706
        %v3734 = vadd.f32 %v3695, %v3706
        %v3735 = vadd.f32 %v3696, %v3706
        %v3736 = vadd.f32 %v3697, %v3706
        %v3737 = vadd.f32 %v3698, %v3706
        %v3738 = vadd.f32 %v3699, %v3706
        %v3739 = vadd.f32 %v3700, %v3706
        %v3740 = vmax.f32 %v3708, 0.0
        %v3741 = vmax.f32 %v3709, 0.0
        %v3742 = vmax.f32 %v3710, 0.0
        %v3743 = vmax.f32 %v3711, 0.0
        %v3744 = vmax.f32 %v3712, 0.0
        %v3745 = vmax.f32 %v3713, 0.0
        %v3746 = vmax.f32 %v3714, 0.0
        %v3747 = vmax.f32 %v3715, 0.0
        %v3748 = vmax.f32 %v3716, 0.0
        %v3749 = vmax.f32 %v3717, 0.0
        %v3750 = vmax.f32 %v3718, 0.0
        %v3751 = vmax.f32 %v3719, 0.0
        %v3752 = vmax.f32 %v3720, 0.0
        %v3753 = vmax.f32 %v3721, 0.0
        %v3754 = vmax.f32 %v3722, 0.0
        %v3755 = vmax.f32 %v3723, 0.0
        %v3756 = vmax.f32 %v3724, 0.0
        %v3757 = vmax.f32 %v3725, 0.0
        %v3758 = vmax.f32 %v3726, 0.0
        %v3759 = vmax.f32 %v3727, 0.0
        %v3760 = vmax.f32 %v3728, 0.0
        %v3761 = vmax.f32 %v3729, 0.0
        %v3762 = vmax.f32 %v3730, 0.0
        %v3763 = vmax.f32 %v3731, 0.0
        %v3764 = vmax.f32 %v3732, 0.0
        %v3765 = vmax.f32 %v3733, 0.0
        %v3766 = vmax.f32 %v3734, 0.0
        %v3767 = vmax.f32 %v3735, 0.0
        %v3768 = vmax.f32 %v3736, 0.0
        %v3769 = vmax.f32 %v3737, 0.0
        %v3770 = vmax.f32 %v3738, 0.0
        %v3771 = vmax.f32 %v3739, 0.0
        %v3772 = vpack.c.bf16 %v3741, %v3740
        %v3773 = vpack.c.bf16 %v3743, %v3742
        %v3774 = vpack.c.bf16 %v3745, %v3744
        %v3775 = vpack.c.bf16 %v3747, %v3746
        %v3776 = vpack.c.bf16 %v3749, %v3748
        %v3777 = vpack.c.bf16 %v3751, %v3750
        %v3778 = vpack.c.bf16 %v3753, %v3752
        %v3779 = vpack.c.bf16 %v3755, %v3754
        %v3780 = vpack.c.bf16 %v3757, %v3756
        %v3781 = vpack.c.bf16 %v3759, %v3758
        %v3782 = vpack.c.bf16 %v3761, %v3760
        %v3783 = vpack.c.bf16 %v3763, %v3762
        %v3784 = vpack.c.bf16 %v3765, %v3764
        %v3785 = vpack.c.bf16 %v3767, %v3766
        %v3786 = vpack.c.bf16 %v3769, %v3768
        %v3787 = vpack.c.bf16 %v3771, %v3770
        %v3788 = vld [vmem:[#allocation11] sm:$0xff]
        %v3789 = vld [vmem:[#allocation11 + $0x8] sm:$0xff]
        %v3790 = vld [vmem:[#allocation11 + $0x10] sm:$0xff]
        %v3791 = vld [vmem:[#allocation11 + $0x18] sm:$0xff]
        %v3792 = vld [vmem:[#allocation11 + $0x20] sm:$0xff]
        %v3793 = vld [vmem:[#allocation11 + $0x28] sm:$0xff]
        %v3794 = vld [vmem:[#allocation11 + $0x30] sm:$0xff]
        %v3795 = vld [vmem:[#allocation11 + $0x38] sm:$0xff]
        %v3796 = vld [vmem:[#allocation11 + $0x40] sm:$0xff]
        %v3797 = vld [vmem:[#allocation11 + $0x48] sm:$0xff]
        %v3798 = vld [vmem:[#allocation11 + $0x50] sm:$0xff]
        %v3799 = vld [vmem:[#allocation11 + $0x58] sm:$0xff]
        %v3800 = vld [vmem:[#allocation11 + $0x60] sm:$0xff]
        %v3801 = vld [vmem:[#allocation11 + $0x68] sm:$0xff]
        %v3802 = vld [vmem:[#allocation11 + $0x70] sm:$0xff]
        %v3803 = vld [vmem:[#allocation11 + $0x78] sm:$0xff]
        %v3804 = vld [vmem:[#allocation11 + $0x80] sm:$0xff]
        %v3805 = vld [vmem:[#allocation11 + $0x88] sm:$0xff]
        %v3806 = vld [vmem:[#allocation11 + $0x90] sm:$0xff]
        %v3807 = vld [vmem:[#allocation11 + $0x98] sm:$0xff]
        %v3808 = vld [vmem:[#allocation11 + $0xa0] sm:$0xff]
        %v3809 = vld [vmem:[#allocation11 + $0xa8] sm:$0xff]
        %v3810 = vld [vmem:[#allocation11 + $0xb0] sm:$0xff]
        %v3811 = vld [vmem:[#allocation11 + $0xb8] sm:$0xff]
        %v3812 = vld [vmem:[#allocation11 + $0xc0] sm:$0xff]
        %v3813 = vld [vmem:[#allocation11 + $0xc8] sm:$0xff]
        %v3814 = vld [vmem:[#allocation11 + $0xd0] sm:$0xff]
        %v3815 = vld [vmem:[#allocation11 + $0xd8] sm:$0xff]
        %v3816 = vld [vmem:[#allocation11 + $0xe0] sm:$0xff]
        %v3817 = vld [vmem:[#allocation11 + $0xe8] sm:$0xff]
        %v3818 = vld [vmem:[#allocation11 + $0xf0] sm:$0xff]
        %v3819 = vld [vmem:[#allocation11 + $0xf8] sm:$0xff]
        %v3820 = vld [vmem:[%s7] sm:$0xf]
        %v3822 = vlaneseq
        %v3823 = vshrl.u32 %v3822, 7
        %v3824 = vsub.s32 0, %v3823
        %v3825 = vrot.slane %v3820, %v3824
        %v3826 = vlaneseq
        %v3827 = vshrl.u32 %v3826, 7
        %v3828 = vsub.s32 1, %v3827
        %v3829 = vrot.slane %v3820, %v3828
        %v3830 = vlaneseq
        %v3831 = vshrl.u32 %v3830, 7
        %v3832 = vsub.s32 2, %v3831
        %v3833 = vrot.slane %v3820, %v3832
        %v3834 = vlaneseq
        %v3835 = vshrl.u32 %v3834, 7
        %v3836 = vsub.s32 3, %v3835
        %v3837 = vrot.slane %v3820, %v3836
        %v3874 = vunpack.c.l.b16 %v3788
        %v3875 = vunpack.c.h.b16 %v3788
        %v3876 = vunpack.c.l.b16 %v3789
        %v3877 = vunpack.c.h.b16 %v3789
        %v3878 = vunpack.c.l.b16 %v3790
        %v3879 = vunpack.c.h.b16 %v3790
        %v3880 = vunpack.c.l.b16 %v3791
        %v3881 = vunpack.c.h.b16 %v3791
        %v3882 = vunpack.c.l.b16 %v3792
        %v3883 = vunpack.c.h.b16 %v3792
        %v3884 = vunpack.c.l.b16 %v3793
        %v3885 = vunpack.c.h.b16 %v3793
        %v3886 = vunpack.c.l.b16 %v3794
        %v3887 = vunpack.c.h.b16 %v3794
        %v3888 = vunpack.c.l.b16 %v3795
        %v3889 = vunpack.c.h.b16 %v3795
        %v3890 = vunpack.c.l.b16 %v3796
        %v3891 = vunpack.c.h.b16 %v3796
        %v3892 = vunpack.c.l.b16 %v3797
        %v3893 = vunpack.c.h.b16 %v3797
        %v3894 = vunpack.c.l.b16 %v3798
        %v3895 = vunpack.c.h.b16 %v3798
        %v3896 = vunpack.c.l.b16 %v3799
        %v3897 = vunpack.c.h.b16 %v3799
        %v3898 = vunpack.c.l.b16 %v3800
        %v3899 = vunpack.c.h.b16 %v3800
        %v3900 = vunpack.c.l.b16 %v3801
        %v3901 = vunpack.c.h.b16 %v3801
        %v3902 = vunpack.c.l.b16 %v3802
        %v3903 = vunpack.c.h.b16 %v3802
        %v3904 = vunpack.c.l.b16 %v3803
        %v3905 = vunpack.c.h.b16 %v3803
        %v3906 = vunpack.c.l.b16 %v3804
        %v3907 = vunpack.c.h.b16 %v3804
        %v3908 = vunpack.c.l.b16 %v3805
        %v3909 = vunpack.c.h.b16 %v3805
        %v3910 = vunpack.c.l.b16 %v3806
        %v3911 = vunpack.c.h.b16 %v3806
        %v3912 = vunpack.c.l.b16 %v3807
        %v3913 = vunpack.c.h.b16 %v3807
        %v3914 = vunpack.c.l.b16 %v3808
        %v3915 = vunpack.c.h.b16 %v3808
        %v3916 = vunpack.c.l.b16 %v3809
        %v3917 = vunpack.c.h.b16 %v3809
        %v3918 = vunpack.c.l.b16 %v3810
        %v3919 = vunpack.c.h.b16 %v3810
        %v3920 = vunpack.c.l.b16 %v3811
        %v3921 = vunpack.c.h.b16 %v3811
        %v3922 = vunpack.c.l.b16 %v3812
        %v3923 = vunpack.c.h.b16 %v3812
        %v3924 = vunpack.c.l.b16 %v3813
        %v3925 = vunpack.c.h.b16 %v3813
        %v3926 = vunpack.c.l.b16 %v3814
        %v3927 = vunpack.c.h.b16 %v3814
        %v3928 = vunpack.c.l.b16 %v3815
        %v3929 = vunpack.c.h.b16 %v3815
        %v3930 = vunpack.c.l.b16 %v3816
        %v3931 = vunpack.c.h.b16 %v3816
        %v3932 = vunpack.c.l.b16 %v3817
        %v3933 = vunpack.c.h.b16 %v3817
        %v3934 = vunpack.c.l.b16 %v3818
        %v3935 = vunpack.c.h.b16 %v3818
        %v3936 = vunpack.c.l.b16 %v3819
        %v3937 = vunpack.c.h.b16 %v3819
        %v3938 = vpack.c.b16 %v3878, %v3874
        %v3939 = vpack.c.b16 %v3879, %v3875
        %v3940 = vpack.c.b16 %v3880, %v3876
        %v3941 = vpack.c.b16 %v3881, %v3877
        %v3942 = vpack.c.b16 %v3886, %v3882
        %v3943 = vpack.c.b16 %v3887, %v3883
        %v3944 = vpack.c.b16 %v3888, %v3884
        %v3945 = vpack.c.b16 %v3889, %v3885
        %v3946 = vpack.c.b16 %v3894, %v3890
        %v3947 = vpack.c.b16 %v3895, %v3891
        %v3948 = vpack.c.b16 %v3896, %v3892
        %v3949 = vpack.c.b16 %v3897, %v3893
        %v3950 = vpack.c.b16 %v3902, %v3898
        %v3951 = vpack.c.b16 %v3903, %v3899
        %v3952 = vpack.c.b16 %v3904, %v3900
        %v3953 = vpack.c.b16 %v3905, %v3901
        %v3954 = vpack.c.b16 %v3910, %v3906
        %v3955 = vpack.c.b16 %v3911, %v3907
        %v3956 = vpack.c.b16 %v3912, %v3908
        %v3957 = vpack.c.b16 %v3913, %v3909
        %v3958 = vpack.c.b16 %v3918, %v3914
        %v3959 = vpack.c.b16 %v3919, %v3915
        %v3960 = vpack.c.b16 %v3920, %v3916
        %v3961 = vpack.c.b16 %v3921, %v3917
        %v3962 = vpack.c.b16 %v3926, %v3922
        %v3963 = vpack.c.b16 %v3927, %v3923
        %v3964 = vpack.c.b16 %v3928, %v3924
        %v3965 = vpack.c.b16 %v3929, %v3925
        %v3966 = vpack.c.b16 %v3934, %v3930
        %v3967 = vpack.c.b16 %v3935, %v3931
        %v3968 = vpack.c.b16 %v3936, %v3932
        %v3969 = vpack.c.b16 %v3937, %v3933
        %4002 = vmatprep.subr.bf16.mxu0 %v3939
        %4003 = vmatpush1.bf16.msra.mxu0 %v3938
        %4004 = vmatprep.subr.bf16.mxu0 %v3943
        %4005 = vmatpush1.bf16.msra.mxu0 %v3942
        %4006 = vmatprep.subr.bf16.mxu0 %v3947
        %4007 = vmatpush1.bf16.msra.mxu0 %v3946
        %4008 = vmatprep.subr.bf16.mxu0 %v3951
        %4009 = vmatpush1.bf16.msra.mxu0 %v3950
        %4010 = vmatprep.subr.bf16.mxu0 %v3955
        %4011 = vmatpush1.bf16.msra.mxu0 %v3954
        %4012 = vmatprep.subr.bf16.mxu0 %v3959
        %4013 = vmatpush1.bf16.msra.mxu0 %v3958
        %4014 = vmatprep.subr.bf16.mxu0 %v3963
        %4015 = vmatpush1.bf16.msra.mxu0 %v3962
        %4016 = vmatprep.subr.bf16.mxu0 %v3967
        %4017 = vmatpush1.bf16.msra.mxu0 %v3966
        %4018 = vmatprep.subr.bf16.mxu0 0
        %4019 = vmatpush1.bf16.msra.mxu0 0
        %4020 = vmatprep.subr.bf16.mxu0 0
        %4021 = vmatpush1.bf16.msra.mxu0 0
        %4022 = vmatprep.subr.bf16.mxu0 0
        %4023 = vmatpush1.bf16.msra.mxu0 0
        %4024 = vmatprep.subr.bf16.mxu0 0
        %4025 = vmatpush1.bf16.msra.mxu0 0
        %4026 = vmatprep.subr.bf16.mxu0 0
        %4027 = vmatpush1.bf16.msra.mxu0 0
        %4028 = vmatprep.subr.bf16.mxu0 0
        %4029 = vmatpush1.bf16.msra.mxu0 0
        %4030 = vmatprep.subr.bf16.mxu0 0
        %4031 = vmatpush1.bf16.msra.mxu0 0
        %4032 = vmatprep.subr.bf16.mxu0 0
        %4033 = vmatpush1.bf16.msra.mxu0 0
        %4034 = vmatprep.mubr.bf16.mxu0 0
        %4035 = vmatmul.mubr.bf16.gmra.mrb[0].mxu0 %v3772
        %v4036 = vpop.f32.mrb[0].mxu0
        %v4037 = vadd.f32 %v3825, %v4036
        %v4038 = vpop.f32.mrb[0].mxu0
        %v4039 = vadd.f32 %v3829, %v4038
        %v4040 = vpop.f32.mrb[0].mxu0
        %v4041 = vadd.f32 %v3825, %v4040
        %v4042 = vpop.f32.mrb[0].mxu0
        %v4043 = vadd.f32 %v3829, %v4042
        %4044 = vmatprep.mubr.bf16.mxu0 0
        %4045 = vmatmul.mubr.bf16.gmra.mrb[0].mxu0 %v3773
        %v4046 = vpop.f32.mrb[0].mxu0
        %v4047 = vadd.f32 %v3825, %v4046
        %v4048 = vpop.f32.mrb[0].mxu0
        %v4049 = vadd.f32 %v3829, %v4048
        %v4050 = vpop.f32.mrb[0].mxu0
        %v4051 = vadd.f32 %v3825, %v4050
        %v4052 = vpop.f32.mrb[0].mxu0
        %v4053 = vadd.f32 %v3829, %v4052
        %4054 = vmatprep.mubr.bf16.mxu0 0
        %4055 = vmatmul.mubr.bf16.gmra.mrb[0].mxu0 %v3774
        %v4056 = vpop.f32.mrb[0].mxu0
        %v4057 = vadd.f32 %v3825, %v4056
        %v4058 = vpop.f32.mrb[0].mxu0
        %v4059 = vadd.f32 %v3829, %v4058
        %v4060 = vpop.f32.mrb[0].mxu0
        %v4061 = vadd.f32 %v3825, %v4060
        %v4062 = vpop.f32.mrb[0].mxu0
        %v4063 = vadd.f32 %v3829, %v4062
        %4064 = vmatprep.mubr.bf16.mxu0 0
        %4065 = vmatmul.mubr.bf16.gmra.mrb[0].mxu0 %v3775
        %v4066 = vpop.f32.mrb[0].mxu0
        %v4067 = vadd.f32 %v3825, %v4066
        %v4068 = vpop.f32.mrb[0].mxu0
        %v4069 = vadd.f32 %v3829, %v4068
        %v4070 = vpop.f32.mrb[0].mxu0
        %v4071 = vadd.f32 %v3825, %v4070
        %v4072 = vpop.f32.mrb[0].mxu0
        %v4073 = vadd.f32 %v3829, %v4072
        %4074 = vmatprep.mubr.bf16.mxu0 0
        %4075 = vmatmul.mubr.bf16.gmra.mrb[0].mxu0 %v3776
        %v4076 = vpop.f32.mrb[0].mxu0
        %v4077 = vadd.f32 %v3825, %v4076
        %v4078 = vpop.f32.mrb[0].mxu0
        %v4079 = vadd.f32 %v3829, %v4078
        %v4080 = vpop.f32.mrb[0].mxu0
        %v4081 = vadd.f32 %v3825, %v4080
        %v4082 = vpop.f32.mrb[0].mxu0
        %v4083 = vadd.f32 %v3829, %v4082
        %4084 = vmatprep.mubr.bf16.mxu0 0
        %4085 = vmatmul.mubr.bf16.gmra.mrb[0].mxu0 %v3777
        %v4086 = vpop.f32.mrb[0].mxu0
        %v4087 = vadd.f32 %v3825, %v4086
        %v4088 = vpop.f32.mrb[0].mxu0
        %v4089 = vadd.f32 %v3829, %v4088
        %v4090 = vpop.f32.mrb[0].mxu0
        %v4091 = vadd.f32 %v3825, %v4090
        %v4092 = vpop.f32.mrb[0].mxu0
        %v4093 = vadd.f32 %v3829, %v4092
        %4094 = vmatprep.mubr.bf16.mxu0 0
        %4095 = vmatmul.mubr.bf16.gmra.mrb[0].mxu0 %v3778
        %v4096 = vpop.f32.mrb[0].mxu0
        %v4097 = vadd.f32 %v3825, %v4096
        %v4098 = vpop.f32.mrb[0].mxu0
        %v4099 = vadd.f32 %v3829, %v4098
        %v4100 = vpop.f32.mrb[0].mxu0
        %v4101 = vadd.f32 %v3825, %v4100
        %v4102 = vpop.f32.mrb[0].mxu0
        %v4103 = vadd.f32 %v3829, %v4102
        %4104 = vmatprep.mubr.bf16.mxu0 0
        %4105 = vmatmul.mubr.bf16.gmra.mrb[0].mxu0 %v3779
        %v4106 = vpop.f32.mrb[0].mxu0
        %v4107 = vadd.f32 %v3825, %v4106
        %v4108 = vpop.f32.mrb[0].mxu0
        %v4109 = vadd.f32 %v3829, %v4108
        %v4110 = vpop.f32.mrb[0].mxu0
        %v4111 = vadd.f32 %v3825, %v4110
        %v4112 = vpop.f32.mrb[0].mxu0
        %v4113 = vadd.f32 %v3829, %v4112
        %4114 = vmatprep.mubr.bf16.mxu0 0
        %4115 = vmatmul.mubr.bf16.gmra.mrb[0].mxu0 %v3780
        %v4116 = vpop.f32.mrb[0].mxu0
        %v4117 = vadd.f32 %v3825, %v4116
        %v4118 = vpop.f32.mrb[0].mxu0
        %v4119 = vadd.f32 %v3829, %v4118
        %v4120 = vpop.f32.mrb[0].mxu0
        %v4121 = vadd.f32 %v3825, %v4120
        %v4122 = vpop.f32.mrb[0].mxu0
        %v4123 = vadd.f32 %v3829, %v4122
        %4124 = vmatprep.mubr.bf16.mxu0 0
        %4125 = vmatmul.mubr.bf16.gmra.mrb[0].mxu0 %v3781
        %v4126 = vpop.f32.mrb[0].mxu0
        %v4127 = vadd.f32 %v3825, %v4126
        %v4128 = vpop.f32.mrb[0].mxu0
        %v4129 = vadd.f32 %v3829, %v4128
        %v4130 = vpop.f32.mrb[0].mxu0
        %v4131 = vadd.f32 %v3825, %v4130
        %v4132 = vpop.f32.mrb[0].mxu0
        %v4133 = vadd.f32 %v3829, %v4132
        %4134 = vmatprep.mubr.bf16.mxu0 0
        %4135 = vmatmul.mubr.bf16.gmra.mrb[0].mxu0 %v3782
        %v4136 = vpop.f32.mrb[0].mxu0
        %v4137 = vadd.f32 %v3825, %v4136
        %v4138 = vpop.f32.mrb[0].mxu0
        %v4139 = vadd.f32 %v3829, %v4138
        %v4140 = vpop.f32.mrb[0].mxu0
        %v4141 = vadd.f32 %v3825, %v4140
        %v4142 = vpop.f32.mrb[0].mxu0
        %v4143 = vadd.f32 %v3829, %v4142
        %4144 = vmatprep.mubr.bf16.mxu0 0
        %4145 = vmatmul.mubr.bf16.gmra.mrb[0].mxu0 %v3783
        %v4146 = vpop.f32.mrb[0].mxu0
        %v4147 = vadd.f32 %v3825, %v4146
        %v4148 = vpop.f32.mrb[0].mxu0
        %v4149 = vadd.f32 %v3829, %v4148
        %v4150 = vpop.f32.mrb[0].mxu0
        %v4151 = vadd.f32 %v3825, %v4150
        %v4152 = vpop.f32.mrb[0].mxu0
        %v4153 = vadd.f32 %v3829, %v4152
        %4154 = vmatprep.mubr.bf16.mxu0 0
        %4155 = vmatmul.mubr.bf16.gmra.mrb[0].mxu0 %v3784
        %v4156 = vpop.f32.mrb[0].mxu0
        %v4157 = vadd.f32 %v3825, %v4156
        %v4158 = vpop.f32.mrb[0].mxu0
        %v4159 = vadd.f32 %v3829, %v4158
        %v4160 = vpop.f32.mrb[0].mxu0
        %v4161 = vadd.f32 %v3825, %v4160
        %v4162 = vpop.f32.mrb[0].mxu0
        %v4163 = vadd.f32 %v3829, %v4162
        %4164 = vmatprep.mubr.bf16.mxu0 0
        %4165 = vmatmul.mubr.bf16.gmra.mrb[0].mxu0 %v3785
        %v4166 = vpop.f32.mrb[0].mxu0
        %v4167 = vadd.f32 %v3825, %v4166
        %v4168 = vpop.f32.mrb[0].mxu0
        %v4169 = vadd.f32 %v3829, %v4168
        %v4170 = vpop.f32.mrb[0].mxu0
        %v4171 = vadd.f32 %v3825, %v4170
        %v4172 = vpop.f32.mrb[0].mxu0
        %v4173 = vadd.f32 %v3829, %v4172
        %4174 = vmatprep.mubr.bf16.mxu0 0
        %4175 = vmatmul.mubr.bf16.gmra.mrb[0].mxu0 %v3786
        %v4176 = vpop.f32.mrb[0].mxu0
        %v4177 = vadd.f32 %v3825, %v4176
        %v4178 = vpop.f32.mrb[0].mxu0
        %v4179 = vadd.f32 %v3829, %v4178
        %v4180 = vpop.f32.mrb[0].mxu0
        %v4181 = vadd.f32 %v3825, %v4180
        %v4182 = vpop.f32.mrb[0].mxu0
        %v4183 = vadd.f32 %v3829, %v4182
        %4184 = vmatprep.mubr.bf16.mxu0 0
        %4185 = vmatmul.mubr.bf16.gmra.mrb[0].mxu0 %v3787
        %v4186 = vpop.f32.mrb[0].mxu0
        %v4187 = vadd.f32 %v3825, %v4186
        %v4188 = vpop.f32.mrb[0].mxu0
        %v4189 = vadd.f32 %v3829, %v4188
        %v4190 = vpop.f32.mrb[0].mxu0
        %v4191 = vadd.f32 %v3825, %v4190
        %v4192 = vpop.f32.mrb[0].mxu0
        %v4193 = vadd.f32 %v3829, %v4192
        %4194 = vdwg.mxu0
        %4195 = vmatprep.subr.bf16.mxu0 %v3941
        %4196 = vmatpush1.bf16.msra.mxu0 %v3940
        %4197 = vmatprep.subr.bf16.mxu0 %v3945
        %4198 = vmatpush1.bf16.msra.mxu0 %v3944
        %4199 = vmatprep.subr.bf16.mxu0 %v3949
        %4200 = vmatpush1.bf16.msra.mxu0 %v3948
        %4201 = vmatprep.subr.bf16.mxu0 %v3953
        %4202 = vmatpush1.bf16.msra.mxu0 %v3952
        %4203 = vmatprep.subr.bf16.mxu0 %v3957
        %4204 = vmatpush1.bf16.msra.mxu0 %v3956
        %4205 = vmatprep.subr.bf16.mxu0 %v3961
        %4206 = vmatpush1.bf16.msra.mxu0 %v3960
        %4207 = vmatprep.subr.bf16.mxu0 %v3965
        %4208 = vmatpush1.bf16.msra.mxu0 %v3964
        %4209 = vmatprep.subr.bf16.mxu0 %v3969
        %4210 = vmatpush1.bf16.msra.mxu0 %v3968
        %4211 = vmatprep.subr.bf16.mxu0 0
        %4212 = vmatpush1.bf16.msra.mxu0 0
        %4213 = vmatprep.subr.bf16.mxu0 0
        %4214 = vmatpush1.bf16.msra.mxu0 0
        %4215 = vmatprep.subr.bf16.mxu0 0
        %4216 = vmatpush1.bf16.msra.mxu0 0
        %4217 = vmatprep.subr.bf16.mxu0 0
        %4218 = vmatpush1.bf16.msra.mxu0 0
        %4219 = vmatprep.subr.bf16.mxu0 0
        %4220 = vmatpush1.bf16.msra.mxu0 0
        %4221 = vmatprep.subr.bf16.mxu0 0
        %4222 = vmatpush1.bf16.msra.mxu0 0
        %4223 = vmatprep.subr.bf16.mxu0 0
        %4224 = vmatpush1.bf16.msra.mxu0 0
        %4225 = vmatprep.subr.bf16.mxu0 0
        %4226 = vmatpush1.bf16.msra.mxu0 0
        %4227 = vmatprep.mubr.bf16.mxu0 0
        %4228 = vmatmul.mubr.bf16.gmra.mrb[0].mxu0 %v3772
        %v4229 = vpop.f32.mrb[0].mxu0
        %v4230 = vadd.f32 %v3833, %v4229
        %v4231 = vpop.f32.mrb[0].mxu0
        %v4232 = vadd.f32 %v3837, %v4231
        %v4233 = vpop.f32.mrb[0].mxu0
        %v4234 = vadd.f32 %v3833, %v4233
        %v4235 = vpop.f32.mrb[0].mxu0
        %v4236 = vadd.f32 %v3837, %v4235
        %4237 = vmatprep.mubr.bf16.mxu0 0
        %4238 = vmatmul.mubr.bf16.gmra.mrb[0].mxu0 %v3773
        %v4239 = vpop.f32.mrb[0].mxu0
        %v4240 = vadd.f32 %v3833, %v4239
        %v4241 = vpop.f32.mrb[0].mxu0
        %v4242 = vadd.f32 %v3837, %v4241
        %v4243 = vpop.f32.mrb[0].mxu0
        %v4244 = vadd.f32 %v3833, %v4243
        %v4245 = vpop.f32.mrb[0].mxu0
        %v4246 = vadd.f32 %v3837, %v4245
        %4247 = vmatprep.mubr.bf16.mxu0 0
        %4248 = vmatmul.mubr.bf16.gmra.mrb[0].mxu0 %v3774
        %v4249 = vpop.f32.mrb[0].mxu0
        %v4250 = vadd.f32 %v3833, %v4249
        %v4251 = vpop.f32.mrb[0].mxu0
        %v4252 = vadd.f32 %v3837, %v4251
        %v4253 = vpop.f32.mrb[0].mxu0
        %v4254 = vadd.f32 %v3833, %v4253
        %v4255 = vpop.f32.mrb[0].mxu0
        %v4256 = vadd.f32 %v3837, %v4255
        %4257 = vmatprep.mubr.bf16.mxu0 0
        %4258 = vmatmul.mubr.bf16.gmra.mrb[0].mxu0 %v3775
        %v4259 = vpop.f32.mrb[0].mxu0
        %v4260 = vadd.f32 %v3833, %v4259
        %v4261 = vpop.f32.mrb[0].mxu0
        %v4262 = vadd.f32 %v3837, %v4261
        %v4263 = vpop.f32.mrb[0].mxu0
        %v4264 = vadd.f32 %v3833, %v4263
        %v4265 = vpop.f32.mrb[0].mxu0
        %v4266 = vadd.f32 %v3837, %v4265
        %4267 = vmatprep.mubr.bf16.mxu0 0
        %4268 = vmatmul.mubr.bf16.gmra.mrb[0].mxu0 %v3776
        %v4269 = vpop.f32.mrb[0].mxu0
        %v4270 = vadd.f32 %v3833, %v4269
        %v4271 = vpop.f32.mrb[0].mxu0
        %v4272 = vadd.f32 %v3837, %v4271
        %v4273 = vpop.f32.mrb[0].mxu0
        %v4274 = vadd.f32 %v3833, %v4273
        %v4275 = vpop.f32.mrb[0].mxu0
        %v4276 = vadd.f32 %v3837, %v4275
        %4277 = vmatprep.mubr.bf16.mxu0 0
        %4278 = vmatmul.mubr.bf16.gmra.mrb[0].mxu0 %v3777
        %v4279 = vpop.f32.mrb[0].mxu0
        %v4280 = vadd.f32 %v3833, %v4279
        %v4281 = vpop.f32.mrb[0].mxu0
        %v4282 = vadd.f32 %v3837, %v4281
        %v4283 = vpop.f32.mrb[0].mxu0
        %v4284 = vadd.f32 %v3833, %v4283
        %v4285 = vpop.f32.mrb[0].mxu0
        %v4286 = vadd.f32 %v3837, %v4285
        %4287 = vmatprep.mubr.bf16.mxu0 0
        %4288 = vmatmul.mubr.bf16.gmra.mrb[0].mxu0 %v3778
        %v4289 = vpop.f32.mrb[0].mxu0
        %v4290 = vadd.f32 %v3833, %v4289
        %v4291 = vpop.f32.mrb[0].mxu0
        %v4292 = vadd.f32 %v3837, %v4291
        %v4293 = vpop.f32.mrb[0].mxu0
        %v4294 = vadd.f32 %v3833, %v4293
        %v4295 = vpop.f32.mrb[0].mxu0
        %v4296 = vadd.f32 %v3837, %v4295
        %4297 = vmatprep.mubr.bf16.mxu0 0
        %4298 = vmatmul.mubr.bf16.gmra.mrb[0].mxu0 %v3779
        %v4299 = vpop.f32.mrb[0].mxu0
        %v4300 = vadd.f32 %v3833, %v4299
        %v4301 = vpop.f32.mrb[0].mxu0
        %v4302 = vadd.f32 %v3837, %v4301
        %v4303 = vpop.f32.mrb[0].mxu0
        %v4304 = vadd.f32 %v3833, %v4303
        %v4305 = vpop.f32.mrb[0].mxu0
        %v4306 = vadd.f32 %v3837, %v4305
        %4307 = vmatprep.mubr.bf16.mxu0 0
        %4308 = vmatmul.mubr.bf16.gmra.mrb[0].mxu0 %v3780
        %v4309 = vpop.f32.mrb[0].mxu0
        %v4310 = vadd.f32 %v3833, %v4309
        %v4311 = vpop.f32.mrb[0].mxu0
        %v4312 = vadd.f32 %v3837, %v4311
        %v4313 = vpop.f32.mrb[0].mxu0
        %v4314 = vadd.f32 %v3833, %v4313
        %v4315 = vpop.f32.mrb[0].mxu0
        %v4316 = vadd.f32 %v3837, %v4315
        %4317 = vmatprep.mubr.bf16.mxu0 0
        %4318 = vmatmul.mubr.bf16.gmra.mrb[0].mxu0 %v3781
        %v4319 = vpop.f32.mrb[0].mxu0
        %v4320 = vadd.f32 %v3833, %v4319
        %v4321 = vpop.f32.mrb[0].mxu0
        %v4322 = vadd.f32 %v3837, %v4321
        %v4323 = vpop.f32.mrb[0].mxu0
        %v4324 = vadd.f32 %v3833, %v4323
        %v4325 = vpop.f32.mrb[0].mxu0
        %v4326 = vadd.f32 %v3837, %v4325
        %4327 = vmatprep.mubr.bf16.mxu0 0
        %4328 = vmatmul.mubr.bf16.gmra.mrb[0].mxu0 %v3782
        %v4329 = vpop.f32.mrb[0].mxu0
        %v4330 = vadd.f32 %v3833, %v4329
        %v4331 = vpop.f32.mrb[0].mxu0
        %v4332 = vadd.f32 %v3837, %v4331
        %v4333 = vpop.f32.mrb[0].mxu0
        %v4334 = vadd.f32 %v3833, %v4333
        %v4335 = vpop.f32.mrb[0].mxu0
        %v4336 = vadd.f32 %v3837, %v4335
        %4337 = vmatprep.mubr.bf16.mxu0 0
        %4338 = vmatmul.mubr.bf16.gmra.mrb[0].mxu0 %v3783
        %v4339 = vpop.f32.mrb[0].mxu0
        %v4340 = vadd.f32 %v3833, %v4339
        %v4341 = vpop.f32.mrb[0].mxu0
        %v4342 = vadd.f32 %v3837, %v4341
        %v4343 = vpop.f32.mrb[0].mxu0
        %v4344 = vadd.f32 %v3833, %v4343
        %v4345 = vpop.f32.mrb[0].mxu0
        %v4346 = vadd.f32 %v3837, %v4345
        %4347 = vmatprep.mubr.bf16.mxu0 0
        %4348 = vmatmul.mubr.bf16.gmra.mrb[0].mxu0 %v3784
        %v4349 = vpop.f32.mrb[0].mxu0
        %v4350 = vadd.f32 %v3833, %v4349
        %v4351 = vpop.f32.mrb[0].mxu0
        %v4352 = vadd.f32 %v3837, %v4351
        %v4353 = vpop.f32.mrb[0].mxu0
        %v4354 = vadd.f32 %v3833, %v4353
        %v4355 = vpop.f32.mrb[0].mxu0
        %v4356 = vadd.f32 %v3837, %v4355
        %4357 = vmatprep.mubr.bf16.mxu0 0
        %4358 = vmatmul.mubr.bf16.gmra.mrb[0].mxu0 %v3785
        %v4359 = vpop.f32.mrb[0].mxu0
        %v4360 = vadd.f32 %v3833, %v4359
        %v4361 = vpop.f32.mrb[0].mxu0
        %v4362 = vadd.f32 %v3837, %v4361
        %v4363 = vpop.f32.mrb[0].mxu0
        %v4364 = vadd.f32 %v3833, %v4363
        %v4365 = vpop.f32.mrb[0].mxu0
        %v4366 = vadd.f32 %v3837, %v4365
        %4367 = vmatprep.mubr.bf16.mxu0 0
        %4368 = vmatmul.mubr.bf16.gmra.mrb[0].mxu0 %v3786
        %v4369 = vpop.f32.mrb[0].mxu0
        %v4370 = vadd.f32 %v3833, %v4369
        %v4371 = vpop.f32.mrb[0].mxu0
        %v4372 = vadd.f32 %v3837, %v4371
        %v4373 = vpop.f32.mrb[0].mxu0
        %v4374 = vadd.f32 %v3833, %v4373
        %v4375 = vpop.f32.mrb[0].mxu0
        %v4376 = vadd.f32 %v3837, %v4375
        %4377 = vmatprep.mubr.bf16.mxu0 0
        %4378 = vmatmul.mubr.bf16.gmra.mrb[0].mxu0 %v3787
        %v4379 = vpop.f32.mrb[0].mxu0
        %v4380 = vadd.f32 %v3833, %v4379
        %v4381 = vpop.f32.mrb[0].mxu0
        %v4382 = vadd.f32 %v3837, %v4381
        %v4383 = vpop.f32.mrb[0].mxu0
        %v4384 = vadd.f32 %v3833, %v4383
        %v4385 = vpop.f32.mrb[0].mxu0
        %v4386 = vadd.f32 %v3837, %v4385
        %4387 = vdwg.mxu0
        %v4388 = vld [vmem:[%s376] sm:$0xff]
        %v4389 = vld [vmem:[%s376 + $0x8] sm:$0xff]
        %v4390 = vld [vmem:[%s376 + $0x10] sm:$0xff]
        %v4391 = vld [vmem:[%s376 + $0x18] sm:$0xff]
        %v4392 = vld [vmem:[%s376 + $0x20] sm:$0xff]
        %v4393 = vld [vmem:[%s376 + $0x28] sm:$0xff]
        %v4394 = vld [vmem:[%s376 + $0x30] sm:$0xff]
        %v4395 = vld [vmem:[%s376 + $0x38] sm:$0xff]
        %v4396 = vld [vmem:[%s376 + $0x40] sm:$0xff]
        %v4397 = vld [vmem:[%s376 + $0x48] sm:$0xff]
        %v4398 = vld [vmem:[%s376 + $0x50] sm:$0xff]
        %v4399 = vld [vmem:[%s376 + $0x58] sm:$0xff]
        %v4400 = vld [vmem:[%s376 + $0x60] sm:$0xff]
        %v4401 = vld [vmem:[%s376 + $0x68] sm:$0xff]
        %v4402 = vld [vmem:[%s376 + $0x70] sm:$0xff]
        %v4403 = vld [vmem:[%s376 + $0x78] sm:$0xff]
        %v4404 = vld [vmem:[%s376 + $0x80] sm:$0xff]
        %v4405 = vld [vmem:[%s376 + $0x88] sm:$0xff]
        %v4406 = vld [vmem:[%s376 + $0x90] sm:$0xff]
        %v4407 = vld [vmem:[%s376 + $0x98] sm:$0xff]
        %v4408 = vld [vmem:[%s376 + $0xa0] sm:$0xff]
        %v4409 = vld [vmem:[%s376 + $0xa8] sm:$0xff]
        %v4410 = vld [vmem:[%s376 + $0xb0] sm:$0xff]
        %v4411 = vld [vmem:[%s376 + $0xb8] sm:$0xff]
        %v4412 = vld [vmem:[%s376 + $0xc0] sm:$0xff]
        %v4413 = vld [vmem:[%s376 + $0xc8] sm:$0xff]
        %v4414 = vld [vmem:[%s376 + $0xd0] sm:$0xff]
        %v4415 = vld [vmem:[%s376 + $0xd8] sm:$0xff]
        %v4416 = vld [vmem:[%s376 + $0xe0] sm:$0xff]
        %v4417 = vld [vmem:[%s376 + $0xe8] sm:$0xff]
        %v4418 = vld [vmem:[%s376 + $0xf0] sm:$0xff]
        %v4419 = vld [vmem:[%s376 + $0xf8] sm:$0xff]
        %v4420 = vld [vmem:[%s376 + $0x100] sm:$0xff]
        %v4421 = vld [vmem:[%s376 + $0x108] sm:$0xff]
        %v4422 = vld [vmem:[%s376 + $0x110] sm:$0xff]
        %v4423 = vld [vmem:[%s376 + $0x118] sm:$0xff]
        %v4424 = vld [vmem:[%s376 + $0x120] sm:$0xff]
        %v4425 = vld [vmem:[%s376 + $0x128] sm:$0xff]
        %v4426 = vld [vmem:[%s376 + $0x130] sm:$0xff]
        %v4427 = vld [vmem:[%s376 + $0x138] sm:$0xff]
        %v4428 = vld [vmem:[%s376 + $0x140] sm:$0xff]
        %v4429 = vld [vmem:[%s376 + $0x148] sm:$0xff]
        %v4430 = vld [vmem:[%s376 + $0x150] sm:$0xff]
        %v4431 = vld [vmem:[%s376 + $0x158] sm:$0xff]
        %v4432 = vld [vmem:[%s376 + $0x160] sm:$0xff]
        %v4433 = vld [vmem:[%s376 + $0x168] sm:$0xff]
        %v4434 = vld [vmem:[%s376 + $0x170] sm:$0xff]
        %v4435 = vld [vmem:[%s376 + $0x178] sm:$0xff]
        %v4436 = vld [vmem:[%s376 + $0x180] sm:$0xff]
        %v4437 = vld [vmem:[%s376 + $0x188] sm:$0xff]
        %v4438 = vld [vmem:[%s376 + $0x190] sm:$0xff]
        %v4439 = vld [vmem:[%s376 + $0x198] sm:$0xff]
        %v4440 = vld [vmem:[%s376 + $0x1a0] sm:$0xff]
        %v4441 = vld [vmem:[%s376 + $0x1a8] sm:$0xff]
        %v4442 = vld [vmem:[%s376 + $0x1b0] sm:$0xff]
        %v4443 = vld [vmem:[%s376 + $0x1b8] sm:$0xff]
        %v4444 = vld [vmem:[%s376 + $0x1c0] sm:$0xff]
        %v4445 = vld [vmem:[%s376 + $0x1c8] sm:$0xff]
        %v4446 = vld [vmem:[%s376 + $0x1d0] sm:$0xff]
        %v4447 = vld [vmem:[%s376 + $0x1d8] sm:$0xff]
        %v4448 = vld [vmem:[%s376 + $0x1e0] sm:$0xff]
        %v4449 = vld [vmem:[%s376 + $0x1e8] sm:$0xff]
        %v4450 = vld [vmem:[%s376 + $0x1f0] sm:$0xff]
        %v4451 = vld [vmem:[%s376 + $0x1f8] sm:$0xff]
        %v4452 = vld [vmem:[%s376 + $0x200] sm:$0xff]
        %v4453 = vld [vmem:[%s376 + $0x208] sm:$0xff]
        %v4454 = vld [vmem:[%s376 + $0x210] sm:$0xff]
        %v4455 = vld [vmem:[%s376 + $0x218] sm:$0xff]
        %v4456 = vld [vmem:[%s376 + $0x220] sm:$0xff]
        %v4457 = vld [vmem:[%s376 + $0x228] sm:$0xff]
        %v4458 = vld [vmem:[%s376 + $0x230] sm:$0xff]
        %v4459 = vld [vmem:[%s376 + $0x238] sm:$0xff]
        %v4460 = vld [vmem:[%s376 + $0x240] sm:$0xff]
        %v4461 = vld [vmem:[%s376 + $0x248] sm:$0xff]
        %v4462 = vld [vmem:[%s376 + $0x250] sm:$0xff]
        %v4463 = vld [vmem:[%s376 + $0x258] sm:$0xff]
        %v4464 = vld [vmem:[%s376 + $0x260] sm:$0xff]
        %v4465 = vld [vmem:[%s376 + $0x268] sm:$0xff]
        %v4466 = vld [vmem:[%s376 + $0x270] sm:$0xff]
        %v4467 = vld [vmem:[%s376 + $0x278] sm:$0xff]
        %v4468 = vld [vmem:[%s376 + $0x280] sm:$0xff]
        %v4469 = vld [vmem:[%s376 + $0x288] sm:$0xff]
        %v4470 = vld [vmem:[%s376 + $0x290] sm:$0xff]
        %v4471 = vld [vmem:[%s376 + $0x298] sm:$0xff]
        %v4472 = vld [vmem:[%s376 + $0x2a0] sm:$0xff]
        %v4473 = vld [vmem:[%s376 + $0x2a8] sm:$0xff]
        %v4474 = vld [vmem:[%s376 + $0x2b0] sm:$0xff]
        %v4475 = vld [vmem:[%s376 + $0x2b8] sm:$0xff]
        %v4476 = vld [vmem:[%s376 + $0x2c0] sm:$0xff]
        %v4477 = vld [vmem:[%s376 + $0x2c8] sm:$0xff]
        %v4478 = vld [vmem:[%s376 + $0x2d0] sm:$0xff]
        %v4479 = vld [vmem:[%s376 + $0x2d8] sm:$0xff]
        %v4480 = vld [vmem:[%s376 + $0x2e0] sm:$0xff]
        %v4481 = vld [vmem:[%s376 + $0x2e8] sm:$0xff]
        %v4482 = vld [vmem:[%s376 + $0x2f0] sm:$0xff]
        %v4483 = vld [vmem:[%s376 + $0x2f8] sm:$0xff]
        %v4484 = vld [vmem:[%s376 + $0x300] sm:$0xff]
        %v4485 = vld [vmem:[%s376 + $0x308] sm:$0xff]
        %v4486 = vld [vmem:[%s376 + $0x310] sm:$0xff]
        %v4487 = vld [vmem:[%s376 + $0x318] sm:$0xff]
        %v4488 = vld [vmem:[%s376 + $0x320] sm:$0xff]
        %v4489 = vld [vmem:[%s376 + $0x328] sm:$0xff]
        %v4490 = vld [vmem:[%s376 + $0x330] sm:$0xff]
        %v4491 = vld [vmem:[%s376 + $0x338] sm:$0xff]
        %v4492 = vld [vmem:[%s376 + $0x340] sm:$0xff]
        %v4493 = vld [vmem:[%s376 + $0x348] sm:$0xff]
        %v4494 = vld [vmem:[%s376 + $0x350] sm:$0xff]
        %v4495 = vld [vmem:[%s376 + $0x358] sm:$0xff]
        %v4496 = vld [vmem:[%s376 + $0x360] sm:$0xff]
        %v4497 = vld [vmem:[%s376 + $0x368] sm:$0xff]
        %v4498 = vld [vmem:[%s376 + $0x370] sm:$0xff]
        %v4499 = vld [vmem:[%s376 + $0x378] sm:$0xff]
        %v4500 = vld [vmem:[%s376 + $0x380] sm:$0xff]
        %v4501 = vld [vmem:[%s376 + $0x388] sm:$0xff]
        %v4502 = vld [vmem:[%s376 + $0x390] sm:$0xff]
        %v4503 = vld [vmem:[%s376 + $0x398] sm:$0xff]
        %v4504 = vld [vmem:[%s376 + $0x3a0] sm:$0xff]
        %v4505 = vld [vmem:[%s376 + $0x3a8] sm:$0xff]
        %v4506 = vld [vmem:[%s376 + $0x3b0] sm:$0xff]
        %v4507 = vld [vmem:[%s376 + $0x3b8] sm:$0xff]
        %v4508 = vld [vmem:[%s376 + $0x3c0] sm:$0xff]
        %v4509 = vld [vmem:[%s376 + $0x3c8] sm:$0xff]
        %v4510 = vld [vmem:[%s376 + $0x3d0] sm:$0xff]
        %v4511 = vld [vmem:[%s376 + $0x3d8] sm:$0xff]
        %v4512 = vld [vmem:[%s376 + $0x3e0] sm:$0xff]
        %v4513 = vld [vmem:[%s376 + $0x3e8] sm:$0xff]
        %v4514 = vld [vmem:[%s376 + $0x3f0] sm:$0xff]
        %v4515 = vld [vmem:[%s376 + $0x3f8] sm:$0xff]
        %v4516 = vadd.f32 %v4037, %v4388
        %v4517 = vadd.f32 %v4039, %v4389
        %v4518 = vadd.f32 %v4230, %v4390
        %v4519 = vadd.f32 %v4232, %v4391
        %v4520 = vadd.f32 %v4041, %v4392
        %v4521 = vadd.f32 %v4043, %v4393
        %v4522 = vadd.f32 %v4234, %v4394
        %v4523 = vadd.f32 %v4236, %v4395
        %v4524 = vadd.f32 %v4047, %v4396
        %v4525 = vadd.f32 %v4049, %v4397
        %v4526 = vadd.f32 %v4240, %v4398
        %v4527 = vadd.f32 %v4242, %v4399
        %v4528 = vadd.f32 %v4051, %v4400
        %v4529 = vadd.f32 %v4053, %v4401
        %v4530 = vadd.f32 %v4244, %v4402
        %v4531 = vadd.f32 %v4246, %v4403
        %v4532 = vadd.f32 %v4057, %v4404
        %v4533 = vadd.f32 %v4059, %v4405
        %v4534 = vadd.f32 %v4250, %v4406
        %v4535 = vadd.f32 %v4252, %v4407
        %v4536 = vadd.f32 %v4061, %v4408
        %v4537 = vadd.f32 %v4063, %v4409
        %v4538 = vadd.f32 %v4254, %v4410
        %v4539 = vadd.f32 %v4256, %v4411
        %v4540 = vadd.f32 %v4067, %v4412
        %v4541 = vadd.f32 %v4069, %v4413
        %v4542 = vadd.f32 %v4260, %v4414
        %v4543 = vadd.f32 %v4262, %v4415
        %v4544 = vadd.f32 %v4071, %v4416
        %v4545 = vadd.f32 %v4073, %v4417
        %v4546 = vadd.f32 %v4264, %v4418
        %v4547 = vadd.f32 %v4266, %v4419
        %v4548 = vadd.f32 %v4077, %v4420
        %v4549 = vadd.f32 %v4079, %v4421
        %v4550 = vadd.f32 %v4270, %v4422
        %v4551 = vadd.f32 %v4272, %v4423
        %v4552 = vadd.f32 %v4081, %v4424
        %v4553 = vadd.f32 %v4083, %v4425
        %v4554 = vadd.f32 %v4274, %v4426
        %v4555 = vadd.f32 %v4276, %v4427
        %v4556 = vadd.f32 %v4087, %v4428
        %v4557 = vadd.f32 %v4089, %v4429
        %v4558 = vadd.f32 %v4280, %v4430
        %v4559 = vadd.f32 %v4282, %v4431
        %v4560 = vadd.f32 %v4091, %v4432
        %v4561 = vadd.f32 %v4093, %v4433
        %v4562 = vadd.f32 %v4284, %v4434
        %v4563 = vadd.f32 %v4286, %v4435
        %v4564 = vadd.f32 %v4097, %v4436
        %v4565 = vadd.f32 %v4099, %v4437
        %v4566 = vadd.f32 %v4290, %v4438
        %v4567 = vadd.f32 %v4292, %v4439
        %v4568 = vadd.f32 %v4101, %v4440
        %v4569 = vadd.f32 %v4103, %v4441
        %v4570 = vadd.f32 %v4294, %v4442
        %v4571 = vadd.f32 %v4296, %v4443
        %v4572 = vadd.f32 %v4107, %v4444
        %v4573 = vadd.f32 %v4109, %v4445
        %v4574 = vadd.f32 %v4300, %v4446
        %v4575 = vadd.f32 %v4302, %v4447
        %v4576 = vadd.f32 %v4111, %v4448
        %v4577 = vadd.f32 %v4113, %v4449
        %v4578 = vadd.f32 %v4304, %v4450
        %v4579 = vadd.f32 %v4306, %v4451
        %v4580 = vadd.f32 %v4117, %v4452
        %v4581 = vadd.f32 %v4119, %v4453
        %v4582 = vadd.f32 %v4310, %v4454
        %v4583 = vadd.f32 %v4312, %v4455
        %v4584 = vadd.f32 %v4121, %v4456
        %v4585 = vadd.f32 %v4123, %v4457
        %v4586 = vadd.f32 %v4314, %v4458
        %v4587 = vadd.f32 %v4316, %v4459
        %v4588 = vadd.f32 %v4127, %v4460
        %v4589 = vadd.f32 %v4129, %v4461
        %v4590 = vadd.f32 %v4320, %v4462
        %v4591 = vadd.f32 %v4322, %v4463
        %v4592 = vadd.f32 %v4131, %v4464
        %v4593 = vadd.f32 %v4133, %v4465
        %v4594 = vadd.f32 %v4324, %v4466
        %v4595 = vadd.f32 %v4326, %v4467
        %v4596 = vadd.f32 %v4137, %v4468
        %v4597 = vadd.f32 %v4139, %v4469
        %v4598 = vadd.f32 %v4330, %v4470
        %v4599 = vadd.f32 %v4332, %v4471
        %v4600 = vadd.f32 %v4141, %v4472
        %v4601 = vadd.f32 %v4143, %v4473
        %v4602 = vadd.f32 %v4334, %v4474
        %v4603 = vadd.f32 %v4336, %v4475
        %v4604 = vadd.f32 %v4147, %v4476
        %v4605 = vadd.f32 %v4149, %v4477
        %v4606 = vadd.f32 %v4340, %v4478
        %v4607 = vadd.f32 %v4342, %v4479
        %v4608 = vadd.f32 %v4151, %v4480
        %v4609 = vadd.f32 %v4153, %v4481
        %v4610 = vadd.f32 %v4344, %v4482
        %v4611 = vadd.f32 %v4346, %v4483
        %v4612 = vadd.f32 %v4157, %v4484
        %v4613 = vadd.f32 %v4159, %v4485
        %v4614 = vadd.f32 %v4350, %v4486
        %v4615 = vadd.f32 %v4352, %v4487
        %v4616 = vadd.f32 %v4161, %v4488
        %v4617 = vadd.f32 %v4163, %v4489
        %v4618 = vadd.f32 %v4354, %v4490
        %v4619 = vadd.f32 %v4356, %v4491
        %v4620 = vadd.f32 %v4167, %v4492
        %v4621 = vadd.f32 %v4169, %v4493
        %v4622 = vadd.f32 %v4360, %v4494
        %v4623 = vadd.f32 %v4362, %v4495
        %v4624 = vadd.f32 %v4171, %v4496
        %v4625 = vadd.f32 %v4173, %v4497
        %v4626 = vadd.f32 %v4364, %v4498
        %v4627 = vadd.f32 %v4366, %v4499
        %v4628 = vadd.f32 %v4177, %v4500
        %v4629 = vadd.f32 %v4179, %v4501
        %v4630 = vadd.f32 %v4370, %v4502
        %v4631 = vadd.f32 %v4372, %v4503
        %v4632 = vadd.f32 %v4181, %v4504
        %v4633 = vadd.f32 %v4183, %v4505
        %v4634 = vadd.f32 %v4374, %v4506
        %v4635 = vadd.f32 %v4376, %v4507
        %v4636 = vadd.f32 %v4187, %v4508
        %v4637 = vadd.f32 %v4189, %v4509
        %v4638 = vadd.f32 %v4380, %v4510
        %v4639 = vadd.f32 %v4382, %v4511
        %v4640 = vadd.f32 %v4191, %v4512
        %v4641 = vadd.f32 %v4193, %v4513
        %v4642 = vadd.f32 %v4384, %v4514
        %v4643 = vadd.f32 %v4386, %v4515
        %v4644 = vmax.f32 %v4516, 0.0
        %v4645 = vmax.f32 %v4517, 0.0
        %v4646 = vmax.f32 %v4518, 0.0
        %v4647 = vmax.f32 %v4519, 0.0
        %v4648 = vmax.f32 %v4520, 0.0
        %v4649 = vmax.f32 %v4521, 0.0
        %v4650 = vmax.f32 %v4522, 0.0
        %v4651 = vmax.f32 %v4523, 0.0
        %v4652 = vmax.f32 %v4524, 0.0
        %v4653 = vmax.f32 %v4525, 0.0
        %v4654 = vmax.f32 %v4526, 0.0
        %v4655 = vmax.f32 %v4527, 0.0
        %v4656 = vmax.f32 %v4528, 0.0
        %v4657 = vmax.f32 %v4529, 0.0
        %v4658 = vmax.f32 %v4530, 0.0
        %v4659 = vmax.f32 %v4531, 0.0
        %v4660 = vmax.f32 %v4532, 0.0
        %v4661 = vmax.f32 %v4533, 0.0
        %v4662 = vmax.f32 %v4534, 0.0
        %v4663 = vmax.f32 %v4535, 0.0
        %v4664 = vmax.f32 %v4536, 0.0
        %v4665 = vmax.f32 %v4537, 0.0
        %v4666 = vmax.f32 %v4538, 0.0
        %v4667 = vmax.f32 %v4539, 0.0
        %v4668 = vmax.f32 %v4540, 0.0
        %v4669 = vmax.f32 %v4541, 0.0
        %v4670 = vmax.f32 %v4542, 0.0
        %v4671 = vmax.f32 %v4543, 0.0
        %v4672 = vmax.f32 %v4544, 0.0
        %v4673 = vmax.f32 %v4545, 0.0
        %v4674 = vmax.f32 %v4546, 0.0
        %v4675 = vmax.f32 %v4547, 0.0
        %v4676 = vmax.f32 %v4548, 0.0
        %v4677 = vmax.f32 %v4549, 0.0
        %v4678 = vmax.f32 %v4550, 0.0
        %v4679 = vmax.f32 %v4551, 0.0
        %v4680 = vmax.f32 %v4552, 0.0
        %v4681 = vmax.f32 %v4553, 0.0
        %v4682 = vmax.f32 %v4554, 0.0
        %v4683 = vmax.f32 %v4555, 0.0
        %v4684 = vmax.f32 %v4556, 0.0
        %v4685 = vmax.f32 %v4557, 0.0
        %v4686 = vmax.f32 %v4558, 0.0
        %v4687 = vmax.f32 %v4559, 0.0
        %v4688 = vmax.f32 %v4560, 0.0
        %v4689 = vmax.f32 %v4561, 0.0
        %v4690 = vmax.f32 %v4562, 0.0
        %v4691 = vmax.f32 %v4563, 0.0
        %v4692 = vmax.f32 %v4564, 0.0
        %v4693 = vmax.f32 %v4565, 0.0
        %v4694 = vmax.f32 %v4566, 0.0
        %v4695 = vmax.f32 %v4567, 0.0
        %v4696 = vmax.f32 %v4568, 0.0
        %v4697 = vmax.f32 %v4569, 0.0
        %v4698 = vmax.f32 %v4570, 0.0
        %v4699 = vmax.f32 %v4571, 0.0
        %v4700 = vmax.f32 %v4572, 0.0
        %v4701 = vmax.f32 %v4573, 0.0
        %v4702 = vmax.f32 %v4574, 0.0
        %v4703 = vmax.f32 %v4575, 0.0
        %v4704 = vmax.f32 %v4576, 0.0
        %v4705 = vmax.f32 %v4577, 0.0
        %v4706 = vmax.f32 %v4578, 0.0
        %v4707 = vmax.f32 %v4579, 0.0
        %v4708 = vmax.f32 %v4580, 0.0
        %v4709 = vmax.f32 %v4581, 0.0
        %v4710 = vmax.f32 %v4582, 0.0
        %v4711 = vmax.f32 %v4583, 0.0
        %v4712 = vmax.f32 %v4584, 0.0
        %v4713 = vmax.f32 %v4585, 0.0
        %v4714 = vmax.f32 %v4586, 0.0
        %v4715 = vmax.f32 %v4587, 0.0
        %v4716 = vmax.f32 %v4588, 0.0
        %v4717 = vmax.f32 %v4589, 0.0
        %v4718 = vmax.f32 %v4590, 0.0
        %v4719 = vmax.f32 %v4591, 0.0
        %v4720 = vmax.f32 %v4592, 0.0
        %v4721 = vmax.f32 %v4593, 0.0
        %v4722 = vmax.f32 %v4594, 0.0
        %v4723 = vmax.f32 %v4595, 0.0
        %v4724 = vmax.f32 %v4596, 0.0
        %v4725 = vmax.f32 %v4597, 0.0
        %v4726 = vmax.f32 %v4598, 0.0
        %v4727 = vmax.f32 %v4599, 0.0
        %v4728 = vmax.f32 %v4600, 0.0
        %v4729 = vmax.f32 %v4601, 0.0
        %v4730 = vmax.f32 %v4602, 0.0
        %v4731 = vmax.f32 %v4603, 0.0
        %v4732 = vmax.f32 %v4604, 0.0
        %v4733 = vmax.f32 %v4605, 0.0
        %v4734 = vmax.f32 %v4606, 0.0
        %v4735 = vmax.f32 %v4607, 0.0
        %v4736 = vmax.f32 %v4608, 0.0
        %v4737 = vmax.f32 %v4609, 0.0
        %v4738 = vmax.f32 %v4610, 0.0
        %v4739 = vmax.f32 %v4611, 0.0
        %v4740 = vmax.f32 %v4612, 0.0
        %v4741 = vmax.f32 %v4613, 0.0
        %v4742 = vmax.f32 %v4614, 0.0
        %v4743 = vmax.f32 %v4615, 0.0
        %v4744 = vmax.f32 %v4616, 0.0
        %v4745 = vmax.f32 %v4617, 0.0
        %v4746 = vmax.f32 %v4618, 0.0
        %v4747 = vmax.f32 %v4619, 0.0
        %v4748 = vmax.f32 %v4620, 0.0
        %v4749 = vmax.f32 %v4621, 0.0
        %v4750 = vmax.f32 %v4622, 0.0
        %v4751 = vmax.f32 %v4623, 0.0
        %v4752 = vmax.f32 %v4624, 0.0
        %v4753 = vmax.f32 %v4625, 0.0
        %v4754 = vmax.f32 %v4626, 0.0
        %v4755 = vmax.f32 %v4627, 0.0
        %v4756 = vmax.f32 %v4628, 0.0
        %v4757 = vmax.f32 %v4629, 0.0
        %v4758 = vmax.f32 %v4630, 0.0
        %v4759 = vmax.f32 %v4631, 0.0
        %v4760 = vmax.f32 %v4632, 0.0
        %v4761 = vmax.f32 %v4633, 0.0
        %v4762 = vmax.f32 %v4634, 0.0
        %v4763 = vmax.f32 %v4635, 0.0
        %v4764 = vmax.f32 %v4636, 0.0
        %v4765 = vmax.f32 %v4637, 0.0
        %v4766 = vmax.f32 %v4638, 0.0
        %v4767 = vmax.f32 %v4639, 0.0
        %v4768 = vmax.f32 %v4640, 0.0
        %v4769 = vmax.f32 %v4641, 0.0
        %v4770 = vmax.f32 %v4642, 0.0
        %v4771 = vmax.f32 %v4643, 0.0
        %4772 = vst [vmem:[%s425] sm:$0xff] %v4644
        %4773 = vst [vmem:[%s425 + $0x8] sm:$0xff] %v4645
        %4774 = vst [vmem:[%s425 + $0x10] sm:$0xff] %v4646
        %4775 = vst [vmem:[%s425 + $0x18] sm:$0xff] %v4647
        %4776 = vst [vmem:[%s425 + $0x20] sm:$0xff] %v4648
        %4777 = vst [vmem:[%s425 + $0x28] sm:$0xff] %v4649
        %4778 = vst [vmem:[%s425 + $0x30] sm:$0xff] %v4650
        %4779 = vst [vmem:[%s425 + $0x38] sm:$0xff] %v4651
        %4780 = vst [vmem:[%s425 + $0x40] sm:$0xff] %v4652
        %4781 = vst [vmem:[%s425 + $0x48] sm:$0xff] %v4653
        %4782 = vst [vmem:[%s425 + $0x50] sm:$0xff] %v4654
        %4783 = vst [vmem:[%s425 + $0x58] sm:$0xff] %v4655
        %4784 = vst [vmem:[%s425 + $0x60] sm:$0xff] %v4656
        %4785 = vst [vmem:[%s425 + $0x68] sm:$0xff] %v4657
        %4786 = vst [vmem:[%s425 + $0x70] sm:$0xff] %v4658
        %4787 = vst [vmem:[%s425 + $0x78] sm:$0xff] %v4659
        %4788 = vst [vmem:[%s425 + $0x80] sm:$0xff] %v4660
        %4789 = vst [vmem:[%s425 + $0x88] sm:$0xff] %v4661
        %4790 = vst [vmem:[%s425 + $0x90] sm:$0xff] %v4662
        %4791 = vst [vmem:[%s425 + $0x98] sm:$0xff] %v4663
        %4792 = vst [vmem:[%s425 + $0xa0] sm:$0xff] %v4664
        %4793 = vst [vmem:[%s425 + $0xa8] sm:$0xff] %v4665
        %4794 = vst [vmem:[%s425 + $0xb0] sm:$0xff] %v4666
        %4795 = vst [vmem:[%s425 + $0xb8] sm:$0xff] %v4667
        %4796 = vst [vmem:[%s425 + $0xc0] sm:$0xff] %v4668
        %4797 = vst [vmem:[%s425 + $0xc8] sm:$0xff] %v4669
        %4798 = vst [vmem:[%s425 + $0xd0] sm:$0xff] %v4670
        %4799 = vst [vmem:[%s425 + $0xd8] sm:$0xff] %v4671
        %4800 = vst [vmem:[%s425 + $0xe0] sm:$0xff] %v4672
        %4801 = vst [vmem:[%s425 + $0xe8] sm:$0xff] %v4673
        %4802 = vst [vmem:[%s425 + $0xf0] sm:$0xff] %v4674
        %4803 = vst [vmem:[%s425 + $0xf8] sm:$0xff] %v4675
        %4804 = vst [vmem:[%s425 + $0x100] sm:$0xff] %v4676
        %4805 = vst [vmem:[%s425 + $0x108] sm:$0xff] %v4677
        %4806 = vst [vmem:[%s425 + $0x110] sm:$0xff] %v4678
        %4807 = vst [vmem:[%s425 + $0x118] sm:$0xff] %v4679
        %4808 = vst [vmem:[%s425 + $0x120] sm:$0xff] %v4680
        %4809 = vst [vmem:[%s425 + $0x128] sm:$0xff] %v4681
        %4810 = vst [vmem:[%s425 + $0x130] sm:$0xff] %v4682
        %4811 = vst [vmem:[%s425 + $0x138] sm:$0xff] %v4683
        %4812 = vst [vmem:[%s425 + $0x140] sm:$0xff] %v4684
        %4813 = vst [vmem:[%s425 + $0x148] sm:$0xff] %v4685
        %4814 = vst [vmem:[%s425 + $0x150] sm:$0xff] %v4686
        %4815 = vst [vmem:[%s425 + $0x158] sm:$0xff] %v4687
        %4816 = vst [vmem:[%s425 + $0x160] sm:$0xff] %v4688
        %4817 = vst [vmem:[%s425 + $0x168] sm:$0xff] %v4689
        %4818 = vst [vmem:[%s425 + $0x170] sm:$0xff] %v4690
        %4819 = vst [vmem:[%s425 + $0x178] sm:$0xff] %v4691
        %4820 = vst [vmem:[%s425 + $0x180] sm:$0xff] %v4692
        %4821 = vst [vmem:[%s425 + $0x188] sm:$0xff] %v4693
        %4822 = vst [vmem:[%s425 + $0x190] sm:$0xff] %v4694
        %4823 = vst [vmem:[%s425 + $0x198] sm:$0xff] %v4695
        %4824 = vst [vmem:[%s425 + $0x1a0] sm:$0xff] %v4696
        %4825 = vst [vmem:[%s425 + $0x1a8] sm:$0xff] %v4697
        %4826 = vst [vmem:[%s425 + $0x1b0] sm:$0xff] %v4698
        %4827 = vst [vmem:[%s425 + $0x1b8] sm:$0xff] %v4699
        %4828 = vst [vmem:[%s425 + $0x1c0] sm:$0xff] %v4700
        %4829 = vst [vmem:[%s425 + $0x1c8] sm:$0xff] %v4701
        %4830 = vst [vmem:[%s425 + $0x1d0] sm:$0xff] %v4702
        %4831 = vst [vmem:[%s425 + $0x1d8] sm:$0xff] %v4703
        %4832 = vst [vmem:[%s425 + $0x1e0] sm:$0xff] %v4704
        %4833 = vst [vmem:[%s425 + $0x1e8] sm:$0xff] %v4705
        %4834 = vst [vmem:[%s425 + $0x1f0] sm:$0xff] %v4706
        %4835 = vst [vmem:[%s425 + $0x1f8] sm:$0xff] %v4707
        %4836 = vst [vmem:[%s425 + $0x200] sm:$0xff] %v4708
        %4837 = vst [vmem:[%s425 + $0x208] sm:$0xff] %v4709
        %4838 = vst [vmem:[%s425 + $0x210] sm:$0xff] %v4710
        %4839 = vst [vmem:[%s425 + $0x218] sm:$0xff] %v4711
        %4840 = vst [vmem:[%s425 + $0x220] sm:$0xff] %v4712
        %4841 = vst [vmem:[%s425 + $0x228] sm:$0xff] %v4713
        %4842 = vst [vmem:[%s425 + $0x230] sm:$0xff] %v4714
        %4843 = vst [vmem:[%s425 + $0x238] sm:$0xff] %v4715
        %4844 = vst [vmem:[%s425 + $0x240] sm:$0xff] %v4716
        %4845 = vst [vmem:[%s425 + $0x248] sm:$0xff] %v4717
        %4846 = vst [vmem:[%s425 + $0x250] sm:$0xff] %v4718
        %4847 = vst [vmem:[%s425 + $0x258] sm:$0xff] %v4719
        %4848 = vst [vmem:[%s425 + $0x260] sm:$0xff] %v4720
        %4849 = vst [vmem:[%s425 + $0x268] sm:$0xff] %v4721
        %4850 = vst [vmem:[%s425 + $0x270] sm:$0xff] %v4722
        %4851 = vst [vmem:[%s425 + $0x278] sm:$0xff] %v4723
        %4852 = vst [vmem:[%s425 + $0x280] sm:$0xff] %v4724
        %4853 = vst [vmem:[%s425 + $0x288] sm:$0xff] %v4725
        %4854 = vst [vmem:[%s425 + $0x290] sm:$0xff] %v4726
        %4855 = vst [vmem:[%s425 + $0x298] sm:$0xff] %v4727
        %4856 = vst [vmem:[%s425 + $0x2a0] sm:$0xff] %v4728
        %4857 = vst [vmem:[%s425 + $0x2a8] sm:$0xff] %v4729
        %4858 = vst [vmem:[%s425 + $0x2b0] sm:$0xff] %v4730
        %4859 = vst [vmem:[%s425 + $0x2b8] sm:$0xff] %v4731
        %4860 = vst [vmem:[%s425 + $0x2c0] sm:$0xff] %v4732
        %4861 = vst [vmem:[%s425 + $0x2c8] sm:$0xff] %v4733
        %4862 = vst [vmem:[%s425 + $0x2d0] sm:$0xff] %v4734
        %4863 = vst [vmem:[%s425 + $0x2d8] sm:$0xff] %v4735
        %4864 = vst [vmem:[%s425 + $0x2e0] sm:$0xff] %v4736
        %4865 = vst [vmem:[%s425 + $0x2e8] sm:$0xff] %v4737
        %4866 = vst [vmem:[%s425 + $0x2f0] sm:$0xff] %v4738
        %4867 = vst [vmem:[%s425 + $0x2f8] sm:$0xff] %v4739
        %4868 = vst [vmem:[%s425 + $0x300] sm:$0xff] %v4740
        %4869 = vst [vmem:[%s425 + $0x308] sm:$0xff] %v4741
        %4870 = vst [vmem:[%s425 + $0x310] sm:$0xff] %v4742
        %4871 = vst [vmem:[%s425 + $0x318] sm:$0xff] %v4743
        %4872 = vst [vmem:[%s425 + $0x320] sm:$0xff] %v4744
        %4873 = vst [vmem:[%s425 + $0x328] sm:$0xff] %v4745
        %4874 = vst [vmem:[%s425 + $0x330] sm:$0xff] %v4746
        %4875 = vst [vmem:[%s425 + $0x338] sm:$0xff] %v4747
        %4876 = vst [vmem:[%s425 + $0x340] sm:$0xff] %v4748
        %4877 = vst [vmem:[%s425 + $0x348] sm:$0xff] %v4749
        %4878 = vst [vmem:[%s425 + $0x350] sm:$0xff] %v4750
        %4879 = vst [vmem:[%s425 + $0x358] sm:$0xff] %v4751
        %4880 = vst [vmem:[%s425 + $0x360] sm:$0xff] %v4752
        %4881 = vst [vmem:[%s425 + $0x368] sm:$0xff] %v4753
        %4882 = vst [vmem:[%s425 + $0x370] sm:$0xff] %v4754
        %4883 = vst [vmem:[%s425 + $0x378] sm:$0xff] %v4755
        %4884 = vst [vmem:[%s425 + $0x380] sm:$0xff] %v4756
        %4885 = vst [vmem:[%s425 + $0x388] sm:$0xff] %v4757
        %4886 = vst [vmem:[%s425 + $0x390] sm:$0xff] %v4758
        %4887 = vst [vmem:[%s425 + $0x398] sm:$0xff] %v4759
        %4888 = vst [vmem:[%s425 + $0x3a0] sm:$0xff] %v4760
        %4889 = vst [vmem:[%s425 + $0x3a8] sm:$0xff] %v4761
        %4890 = vst [vmem:[%s425 + $0x3b0] sm:$0xff] %v4762
        %4891 = vst [vmem:[%s425 + $0x3b8] sm:$0xff] %v4763
        %4892 = vst [vmem:[%s425 + $0x3c0] sm:$0xff] %v4764
        %4893 = vst [vmem:[%s425 + $0x3c8] sm:$0xff] %v4765
        %4894 = vst [vmem:[%s425 + $0x3d0] sm:$0xff] %v4766
        %4895 = vst [vmem:[%s425 + $0x3d8] sm:$0xff] %v4767
        %4896 = vst [vmem:[%s425 + $0x3e0] sm:$0xff] %v4768
        %4897 = vst [vmem:[%s425 + $0x3e8] sm:$0xff] %v4769
        %4898 = vst [vmem:[%s425 + $0x3f0] sm:$0xff] %v4770
        %4899 = vst [vmem:[%s425 + $0x3f8] sm:$0xff] %v4771
        %s4900 = sand.u32 %s231, 1
        %s4901 = scalar_lea.sflag [#allocation5], %s4900
        %s4902 = sand.u32 %s231, 1
        %s4903 = smul.addr %s4902, 1024
        %s4904 = scalar_lea.vmem [#allocation12], %s4903
        // Predicated region
        $region73: #{tpu_custom_call.1} parent=51 // pred_check
          %p4905 = pneg %p241
        $region74: #{tpu_custom_call.1} parent=51 // pred_check_branch
          %4907 = sbr.rel (%p4905) target = $region76
        $region75: #{tpu_custom_call.1} parent=51 // pred_region
          %s4908 = smul.u32 16, %s34
          %s4910 = ssub.s32 16384, 16384
          %4911 = vsyncadd %s4901, %s4910
          %s4912 = smul.addr %s4908, 8
          %s4913 = smul.addr %s33, 128
          %s4914 = sadd.s32 %s4912, %s4913
          %s4915 = smul.addr %s4914, 128
          %s4916 = scalar_lea.hbm %s8, %s4915
          %s4917 = sshll.u32 %s4904, 4
          %s4918 = int_to_ptr.vmem [resolvable:$true] %s4917
          %4923 = dma.vmem_to_hbm [thread:$0]  %s4918, 16384, %s4916, %s4901, 512, 512, 32
        $region76: #{tpu_custom_call.1} parent=51 // pred_fallthru
          _
      $region52: #{tpu_custom_call.1} parent=5 // pred_fallthru
        _
      %p4924 = scmp.le.s32.totalorder 2, %s24
      // Predicated region
      $region77: #{tpu_custom_call.1} parent=5 // pred_check
        %p4925 = pneg %p4924
      $region78: #{tpu_custom_call.1} parent=5 // pred_check_branch
        %4927 = sbr.rel (%p4925) target = $region80
      $region79: #{tpu_custom_call.1} parent=5 // pred_region
        %s4928 = ssub.s32 %s24, 2
        // Predicated region
        $region81: #{tpu_custom_call.1} parent=79 // pred_check
          %p4929 = pneg %p247
        $region82: #{tpu_custom_call.1} parent=79 // pred_check_branch
          %4931 = sbr.rel (%p4929) target = $region84
        $region83: #{tpu_custom_call.1} parent=79 // pred_region
          %s4932 = sand.u32 %s232, 1
          %s4933 = scalar_lea.sflag [#allocation5], %s4932
          %s4934 = sand.u32 %s232, 1
          %s4935 = smul.addr %s4934, 1024
          %s4936 = scalar_lea.vmem [#allocation12], %s4935
          %4937 = dma.done %s4933, 16384
        $region84: #{tpu_custom_call.1} parent=79 // pred_fallthru
          _
      $region80: #{tpu_custom_call.1} parent=5 // pred_fallthru
        _
    $region6: #{tpu_custom_call.1} parent=1 // loop_footer
      %s28 = sadd.s32 1, %s24
    $region7: #{tpu_custom_call.1} parent=1 // loop_footer_branch
      %23 = sbr.rel target = $region3
    $region8: #{tpu_custom_call.1} parent=1 // loop_exit
      _
    %4938 = vsyncpa [#allocation4], 1
    %s4939 = scalar_lea.sflag [#allocation4], 1
    %4940 = vsyncpa %s4939, 1
    %4941 = vsyncpa [#allocation7], 1
    %s4942 = scalar_lea.sflag [#allocation7], 1
    %4943 = vsyncpa %s4942, 1
    %4944 = vsyncpa [#allocation10], 1
    %4945 = vsyncpa [#allocation5], 1
    %s4946 = scalar_lea.sflag [#allocation5], 1
    %4947 = vsyncpa %s4946, 1

</llo_original>
